<compile_context>
chip_gen: v6e
topology: v6e:2x2x1
jax: 0.10.0
libtpu: 0.0.40
codegen_flags: <defaults>
</compile_context>

<pallas_src>
import functools

import jax
import jax.numpy as jnp
from jax import lax
from jax.experimental import pallas as pl
from jax.experimental.pallas import tpu as pltpu

CHUNK = 8          # time-chunk (sublane height) for the TM decay recurrence
LN_EPS = 1e-5


# ---------------------------------------------------------------------------
# hardware-aware budgets & tiling helpers
# ---------------------------------------------------------------------------

@functools.lru_cache(maxsize=None)
def _hw_budget():
    """VMEM limit + row-tile cap dispatched on the chip generation."""
    phys = 64 * 1024 * 1024                       # conservative default (v7x)
    try:
        phys = int(pltpu.get_tpu_info().vmem_capacity_bytes)
    except Exception:
        pass
    if phys >= 96 * 1024 * 1024:                  # v5e / v6e: 128 MiB VMEM
        return {"vmem_limit": 96 * 1024 * 1024, "row_cap": 1024}
    return {"vmem_limit": 40 * 1024 * 1024, "row_cap": 512}   # v7x: 64 MiB


def _params(sem):
    return pltpu.CompilerParams(dimension_semantics=sem,
                                vmem_limit_bytes=_hw_budget()["vmem_limit"])


def _round_up(n, m):
    return ((n + m - 1) // m) * m


def _row_tile(n):
    """(tile, padded_n): tile <= row cap, multiple of 8, divides padded_n."""
    tile = min(_hw_budget()["row_cap"], _round_up(n, 8))
    return tile, _round_up(n, tile)


def _lane_tile(n, cap):
    """Largest multiple of 128 <= cap that divides n, else the full dim."""
    if n <= cap:
        return n
    if n % 128 == 0:
        t = (cap // 128) * 128
        while t >= 128:
            if n % t == 0:
                return t
            t -= 128
    return n


def _pad_rows(x, padded_n):
    if x.shape[0] == padded_n:
        return x
    return jnp.pad(x, ((0, padded_n - x.shape[0]), (0, 0)))


def _time_shift(x):
    # nn.ZeroPad2d((0, 0, 1, -1)) on (B, T, C): zero row at t=0, drop last row.
    return jnp.pad(x[:, :-1, :], ((0, 0), (1, 0), (0, 0)))


# ---------------------------------------------------------------------------
# standalone LayerNorm (only used twice: model pre_ln and block-0 pre_norm)
# ---------------------------------------------------------------------------

def _layernorm_kernel(x_ref, g_ref, b_ref, o_ref, *, eps):
    x = x_ref[...].astype(jnp.float32)
    mu = jnp.mean(x, axis=-1, keepdims=True)
    xc = x - mu
    var = jnp.mean(xc * xc, axis=-1, keepdims=True)
    o_ref[...] = (xc * lax.rsqrt(var + eps) * g_ref[...] + b_ref[...]
                  ).astype(o_ref.dtype)


def _layernorm(x, gb, out_dtype):
    B, T, C = x.shape
    g, b = gb
    N = B * T
    tm, Np = _row_tile(N)
    y = pl.pallas_call(
        functools.partial(_layernorm_kernel, eps=LN_EPS),
        out_shape=jax.ShapeDtypeStruct((Np, C), out_dtype),
        grid=(Np // tm,),
        in_specs=[pl.BlockSpec((tm, C), lambda i: (i, 0)),
                  pl.BlockSpec((1, C), lambda i: (0, 0)),
                  pl.BlockSpec((1, C), lambda i: (0, 0))],
        out_specs=pl.BlockSpec((tm, C), lambda i: (i, 0)),
        compiler_params=_params(("parallel",)),
    )(_pad_rows(x.reshape(N, C), Np), g, b)
    return y[:N].reshape(B, T, C)


# ---------------------------------------------------------------------------
# dual matmul:  acc = x @ Wx + xx @ Wxx  (K-tiled), split + activate at finalize
#   (mix coefficients are folded into Wx / Wxx at init)
# ---------------------------------------------------------------------------

def _dual_matmul_kernel(x_ref, xx_ref, wx_ref, wxx_ref, *refs, n_k, splits, acts):
    out_refs, acc_ref = refs[:-1], refs[-1]
    kk = pl.program_id(1)

    @pl.when(kk == 0)
    def _init():
        acc_ref[...] = jnp.zeros_like(acc_ref)

    acc_ref[...] += (
        jnp.dot(x_ref[...], wx_ref[...], preferred_element_type=jnp.float32) +
        jnp.dot(xx_ref[...], wxx_ref[...], preferred_element_type=jnp.float32))

    @pl.when(kk == n_k - 1)
    def _finalize():
        off = 0
        for o_ref, width, act in zip(out_refs, splits, acts):
            v = acc_ref[:, off:off + width]
            if act == "sigmoid":
                v = jax.nn.sigmoid(v)
            elif act == "silu":
                v = v * jax.nn.sigmoid(v)
            o_ref[...] = v.astype(o_ref.dtype)
            off += width


def _dual_matmul(x, xx, wx, wxx, splits, acts):
    B, T, C = x.shape
    n_out = wx.shape[1]
    N = B * T
    tm, Np = _row_tile(N)
    tk = _lane_tile(C, 512)
    n_k = C // tk
    outs = pl.pallas_call(
        functools.partial(_dual_matmul_kernel, n_k=n_k, splits=splits, acts=acts),
        out_shape=tuple(jax.ShapeDtypeStruct((Np, w), jnp.bfloat16)
                        for w in splits),
        grid=(Np // tm, n_k),
        in_specs=[pl.BlockSpec((tm, tk), lambda i, k: (i, k)),
                  pl.BlockSpec((tm, tk), lambda i, k: (i, k)),
                  pl.BlockSpec((tk, n_out), lambda i, k: (k, 0)),
                  pl.BlockSpec((tk, n_out), lambda i, k: (k, 0))],
        out_specs=tuple(pl.BlockSpec((tm, w), lambda i, k: (i, 0))
                        for w in splits),
        scratch_shapes=[pltpu.VMEM((tm, n_out), jnp.float32)],
        compiler_params=_params(("parallel", "arbitrary")),
        cost_estimate=pl.CostEstimate(
            flops=4 * Np * C * n_out, transcendentals=Np * n_out,
            bytes_accessed=4 * Np * C + 4 * C * n_out + 2 * Np * n_out),
    )(_pad_rows(x.reshape(N, C), Np), _pad_rows(xx.reshape(N, C), Np), wx, wxx)
    return tuple(o[:N].reshape(B, T, w) for o, w in zip(outs, splits))


# ---------------------------------------------------------------------------
# TM per-channel causal decay recurrence:  rwkv = sigmoid(r) * wkv / wk
#   grid over (batch, channel tiles); chunk-parallel over 8-row time chunks.
# ---------------------------------------------------------------------------

def _tm_recurrence_kernel(k_ref, v_ref, sr_ref, pows_ref, o_ref, *, n_chunks):
    tc = o_ref.shape[2]
    pows = pows_ref[...]                               # (CHUNK+1, tc) f32
    pows_hi = pows[1:, :]                              # we**(d+1), d = 0..7
    rows = lax.broadcasted_iota(jnp.int32, (CHUNK, tc), 0)
    # causal keep-mask folded into the decay coefficients, hoisted out of the
    # chunk loop (loop bodies are traced once — nothing is auto-hoisted).
    coefs = [jnp.where(rows >= d, pows[d:d + 1, :], 0.0)
             for d in range(1, CHUNK)]

    def chunk_body(c, carry):
        s_kv, s_k = carry                              # (1, tc) f32 each
        base = pl.multiple_of(c * CHUNK, CHUNK)
        kc = k_ref[0, pl.ds(base, CHUNK), :].astype(jnp.float32)
        vc = v_ref[0, pl.ds(base, CHUNK), :].astype(jnp.float32)
        src = sr_ref[0, pl.ds(base, CHUNK), :].astype(jnp.float32)
        kvc = kc * vc
        a_kv, a_k = kvc, kc
        for d in range(1, CHUNK):                      # static short unroll
            a_kv = a_kv + coefs[d - 1] * pltpu.roll(kvc, shift=d, axis=0)
            a_k = a_k + coefs[d - 1] * pltpu.roll(kc, shift=d, axis=0)
        wkv = a_kv + pows_hi * s_kv
        wk = a_k + pows_hi * s_k
        # exact f32 division (the reference does wkv / wk with no eps / clamp)
        o_ref[0, pl.ds(base, CHUNK), :] = (src * (wkv / wk)).astype(o_ref.dtype)
        return wkv[CHUNK - 1:, :], wk[CHUNK - 1:, :]

    zero = jnp.zeros((1, tc), jnp.float32)
    lax.fori_loop(0, n_chunks, chunk_body, (zero, zero))


def _tm_recurrence(k, v, sr, we_pows):
    B, T, C = k.shape
    assert T % CHUNK == 0, "sequence length must be a multiple of 8"
    tc = _lane_tile(C, 256)

    def kvspec():
        return pl.BlockSpec((1, T, tc), lambda b, j: (b, 0, j))

    return pl.pallas_call(
        functools.partial(_tm_recurrence_kernel, n_chunks=T // CHUNK),
        out_shape=jax.ShapeDtypeStruct((B, T, C), jnp.bfloat16),
        grid=(B, C // tc),
        in_specs=[kvspec(), kvspec(), kvspec(),
                  pl.BlockSpec((CHUNK + 1, tc), lambda b, j: (0, j))],
        out_specs=kvspec(),
        compiler_params=_params(("parallel", "parallel")),
    )(k, v, sr, we_pows)


# ---------------------------------------------------------------------------
# residual-add kernels with fused LayerNorm at finalize
#   _matmul_resid_ln : x_new = resid + h @ W          ; ln = LN(x_new)
#   _gated_resid_ln  : x_new = resid + sr * (h @ W)   ; ln = LN(x_new)
# ---------------------------------------------------------------------------

def _matmul_resid_ln_kernel(h_ref, w_ref, r_ref, g_ref, b_ref,
                            x_ref, ln_ref, *, n_k, eps):
    kk = pl.program_id(1)

    @pl.when(kk == 0)
    def _init():
        x_ref[...] = jnp.zeros_like(x_ref)

    x_ref[...] += jnp.dot(h_ref[...], w_ref[...],
                          preferred_element_type=jnp.float32)

    @pl.when(kk == n_k - 1)
    def _finalize():
        x = x_ref[...] + r_ref[...]
        x_ref[...] = x
        mu = jnp.mean(x, axis=-1, keepdims=True)
        xc = x - mu
        var = jnp.mean(xc * xc, axis=-1, keepdims=True)
        ln_ref[...] = (xc * lax.rsqrt(var + eps) * g_ref[...] + b_ref[...]
                       ).astype(ln_ref.dtype)


def _gated_resid_ln_kernel(h_ref, w_ref, sr_ref, r_ref, g_ref, b_ref,
                           x_ref, ln_ref, *, n_k, eps):
    kk = pl.program_id(1)

    @pl.when(kk == 0)
    def _init():
        x_ref[...] = jnp.zeros_like(x_ref)

    x_ref[...] += jnp.dot(h_ref[...], w_ref[...],
                          preferred_element_type=jnp.float32)

    @pl.when(kk == n_k - 1)
    def _finalize():
        x = r_ref[...] + sr_ref[...].astype(jnp.float32) * x_ref[...]
        x_ref[...] = x
        mu = jnp.mean(x, axis=-1, keepdims=True)
        xc = x - mu
        var = jnp.mean(xc * xc, axis=-1, keepdims=True)
        ln_ref[...] = (xc * lax.rsqrt(var + eps) * g_ref[...] + b_ref[...]
                       ).astype(ln_ref.dtype)


def _resid_ln_call(kernel_fn, h, w, extra, resid, ln_gb):
    B, T, Cin = h.shape
    C = w.shape[1]
    g, b = ln_gb
    N = B * T
    tm, Np = _row_tile(N)
    tk = _lane_tile(Cin, 512)
    n_k = Cin // tk

    ins = [_pad_rows(h.reshape(N, Cin), Np), w]
    in_specs = [pl.BlockSpec((tm, tk), lambda i, k: (i, k)),
                pl.BlockSpec((tk, C), lambda i, k: (k, 0))]
    for e in extra:                                   # optional gate (sr)
        ins.append(_pad_rows(e.reshape(N, C), Np))
        in_specs.append(pl.BlockSpec((tm, C), lambda i, k: (i, 0)))
    ins.append(_pad_rows(resid.reshape(N, C), Np))
    in_specs.append(pl.BlockSpec((tm, C), lambda i, k: (i, 0)))
    ins.extend([g, b])
    in_specs.extend([pl.BlockSpec((1, C), lambda i, k: (0, 0)),
                     pl.BlockSpec((1, C), lambda i, k: (0, 0))])

    x_new, ln_out = pl.pallas_call(
        functools.partial(kernel_fn, n_k=n_k, eps=LN_EPS),
        out_shape=(jax.ShapeDtypeStruct((Np, C), jnp.float32),
                   jax.ShapeDtypeStruct((Np, C), jnp.bfloat16)),
        grid=(Np // tm, n_k),
        in_specs=in_specs,
        out_specs=(pl.BlockSpec((tm, C), lambda i, k: (i, 0)),
                   pl.BlockSpec((tm, C), lambda i, k: (i, 0))),
        compiler_params=_params(("parallel", "arbitrary")),
        cost_estimate=pl.CostEstimate(
            flops=2 * Np * Cin * C, transcendentals=0,
            bytes_accessed=2 * Np * Cin + 2 * Cin * C + 10 * Np * C),
    )(*ins)
    return x_new[:N].reshape(B, T, C), ln_out[:N].reshape(B, T, C)


def _matmul_resid_ln(h, w, resid, ln_gb):
    return _resid_ln_call(_matmul_resid_ln_kernel, h, w, (), resid, ln_gb)


def _gated_resid_ln(h, w, sr, resid, ln_gb):
    return _resid_ln_call(_gated_resid_ln_kernel, h, w, (sr,), resid, ln_gb)


# ---------------------------------------------------------------------------
# lm_head: canonical 3-D tiled matmul (rows x vocab x K), bf16 activations
# ---------------------------------------------------------------------------

def _lm_head_kernel(h_ref, w_ref, o_ref, acc_ref):
    @pl.when(pl.program_id(2) == 0)
    def _init():
        acc_ref[...] = jnp.zeros_like(acc_ref)

    acc_ref[...] += jnp.dot(h_ref[...], w_ref[...],
                            preferred_element_type=jnp.float32)

    @pl.when(pl.program_id(2) == pl.num_programs(2) - 1)
    def _fin():
        o_ref[...] = acc_ref[...]


def _lm_head(h, w):
    B, T, C = h.shape
    V = w.shape[1]
    N = B * T
    tm, Np = _row_tile(N)
    tn = _lane_tile(V, 1024)
    tk = _lane_tile(C, 512)
    out = pl.pallas_call(
        _lm_head_kernel,
        out_shape=jax.ShapeDtypeStruct((Np, V), jnp.float32),
        grid=(Np // tm, V // tn, C // tk),
        in_specs=[pl.BlockSpec((tm, tk), lambda i, j, k: (i, k)),
                  pl.BlockSpec((tk, tn), lambda i, j, k: (k, j))],
        out_specs=pl.BlockSpec((tm, tn), lambda i, j, k: (i, j)),
        scratch_shapes=[pltpu.VMEM((tm, tn), jnp.float32)],
        compiler_params=_params(("parallel", "parallel", "arbitrary")),
        cost_estimate=pl.CostEstimate(
            flops=2 * Np * C * V, transcendentals=0,
            bytes_accessed=2 * Np * C + 2 * C * V + 4 * Np * V),
    )(_pad_rows(h.reshape(N, C), Np), w)
    return out[:N].reshape(B, T, V)


# ---------------------------------------------------------------------------
# model forward (glue)
# ---------------------------------------------------------------------------

def _rwkv_tm(ln_in, h, blk):
    """x_new = h + Wo @ TM(ln_in); also returns fused LN(x_new) with blk['ln2']."""
    C = ln_in.shape[-1]
    xx = _time_shift(ln_in)
    k, v, sr = _dual_matmul(ln_in, xx, blk["tm"]["wx"], blk["tm"]["wxx"],
                            splits=(C, C, C), acts=("none", "none", "sigmoid"))
    rwkv = _tm_recurrence(k, v, sr, blk["tm"]["we_pows"])
    return _matmul_resid_ln(rwkv, blk["tm"]["wo"], h, blk["ln2"])


def _rwkv_cm(ln_in, h, blk, next_ln):
    """x_new = h + sigmoid(r) * (silu(key(xk)) @ Wval); plus LN(x_new, next_ln)."""
    C = ln_in.shape[-1]
    xx = _time_shift(ln_in)
    k4, sr = _dual_matmul(ln_in, xx, blk["cm"]["wx"], blk["cm"]["wxx"],
                          splits=(4 * C, C), acts=("silu", "sigmoid"))
    return _gated_resid_ln(k4, blk["cm"]["wval"], sr, h, next_ln)


def forward(params, input_ids, target_ids=None):
    h = jnp.take(params["emb"], input_ids, axis=0)           # embedding (glue)
    h = _layernorm(h, params["pre_ln"], jnp.float32)          # residual stream
    blocks = params["blocks"]
    ln_in = _layernorm(h, blocks[0]["ln1"], jnp.bfloat16)     # block-0 pre_norm
    for i, blk in enumerate(blocks):
        h, ln2 = _rwkv_tm(ln_in, h, blk)
        next_ln = blocks[i + 1]["ln1"] if i + 1 < len(blocks) else params["post_ln"]
        h, ln_in = _rwkv_cm(ln2, h, blk, next_ln)
    logits = _lm_head(ln_in, params["lm_head"])               # ln_in == post_ln(h)
    loss = None
    if target_ids is not None:                                # plain-JAX CE (glue)
        tgt = target_ids[:, 1:]
        lp = jax.nn.log_softmax(logits[:, :-1, :], axis=-1)
        loss = -jnp.mean(jnp.take_along_axis(lp, tgt[..., None], axis=-1))
    return logits, loss


# ---------------------------------------------------------------------------
# deterministic parameter construction (mirrors the PyTorch __init__)
# ---------------------------------------------------------------------------

def make_params(num_layers, hidden_size, vocab_size, key):
    L, C, V = num_layers, hidden_size, vocab_size
    keys = iter(jax.random.split(key, 2 + 7 * L))

    def lin_t(out_dim, in_dim):
        # nn.Linear weight (out, in), N(0, 0.01); returned pre-transposed (in, out)
        w = 0.01 * jax.random.normal(next(keys), (out_dim, in_dim), jnp.float32)
        return w.T

    def ln():
        return (jnp.ones((1, C), jnp.float32), jnp.zeros((1, C), jnp.float32))

    def fold(ws, mixes):
        # fold time-mix coefficients into the weights: (x*m) @ W == x @ (m . W)
        wx = jnp.concatenate([m[:, None] * w for m, w in zip(mixes, ws)], axis=1)
        wxx = jnp.concatenate([(1.0 - m)[:, None] * w
                               for m, w in zip(mixes, ws)], axis=1)
        return jnp.asarray(wx, jnp.bfloat16), jnp.asarray(wxx, jnp.bfloat16)

    params = {
        "emb": 1e-5 * jax.random.normal(next(keys), (V, C), jnp.float32),
        "lm_head": jnp.asarray(lin_t(V, C), jnp.bfloat16),    # stored (C, V) bf16
        "pre_ln": ln(),
        "post_ln": ln(),
        "blocks": [],
    }

    idx = jnp.arange(C, dtype=jnp.float32)
    xvec = idx / C                                            # x[0,0,i] = i / hidden
    for i in range(L):
        r01 = i / (L - 1) if L > 1 else 0.0                   # time_ratio_0_to_1
        r1p = 1.0 - i / L                                     # time_ratio_1_to_pz
        decay = (idx / (C - 1)) ** (0.5 + 1.3 * r01)          # we (per-channel)
        pows = [jnp.ones((C,), jnp.float32)]
        for _ in range(CHUNK):
            pows.append(pows[-1] * decay)
        we_pows = jnp.stack(pows, axis=0)                     # (CHUNK+1, C)

        mk_tm = xvec ** r1p
        mv_tm = xvec ** r1p + 0.3 * r01
        mr_tm = xvec ** (0.5 * r1p)
        wk, wv, wr, wo = lin_t(C, C), lin_t(C, C), lin_t(C, C), lin_t(C, C)
        tm_wx, tm_wxx = fold([wk, wv, wr], [mk_tm, mv_tm, mr_tm])

        mk_cm = xvec ** r1p
        mr_cm = xvec ** r1p
        wkey, wval, wr_cm = lin_t(4 * C, C), lin_t(C, 4 * C), lin_t(C, C)
        cm_wx, cm_wxx = fold([wkey, wr_cm], [mk_cm, mr_cm])

        params["blocks"].append({
            "ln1": ln(),
            "ln2": ln(),
            "tm": {"wx": tm_wx, "wxx": tm_wxx,                # (C, 3C) bf16
                   "wo": jnp.asarray(wo, jnp.bfloat16),       # (C, C) bf16
                   "we_pows": we_pows},
            "cm": {"wx": cm_wx, "wxx": cm_wxx,                # (C, 5C) bf16
                   "wval": jnp.asarray(wval, jnp.bfloat16)},  # (4C, C) bf16
        })
    return params


# ---------------------------------------------------------------------------
# demo
# ---------------------------------------------------------------------------

if __name__ == "__main__":
    NUM_LAYERS = 2
    HIDDEN = 128          # multiple of 128 -> lane-dense blocks everywhere
    VOCAB = 512
    B, T = 2, 16          # T multiple of CHUNK (8)

    key = jax.random.PRNGKey(0)
    pkey, ikey = jax.random.split(key)
    params = make_params(NUM_LAYERS, HIDDEN, VOCAB, pkey)
    input_ids = jax.random.randint(ikey, (B, T), 0, VOCAB, dtype=jnp.int32)

    logits, loss = jax.jit(forward)(params, input_ids)
    jax.block_until_ready(logits)

    assert logits.shape == (B, T, VOCAB)
    assert logits.dtype == jnp.float32
    assert bool(jnp.isfinite(logits).all())
    assert loss is None
    print("KERNEL_OK")
</pallas_src>

<mosaic_0001>
module attributes {stable_mosaic.version = 11 : i64} {
  func.func @_dual_matmul_kernel(%arg0: i32, %arg1: i32, %arg2: memref<32x128xbf16, #tpu.memory_space<vmem>>, %arg3: memref<32x128xbf16, #tpu.memory_space<vmem>>, %arg4: memref<128x384xbf16, #tpu.memory_space<vmem>>, %arg5: memref<128x384xbf16, #tpu.memory_space<vmem>>, %arg6: memref<32x128xbf16, #tpu.memory_space<vmem>>, %arg7: memref<32x128xbf16, #tpu.memory_space<vmem>>, %arg8: memref<32x128xbf16, #tpu.memory_space<vmem>>, %arg9: memref<32x384xf32, #tpu.memory_space<vmem>>) attributes {dimension_semantics = [#tpu.dimension_semantics<parallel>, #tpu.dimension_semantics<arbitrary>], iteration_bounds = array<i64: 1, 1>, scalar_prefetch = 0 : i64, scratch_operands = 1 : i64, tpu.core_type = #tpu.core_type<tc>, window_params = [{transform_indices = @transform_0, window_bounds = array<i64: 32, 128>}, {transform_indices = @transform_1, window_bounds = array<i64: 32, 128>}, {transform_indices = @transform_2, window_bounds = array<i64: 128, 384>}, {transform_indices = @transform_3, window_bounds = array<i64: 128, 384>}, {transform_indices = @transform_4, window_bounds = array<i64: 32, 128>}, {transform_indices = @transform_5, window_bounds = array<i64: 32, 128>}, {transform_indices = @transform_6, window_bounds = array<i64: 32, 128>}]} {
    %c0_i32 = arith.constant 0 : i32
    %0 = arith.cmpi eq, %arg1, %c0_i32 : i32
    %1 = arith.extui %0 : i1 to i32
    %c0_i32_0 = arith.constant 0 : i32
    %2 = arith.cmpi ne, %1, %c0_i32_0 : i32
    scf.if %2 {
      %cst_15 = arith.constant 0.000000e+00 : f32
      %16 = vector.broadcast %cst_15 : f32 to vector<32x384xf32>
      %c0_16 = arith.constant 0 : index
      %c0_17 = arith.constant 0 : index
      %17 = vector.load %arg9[%c0_16, %c0_17] : memref<32x384xf32, #tpu.memory_space<vmem>>, vector<32x384xf32>
      tpu.vector_store %arg9[%c0_16, %c0_17], %16 {strides = array<i32>} : memref<32x384xf32, #tpu.memory_space<vmem>>, vector<32x384xf32>,
    } else {
    }
    %c0 = arith.constant 0 : index
    %c0_1 = arith.constant 0 : index
    %3 = vector.load %arg9[%c0, %c0_1] : memref<32x384xf32, #tpu.memory_space<vmem>>, vector<32x384xf32>
    %c0_2 = arith.constant 0 : index
    %c0_3 = arith.constant 0 : index
    %4 = vector.load %arg2[%c0_2, %c0_3] : memref<32x128xbf16, #tpu.memory_space<vmem>>, vector<32x128xbf16>
    %c0_4 = arith.constant 0 : index
    %c0_5 = arith.constant 0 : index
    %5 = vector.load %arg4[%c0_4, %c0_5] : memref<128x384xbf16, #tpu.memory_space<vmem>>, vector<128x384xbf16>
    %cst = arith.constant dense<0.000000e+00> : vector<32x384xf32>
    %6 = tpu.matmul %4, %5, %cst {dimension_numbers = #tpu.dot_dimension_numbers<[1], [0], [0], [1], [0, 0, 1, 1], [], []>} : vector<32x128xbf16>, vector<128x384xbf16>, vector<32x384xf32> -> vector<32x384xf32>
    %c0_6 = arith.constant 0 : index
    %c0_7 = arith.constant 0 : index
    %7 = vector.load %arg3[%c0_6, %c0_7] : memref<32x128xbf16, #tpu.memory_space<vmem>>, vector<32x128xbf16>
    %c0_8 = arith.constant 0 : index
    %c0_9 = arith.constant 0 : index
    %8 = vector.load %arg5[%c0_8, %c0_9] : memref<128x384xbf16, #tpu.memory_space<vmem>>, vector<128x384xbf16>
    %cst_10 = arith.constant dense<0.000000e+00> : vector<32x384xf32>
    %9 = tpu.matmul %7, %8, %cst_10 {dimension_numbers = #tpu.dot_dimension_numbers<[1], [0], [0], [1], [0, 0, 1, 1], [], []>} : vector<32x128xbf16>, vector<128x384xbf16>, vector<32x384xf32> -> vector<32x384xf32>
    %10 = arith.addf %6, %9 : vector<32x384xf32>
    %11 = arith.addf %3, %10 : vector<32x384xf32>
    %c0_11 = arith.constant 0 : index
    %c0_12 = arith.constant 0 : index
    %12 = vector.load %arg9[%c0_11, %c0_12] : memref<32x384xf32, #tpu.memory_space<vmem>>, vector<32x384xf32>
    tpu.vector_store %arg9[%c0_11, %c0_12], %11 {strides = array<i32>} : memref<32x384xf32, #tpu.memory_space<vmem>>, vector<32x384xf32>,
    %c0_i32_13 = arith.constant 0 : i32
    %13 = arith.cmpi eq, %arg1, %c0_i32_13 : i32
    %14 = arith.extui %13 : i1 to i32
    %c0_i32_14 = arith.constant 0 : i32
    %15 = arith.cmpi ne, %14, %c0_i32_14 : i32
    scf.if %15 {
      %c0_15 = arith.constant 0 : index
      %c0_16 = arith.constant 0 : index
      %16 = vector.load %arg9[%c0_15, %c0_16] : memref<32x384xf32, #tpu.memory_space<vmem>>, vector<32x128xf32>
      %17 = arith.truncf %16 : vector<32x128xf32> to vector<32x128xbf16>
      %c0_17 = arith.constant 0 : index
      %c0_18 = arith.constant 0 : index
      %18 = vector.load %arg6[%c0_17, %c0_18] : memref<32x128xbf16, #tpu.memory_space<vmem>>, vector<32x128xbf16>
      tpu.vector_store %arg6[%c0_17, %c0_18], %17 {strides = array<i32>} : memref<32x128xbf16, #tpu.memory_space<vmem>>, vector<32x128xbf16>,
      %c0_19 = arith.constant 0 : index
      %c128 = arith.constant 128 : index
      %19 = vector.load %arg9[%c0_19, %c128] : memref<32x384xf32, #tpu.memory_space<vmem>>, vector<32x128xf32>
      %20 = arith.truncf %19 : vector<32x128xf32> to vector<32x128xbf16>
      %c0_20 = arith.constant 0 : index
      %c0_21 = arith.constant 0 : index
      %21 = vector.load %arg7[%c0_20, %c0_21] : memref<32x128xbf16, #tpu.memory_space<vmem>>, vector<32x128xbf16>
      tpu.vector_store %arg7[%c0_20, %c0_21], %20 {strides = array<i32>} : memref<32x128xbf16, #tpu.memory_space<vmem>>, vector<32x128xbf16>,
      %c0_22 = arith.constant 0 : index
      %c256 = arith.constant 256 : index
      %22 = vector.load %arg9[%c0_22, %c256] : memref<32x384xf32, #tpu.memory_space<vmem>>, vector<32x128xf32>
      %23 = arith.negf %22 : vector<32x128xf32>
      %24 = math.exp %23 : vector<32x128xf32>
      %cst_23 = arith.constant 1.000000e+00 : f32
      %25 = vector.broadcast %cst_23 : f32 to vector<32x128xf32>
      %26 = arith.addf %25, %24 : vector<32x128xf32>
      %27 = arith.divf %25, %26 : vector<32x128xf32>
      %28 = arith.truncf %27 : vector<32x128xf32> to vector<32x128xbf16>
      %c0_24 = arith.constant 0 : index
      %c0_25 = arith.constant 0 : index
      %29 = vector.load %arg8[%c0_24, %c0_25] : memref<32x128xbf16, #tpu.memory_space<vmem>>, vector<32x128xbf16>
      tpu.vector_store %arg8[%c0_24, %c0_25], %28 {strides = array<i32>} : memref<32x128xbf16, #tpu.memory_space<vmem>>, vector<32x128xbf16>,
    } else {
    }
    return
  }
  func.func @transform_0(%arg0: i32, %arg1: i32) -> (i32, i32) {
    %c0_i32 = arith.constant 0 : i32
    return %arg0, %arg1 : i32, i32
  }
  func.func @transform_1(%arg0: i32, %arg1: i32) -> (i32, i32) {
    %c0_i32 = arith.constant 0 : i32
    return %arg0, %arg1 : i32, i32
  }
  func.func @transform_2(%arg0: i32, %arg1: i32) -> (i32, i32) {
    %c0_i32 = arith.constant 0 : i32
    %c0_i32_0 = arith.constant 0 : i32
    return %arg1, %c0_i32 : i32, i32
  }
  func.func @transform_3(%arg0: i32, %arg1: i32) -> (i32, i32) {
    %c0_i32 = arith.constant 0 : i32
    %c0_i32_0 = arith.constant 0 : i32
    return %arg1, %c0_i32 : i32, i32
  }
  func.func @transform_4(%arg0: i32, %arg1: i32) -> (i32, i32) {
    %c0_i32 = arith.constant 0 : i32
    %c0_i32_0 = arith.constant 0 : i32
    return %arg0, %c0_i32 : i32, i32
  }
  func.func @transform_5(%arg0: i32, %arg1: i32) -> (i32, i32) {
    %c0_i32 = arith.constant 0 : i32
    %c0_i32_0 = arith.constant 0 : i32
    return %arg0, %c0_i32 : i32, i32
  }
  func.func @transform_6(%arg0: i32, %arg1: i32) -> (i32, i32) {
    %c0_i32 = arith.constant 0 : i32
    %c0_i32_0 = arith.constant 0 : i32
    return %arg0, %c0_i32 : i32, i32
  }
}

module attributes {stable_mosaic.version = 11 : i64} {
  func.func @_layernorm_kernel(%arg0: i32, %arg1: memref<32x128xf32, #tpu.memory_space<vmem>>, %arg2: memref<1x128xf32, #tpu.memory_space<vmem>>, %arg3: memref<1x128xf32, #tpu.memory_space<vmem>>, %arg4: memref<32x128xbf16, #tpu.memory_space<vmem>>) attributes {dimension_semantics = [#tpu.dimension_semantics<parallel>], iteration_bounds = array<i64: 1>, scalar_prefetch = 0 : i64, scratch_operands = 0 : i64, tpu.core_type = #tpu.core_type<tc>, window_params = [{transform_indices = @transform_0, window_bounds = array<i64: 32, 128>}, {pipeline_mode = #tpu.pipeline_mode<synchronous>, transform_indices = @transform_1, window_bounds = array<i64: 1, 128>}, {pipeline_mode = #tpu.pipeline_mode<synchronous>, transform_indices = @transform_2, window_bounds = array<i64: 1, 128>}, {transform_indices = @transform_3, window_bounds = array<i64: 32, 128>}]} {
    %c0 = arith.constant 0 : index
    %c0_0 = arith.constant 0 : index
    %0 = vector.load %arg1[%c0, %c0_0] : memref<32x128xf32, #tpu.memory_space<vmem>>, vector<32x128xf32>
    %cst = arith.constant dense<0.000000e+00> : vector<32xf32>
    %1 = vector.multi_reduction <add>, %0, %cst [1] : vector<32x128xf32> to vector<32xf32>
    %2 = vector.shape_cast %1 : vector<32xf32> to vector<32x1xf32>
    %cst_1 = arith.constant 1.280000e+02 : f32
    %3 = vector.broadcast %cst_1 : f32 to vector<32x1xf32>
    %4 = arith.divf %2, %3 : vector<32x1xf32>
    %5 = vector.broadcast %4 : vector<32x1xf32> to vector<32x128xf32>
    %6 = arith.subf %0, %5 : vector<32x128xf32>
    %7 = arith.mulf %6, %6 : vector<32x128xf32>
    %cst_2 = arith.constant dense<0.000000e+00> : vector<32xf32>
    %8 = vector.multi_reduction <add>, %7, %cst_2 [1] : vector<32x128xf32> to vector<32xf32>
    %9 = vector.shape_cast %8 : vector<32xf32> to vector<32x1xf32>
    %cst_3 = arith.constant 1.280000e+02 : f32
    %10 = vector.broadcast %cst_3 : f32 to vector<32x1xf32>
    %11 = arith.divf %9, %10 : vector<32x1xf32>
    %cst_4 = arith.constant 9.99999974E-6 : f32
    %12 = vector.broadcast %cst_4 : f32 to vector<32x1xf32>
    %13 = arith.addf %11, %12 : vector<32x1xf32>
    %14 = math.rsqrt %13 : vector<32x1xf32>
    %15 = vector.broadcast %14 : vector<32x1xf32> to vector<32x128xf32>
    %16 = arith.mulf %6, %15 : vector<32x128xf32>
    %c0_5 = arith.constant 0 : index
    %c0_6 = arith.constant 0 : index
    %17 = vector.load %arg2[%c0_5, %c0_6] : memref<1x128xf32, #tpu.memory_space<vmem>>, vector<1x128xf32>
    %18 = vector.broadcast %17 : vector<1x128xf32> to vector<32x128xf32>
    %19 = arith.mulf %16, %18 : vector<32x128xf32>
    %c0_7 = arith.constant 0 : index
    %c0_8 = arith.constant 0 : index
    %20 = vector.load %arg3[%c0_7, %c0_8] : memref<1x128xf32, #tpu.memory_space<vmem>>, vector<1x128xf32>
    %21 = vector.broadcast %20 : vector<1x128xf32> to vector<32x128xf32>
    %22 = arith.addf %19, %21 : vector<32x128xf32>
    %23 = arith.truncf %22 : vector<32x128xf32> to vector<32x128xbf16>
    %c0_9 = arith.constant 0 : index
    %c0_10 = arith.constant 0 : index
    %24 = vector.load %arg4[%c0_9, %c0_10] : memref<32x128xbf16, #tpu.memory_space<vmem>>, vector<32x128xbf16>
    tpu.vector_store %arg4[%c0_9, %c0_10], %23 {strides = array<i32>} : memref<32x128xbf16, #tpu.memory_space<vmem>>, vector<32x128xbf16>,
    return
  }
  func.func @transform_0(%arg0: i32) -> (i32, i32) {
    %c0_i32 = arith.constant 0 : i32
    %c0_i32_0 = arith.constant 0 : i32
    return %arg0, %c0_i32 : i32, i32
  }
  func.func @transform_1(%arg0: i32) -> (i32, i32) {
    %c0_i32 = arith.constant 0 : i32
    %c0_i32_0 = arith.constant 0 : i32
    %c0_i32_1 = arith.constant 0 : i32
    return %c0_i32, %c0_i32_0 : i32, i32
  }
  func.func @transform_2(%arg0: i32) -> (i32, i32) {
    %c0_i32 = arith.constant 0 : i32
    %c0_i32_0 = arith.constant 0 : i32
    %c0_i32_1 = arith.constant 0 : i32
    return %c0_i32, %c0_i32_0 : i32, i32
  }
  func.func @transform_3(%arg0: i32) -> (i32, i32) {
    %c0_i32 = arith.constant 0 : i32
    %c0_i32_0 = arith.constant 0 : i32
    return %arg0, %c0_i32 : i32, i32
  }
}

module attributes {stable_mosaic.version = 11 : i64} {
  func.func @_layernorm_kernel(%arg0: i32, %arg1: memref<32x128xf32, #tpu.memory_space<vmem>>, %arg2: memref<1x128xf32, #tpu.memory_space<vmem>>, %arg3: memref<1x128xf32, #tpu.memory_space<vmem>>, %arg4: memref<32x128xf32, #tpu.memory_space<vmem>>) attributes {dimension_semantics = [#tpu.dimension_semantics<parallel>], iteration_bounds = array<i64: 1>, scalar_prefetch = 0 : i64, scratch_operands = 0 : i64, tpu.core_type = #tpu.core_type<tc>, window_params = [{transform_indices = @transform_0, window_bounds = array<i64: 32, 128>}, {pipeline_mode = #tpu.pipeline_mode<synchronous>, transform_indices = @transform_1, window_bounds = array<i64: 1, 128>}, {pipeline_mode = #tpu.pipeline_mode<synchronous>, transform_indices = @transform_2, window_bounds = array<i64: 1, 128>}, {transform_indices = @transform_3, window_bounds = array<i64: 32, 128>}]} {
    %c0 = arith.constant 0 : index
    %c0_0 = arith.constant 0 : index
    %0 = vector.load %arg1[%c0, %c0_0] : memref<32x128xf32, #tpu.memory_space<vmem>>, vector<32x128xf32>
    %cst = arith.constant dense<0.000000e+00> : vector<32xf32>
    %1 = vector.multi_reduction <add>, %0, %cst [1] : vector<32x128xf32> to vector<32xf32>
    %2 = vector.shape_cast %1 : vector<32xf32> to vector<32x1xf32>
    %cst_1 = arith.constant 1.280000e+02 : f32
    %3 = vector.broadcast %cst_1 : f32 to vector<32x1xf32>
    %4 = arith.divf %2, %3 : vector<32x1xf32>
    %5 = vector.broadcast %4 : vector<32x1xf32> to vector<32x128xf32>
    %6 = arith.subf %0, %5 : vector<32x128xf32>
    %7 = arith.mulf %6, %6 : vector<32x128xf32>
    %cst_2 = arith.constant dense<0.000000e+00> : vector<32xf32>
    %8 = vector.multi_reduction <add>, %7, %cst_2 [1] : vector<32x128xf32> to vector<32xf32>
    %9 = vector.shape_cast %8 : vector<32xf32> to vector<32x1xf32>
    %cst_3 = arith.constant 1.280000e+02 : f32
    %10 = vector.broadcast %cst_3 : f32 to vector<32x1xf32>
    %11 = arith.divf %9, %10 : vector<32x1xf32>
    %cst_4 = arith.constant 9.99999974E-6 : f32
    %12 = vector.broadcast %cst_4 : f32 to vector<32x1xf32>
    %13 = arith.addf %11, %12 : vector<32x1xf32>
    %14 = math.rsqrt %13 : vector<32x1xf32>
    %15 = vector.broadcast %14 : vector<32x1xf32> to vector<32x128xf32>
    %16 = arith.mulf %6, %15 : vector<32x128xf32>
    %c0_5 = arith.constant 0 : index
    %c0_6 = arith.constant 0 : index
    %17 = vector.load %arg2[%c0_5, %c0_6] : memref<1x128xf32, #tpu.memory_space<vmem>>, vector<1x128xf32>
    %18 = vector.broadcast %17 : vector<1x128xf32> to vector<32x128xf32>
    %19 = arith.mulf %16, %18 : vector<32x128xf32>
    %c0_7 = arith.constant 0 : index
    %c0_8 = arith.constant 0 : index
    %20 = vector.load %arg3[%c0_7, %c0_8] : memref<1x128xf32, #tpu.memory_space<vmem>>, vector<1x128xf32>
    %21 = vector.broadcast %20 : vector<1x128xf32> to vector<32x128xf32>
    %22 = arith.addf %19, %21 : vector<32x128xf32>
    %c0_9 = arith.constant 0 : index
    %c0_10 = arith.constant 0 : index
    %23 = vector.load %arg4[%c0_9, %c0_10] : memref<32x128xf32, #tpu.memory_space<vmem>>, vector<32x128xf32>
    tpu.vector_store %arg4[%c0_9, %c0_10], %22 {strides = array<i32>} : memref<32x128xf32, #tpu.memory_space<vmem>>, vector<32x128xf32>,
    return
  }
  func.func @transform_0(%arg0: i32) -> (i32, i32) {
    %c0_i32 = arith.constant 0 : i32
    %c0_i32_0 = arith.constant 0 : i32
    return %arg0, %c0_i32 : i32, i32
  }
  func.func @transform_1(%arg0: i32) -> (i32, i32) {
    %c0_i32 = arith.constant 0 : i32
    %c0_i32_0 = arith.constant 0 : i32
    %c0_i32_1 = arith.constant 0 : i32
    return %c0_i32, %c0_i32_0 : i32, i32
  }
  func.func @transform_2(%arg0: i32) -> (i32, i32) {
    %c0_i32 = arith.constant 0 : i32
    %c0_i32_0 = arith.constant 0 : i32
    %c0_i32_1 = arith.constant 0 : i32
    return %c0_i32, %c0_i32_0 : i32, i32
  }
  func.func @transform_3(%arg0: i32) -> (i32, i32) {
    %c0_i32 = arith.constant 0 : i32
    %c0_i32_0 = arith.constant 0 : i32
    return %arg0, %c0_i32 : i32, i32
  }
}

module attributes {stable_mosaic.version = 11 : i64} {
  func.func @_tm_recurrence_kernel(%arg0: i32, %arg1: i32, %arg2: memref<1x16x128xbf16, #tpu.memory_space<vmem>>, %arg3: memref<1x16x128xbf16, #tpu.memory_space<vmem>>, %arg4: memref<1x16x128xbf16, #tpu.memory_space<vmem>>, %arg5: memref<9x128xf32, #tpu.memory_space<vmem>>, %arg6: memref<1x16x128xbf16, #tpu.memory_space<vmem>>) attributes {dimension_semantics = [#tpu.dimension_semantics<parallel>, #tpu.dimension_semantics<parallel>], iteration_bounds = array<i64: 2, 1>, scalar_prefetch = 0 : i64, scratch_operands = 0 : i64, tpu.core_type = #tpu.core_type<tc>, window_params = [{transform_indices = @transform_0, window_bounds = array<i64: 1, 16, 128>}, {transform_indices = @transform_1, window_bounds = array<i64: 1, 16, 128>}, {transform_indices = @transform_2, window_bounds = array<i64: 1, 16, 128>}, {transform_indices = @transform_3, window_bounds = array<i64: 9, 128>}, {transform_indices = @transform_4, window_bounds = array<i64: 1, 16, 128>}]} {
    %c0 = arith.constant 0 : index
    %c0_0 = arith.constant 0 : index
    %0 = vector.load %arg5[%c0, %c0_0] : memref<9x128xf32, #tpu.memory_space<vmem>>, vector<9x128xf32>
    %1 = vector.extract_strided_slice %0 {offsets = [1, 0], sizes = [8, 128], strides = [1, 1]} : vector<9x128xf32> to vector<8x128xf32>
    %2 = tpu.iota {dimensions = array<i32: 0>} : vector<8x128xi32>
    %c1_i32 = arith.constant 1 : i32
    %3 = vector.broadcast %c1_i32 : i32 to vector<8x128xi32>
    %4 = arith.cmpi sge, %2, %3 : vector<8x128xi32>
    %5 = vector.extract_strided_slice %0 {offsets = [1, 0], sizes = [1, 128], strides = [1, 1]} : vector<9x128xf32> to vector<1x128xf32>
    %cst = arith.constant 0.000000e+00 : f32
    %6 = vector.shape_cast %5 : vector<1x128xf32> to vector<1x128xf32>
    %7 = vector.broadcast %6 : vector<1x128xf32> to vector<8x128xf32>
    %8 = vector.broadcast %cst : f32 to vector<8x128xf32>
    %9 = arith.select %4, %7, %8 : vector<8x128xi1>, vector<8x128xf32>
    %c2_i32 = arith.constant 2 : i32
    %10 = vector.broadcast %c2_i32 : i32 to vector<8x128xi32>
    %11 = arith.cmpi sge, %2, %10 : vector<8x128xi32>
    %12 = vector.extract_strided_slice %0 {offsets = [2, 0], sizes = [1, 128], strides = [1, 1]} : vector<9x128xf32> to vector<1x128xf32>
    %cst_1 = arith.constant 0.000000e+00 : f32
    %13 = vector.shape_cast %12 : vector<1x128xf32> to vector<1x128xf32>
    %14 = vector.broadcast %13 : vector<1x128xf32> to vector<8x128xf32>
    %15 = vector.broadcast %cst_1 : f32 to vector<8x128xf32>
    %16 = arith.select %11, %14, %15 : vector<8x128xi1>, vector<8x128xf32>
    %c3_i32 = arith.constant 3 : i32
    %17 = vector.broadcast %c3_i32 : i32 to vector<8x128xi32>
    %18 = arith.cmpi sge, %2, %17 : vector<8x128xi32>
    %19 = vector.extract_strided_slice %0 {offsets = [3, 0], sizes = [1, 128], strides = [1, 1]} : vector<9x128xf32> to vector<1x128xf32>
    %cst_2 = arith.constant 0.000000e+00 : f32
    %20 = vector.shape_cast %19 : vector<1x128xf32> to vector<1x128xf32>
    %21 = vector.broadcast %20 : vector<1x128xf32> to vector<8x128xf32>
    %22 = vector.broadcast %cst_2 : f32 to vector<8x128xf32>
    %23 = arith.select %18, %21, %22 : vector<8x128xi1>, vector<8x128xf32>
    %c4_i32 = arith.constant 4 : i32
    %24 = vector.broadcast %c4_i32 : i32 to vector<8x128xi32>
    %25 = arith.cmpi sge, %2, %24 : vector<8x128xi32>
    %26 = vector.extract_strided_slice %0 {offsets = [4, 0], sizes = [1, 128], strides = [1, 1]} : vector<9x128xf32> to vector<1x128xf32>
    %cst_3 = arith.constant 0.000000e+00 : f32
    %27 = vector.shape_cast %26 : vector<1x128xf32> to vector<1x128xf32>
    %28 = vector.broadcast %27 : vector<1x128xf32> to vector<8x128xf32>
    %29 = vector.broadcast %cst_3 : f32 to vector<8x128xf32>
    %30 = arith.select %25, %28, %29 : vector<8x128xi1>, vector<8x128xf32>
    %c5_i32 = arith.constant 5 : i32
    %31 = vector.broadcast %c5_i32 : i32 to vector<8x128xi32>
    %32 = arith.cmpi sge, %2, %31 : vector<8x128xi32>
    %33 = vector.extract_strided_slice %0 {offsets = [5, 0], sizes = [1, 128], strides = [1, 1]} : vector<9x128xf32> to vector<1x128xf32>
    %cst_4 = arith.constant 0.000000e+00 : f32
    %34 = vector.shape_cast %33 : vector<1x128xf32> to vector<1x128xf32>
    %35 = vector.broadcast %34 : vector<1x128xf32> to vector<8x128xf32>
    %36 = vector.broadcast %cst_4 : f32 to vector<8x128xf32>
    %37 = arith.select %32, %35, %36 : vector<8x128xi1>, vector<8x128xf32>
    %c6_i32 = arith.constant 6 : i32
    %38 = vector.broadcast %c6_i32 : i32 to vector<8x128xi32>
    %39 = arith.cmpi sge, %2, %38 : vector<8x128xi32>
    %40 = vector.extract_strided_slice %0 {offsets = [6, 0], sizes = [1, 128], strides = [1, 1]} : vector<9x128xf32> to vector<1x128xf32>
    %cst_5 = arith.constant 0.000000e+00 : f32
    %41 = vector.shape_cast %40 : vector<1x128xf32> to vector<1x128xf32>
    %42 = vector.broadcast %41 : vector<1x128xf32> to vector<8x128xf32>
    %43 = vector.broadcast %cst_5 : f32 to vector<8x128xf32>
    %44 = arith.select %39, %42, %43 : vector<8x128xi1>, vector<8x128xf32>
    %c7_i32 = arith.constant 7 : i32
    %45 = vector.broadcast %c7_i32 : i32 to vector<8x128xi32>
    %46 = arith.cmpi sge, %2, %45 : vector<8x128xi32>
    %47 = vector.extract_strided_slice %0 {offsets = [7, 0], sizes = [1, 128], strides = [1, 1]} : vector<9x128xf32> to vector<1x128xf32>
    %cst_6 = arith.constant 0.000000e+00 : f32
    %48 = vector.shape_cast %47 : vector<1x128xf32> to vector<1x128xf32>
    %49 = vector.broadcast %48 : vector<1x128xf32> to vector<8x128xf32>
    %50 = vector.broadcast %cst_6 : f32 to vector<8x128xf32>
    %51 = arith.select %46, %49, %50 : vector<8x128xi1>, vector<8x128xf32>
    %cst_7 = arith.constant 0.000000e+00 : f32
    %52 = vector.broadcast %cst_7 : f32 to vector<1x128xf32>
    %c0_i32 = arith.constant 0 : i32
    %c2_i32_8 = arith.constant 2 : i32
    %53 = arith.addi %c0_i32, %c2_i32_8 : i32
    %c1_i32_9 = arith.constant 1 : i32
    %54:2 = scf.for %arg7 = %c0_i32 to %53 step %c1_i32_9 iter_args(%arg8 = %52, %arg9 = %52) -> (vector<1x128xf32>, vector<1x128xf32>)  : i32 {
      %c8_i32 = arith.constant 8 : i32
      %55 = arith.muli %arg7, %c8_i32 : i32
      %56 = tpu.assume_multiple %55, 8 : i32
      %c0_11 = arith.constant 0 : index
      %57 = arith.index_cast %56 : i32 to index
      %c0_12 = arith.constant 0 : index
      %58 = vector.load %arg2[%c0_11, %57, %c0_12] : memref<1x16x128xbf16, #tpu.memory_space<vmem>>, vector<1x8x128xbf16>
      %59 = vector.shape_cast %58 : vector<1x8x128xbf16> to vector<8x128xbf16>
      %60 = arith.extf %59 : vector<8x128xbf16> to vector<8x128xf32>
      %c0_13 = arith.constant 0 : index
      %61 = arith.index_cast %56 : i32 to index
      %c0_14 = arith.constant 0 : index
      %62 = vector.load %arg3[%c0_13, %61, %c0_14] : memref<1x16x128xbf16, #tpu.memory_space<vmem>>, vector<1x8x128xbf16>
      %63 = vector.shape_cast %62 : vector<1x8x128xbf16> to vector<8x128xbf16>
      %64 = arith.extf %63 : vector<8x128xbf16> to vector<8x128xf32>
      %c0_15 = arith.constant 0 : index
      %65 = arith.index_cast %56 : i32 to index
      %c0_16 = arith.constant 0 : index
      %66 = vector.load %arg4[%c0_15, %65, %c0_16] : memref<1x16x128xbf16, #tpu.memory_space<vmem>>, vector<1x8x128xbf16>
      %67 = vector.shape_cast %66 : vector<1x8x128xbf16> to vector<8x128xbf16>
      %68 = arith.extf %67 : vector<8x128xbf16> to vector<8x128xf32>
      %69 = arith.mulf %60, %64 : vector<8x128xf32>
      %c1_i32_17 = arith.constant 1 : i32
      %70 = tpu.dynamic_rotate %69 by %c1_i32_17 dim 0 : vector<8x128xf32>, i32 -> vector<8x128xf32>
      %71 = arith.mulf %9, %70 : vector<8x128xf32>
      %72 = arith.addf %69, %71 : vector<8x128xf32>
      %c1_i32_18 = arith.constant 1 : i32
      %73 = tpu.dynamic_rotate %60 by %c1_i32_18 dim 0 : vector<8x128xf32>, i32 -> vector<8x128xf32>
      %74 = arith.mulf %9, %73 : vector<8x128xf32>
      %75 = arith.addf %60, %74 : vector<8x128xf32>
      %c2_i32_19 = arith.constant 2 : i32
      %76 = tpu.dynamic_rotate %69 by %c2_i32_19 dim 0 : vector<8x128xf32>, i32 -> vector<8x128xf32>
      %77 = arith.mulf %16, %76 : vector<8x128xf32>
      %78 = arith.addf %72, %77 : vector<8x128xf32>
      %c2_i32_20 = arith.constant 2 : i32
      %79 = tpu.dynamic_rotate %60 by %c2_i32_20 dim 0 : vector<8x128xf32>, i32 -> vector<8x128xf32>
      %80 = arith.mulf %16, %79 : vector<8x128xf32>
      %81 = arith.addf %75, %80 : vector<8x128xf32>
      %c3_i32_21 = arith.constant 3 : i32
      %82 = tpu.dynamic_rotate %69 by %c3_i32_21 dim 0 : vector<8x128xf32>, i32 -> vector<8x128xf32>
      %83 = arith.mulf %23, %82 : vector<8x128xf32>
      %84 = arith.addf %78, %83 : vector<8x128xf32>
      %c3_i32_22 = arith.constant 3 : i32
      %85 = tpu.dynamic_rotate %60 by %c3_i32_22 dim 0 : vector<8x128xf32>, i32 -> vector<8x128xf32>
      %86 = arith.mulf %23, %85 : vector<8x128xf32>
      %87 = arith.addf %81, %86 : vector<8x128xf32>
      %c4_i32_23 = arith.constant 4 : i32
      %88 = tpu.dynamic_rotate %69 by %c4_i32_23 dim 0 : vector<8x128xf32>, i32 -> vector<8x128xf32>
      %89 = arith.mulf %30, %88 : vector<8x128xf32>
      %90 = arith.addf %84, %89 : vector<8x128xf32>
      %c4_i32_24 = arith.constant 4 : i32
      %91 = tpu.dynamic_rotate %60 by %c4_i32_24 dim 0 : vector<8x128xf32>, i32 -> vector<8x128xf32>
      %92 = arith.mulf %30, %91 : vector<8x128xf32>
      %93 = arith.addf %87, %92 : vector<8x128xf32>
      %c5_i32_25 = arith.constant 5 : i32
      %94 = tpu.dynamic_rotate %69 by %c5_i32_25 dim 0 : vector<8x128xf32>, i32 -> vector<8x128xf32>
      %95 = arith.mulf %37, %94 : vector<8x128xf32>
      %96 = arith.addf %90, %95 : vector<8x128xf32>
      %c5_i32_26 = arith.constant 5 : i32
      %97 = tpu.dynamic_rotate %60 by %c5_i32_26 dim 0 : vector<8x128xf32>, i32 -> vector<8x128xf32>
      %98 = arith.mulf %37, %97 : vector<8x128xf32>
      %99 = arith.addf %93, %98 : vector<8x128xf32>
      %c6_i32_27 = arith.constant 6 : i32
      %100 = tpu.dynamic_rotate %69 by %c6_i32_27 dim 0 : vector<8x128xf32>, i32 -> vector<8x128xf32>
      %101 = arith.mulf %44, %100 : vector<8x128xf32>
      %102 = arith.addf %96, %101 : vector<8x128xf32>
      %c6_i32_28 = arith.constant 6 : i32
      %103 = tpu.dynamic_rotate %60 by %c6_i32_28 dim 0 : vector<8x128xf32>, i32 -> vector<8x128xf32>
      %104 = arith.mulf %44, %103 : vector<8x128xf32>
      %105 = arith.addf %99, %104 : vector<8x128xf32>
      %c7_i32_29 = arith.constant 7 : i32
      %106 = tpu.dynamic_rotate %69 by %c7_i32_29 dim 0 : vector<8x128xf32>, i32 -> vector<8x128xf32>
      %107 = arith.mulf %51, %106 : vector<8x128xf32>
      %108 = arith.addf %102, %107 : vector<8x128xf32>
      %c7_i32_30 = arith.constant 7 : i32
      %109 = tpu.dynamic_rotate %60 by %c7_i32_30 dim 0 : vector<8x128xf32>, i32 -> vector<8x128xf32>
      %110 = arith.mulf %51, %109 : vector<8x128xf32>
      %111 = arith.addf %105, %110 : vector<8x128xf32>
      %112 = vector.broadcast %arg8 : vector<1x128xf32> to vector<8x128xf32>
      %113 = arith.mulf %1, %112 : vector<8x128xf32>
      %114 = arith.addf %108, %113 : vector<8x128xf32>
      %115 = vector.broadcast %arg9 : vector<1x128xf32> to vector<8x128xf32>
      %116 = arith.mulf %1, %115 : vector<8x128xf32>
      %117 = arith.addf %111, %116 : vector<8x128xf32>
      %118 = arith.divf %114, %117 : vector<8x128xf32>
      %119 = arith.mulf %68, %118 : vector<8x128xf32>
      %120 = arith.truncf %119 : vector<8x128xf32> to vector<8x128xbf16>
      %c0_31 = arith.constant 0 : index
      %121 = arith.index_cast %56 : i32 to index
      %c0_32 = arith.constant 0 : index
      %122 = vector.load %arg6[%c0_31, %121, %c0_32] : memref<1x16x128xbf16, #tpu.memory_space<vmem>>, vector<1x8x128xbf16>
      %123 = vector.shape_cast %122 : vector<1x8x128xbf16> to vector<8x128xbf16>
      %124 = vector.shape_cast %120 : vector<8x128xbf16> to vector<1x8x128xbf16>
      tpu.vector_store %arg6[%c0_31, %121, %c0_32], %124 {strides = array<i32>} : memref<1x16x128xbf16, #tpu.memory_space<vmem>>, vector<1x8x128xbf16>,
      %125 = vector.extract_strided_slice %114 {offsets = [7, 0], sizes = [1, 128], strides = [1, 1]} : vector<8x128xf32> to vector<1x128xf32>
      %126 = vector.extract_strided_slice %117 {offsets = [7, 0], sizes = [1, 128], strides = [1, 1]} : vector<8x128xf32> to vector<1x128xf32>
      scf.yield %125, %126 : vector<1x128xf32>, vector<1x128xf32>
    }
    %c2_i32_10 = arith.constant 2 : i32
    return
  }
  func.func @transform_0(%arg0: i32, %arg1: i32) -> (i32, i32, i32) {
    %c0_i32 = arith.constant 0 : i32
    %c0_i32_0 = arith.constant 0 : i32
    return %arg0, %c0_i32, %arg1 : i32, i32, i32
  }
  func.func @transform_1(%arg0: i32, %arg1: i32) -> (i32, i32, i32) {
    %c0_i32 = arith.constant 0 : i32
    %c0_i32_0 = arith.constant 0 : i32
    return %arg0, %c0_i32, %arg1 : i32, i32, i32
  }
  func.func @transform_2(%arg0: i32, %arg1: i32) -> (i32, i32, i32) {
    %c0_i32 = arith.constant 0 : i32
    %c0_i32_0 = arith.constant 0 : i32
    return %arg0, %c0_i32, %arg1 : i32, i32, i32
  }
  func.func @transform_3(%arg0: i32, %arg1: i32) -> (i32, i32) {
    %c0_i32 = arith.constant 0 : i32
    %c0_i32_0 = arith.constant 0 : i32
    return %c0_i32, %arg1 : i32, i32
  }
  func.func @transform_4(%arg0: i32, %arg1: i32) -> (i32, i32, i32) {
    %c0_i32 = arith.constant 0 : i32
    %c0_i32_0 = arith.constant 0 : i32
    return %arg0, %c0_i32, %arg1 : i32, i32, i32
  }
}

module attributes {stable_mosaic.version = 11 : i64} {
  func.func @_dual_matmul_kernel(%arg0: i32, %arg1: i32, %arg2: memref<32x128xbf16, #tpu.memory_space<vmem>>, %arg3: memref<32x128xbf16, #tpu.memory_space<vmem>>, %arg4: memref<128x640xbf16, #tpu.memory_space<vmem>>, %arg5: memref<128x640xbf16, #tpu.memory_space<vmem>>, %arg6: memref<32x512xbf16, #tpu.memory_space<vmem>>, %arg7: memref<32x128xbf16, #tpu.memory_space<vmem>>, %arg8: memref<32x640xf32, #tpu.memory_space<vmem>>) attributes {dimension_semantics = [#tpu.dimension_semantics<parallel>, #tpu.dimension_semantics<arbitrary>], iteration_bounds = array<i64: 1, 1>, scalar_prefetch = 0 : i64, scratch_operands = 1 : i64, tpu.core_type = #tpu.core_type<tc>, window_params = [{transform_indices = @transform_0, window_bounds = array<i64: 32, 128>}, {transform_indices = @transform_1, window_bounds = array<i64: 32, 128>}, {transform_indices = @transform_2, window_bounds = array<i64: 128, 640>}, {transform_indices = @transform_3, window_bounds = array<i64: 128, 640>}, {transform_indices = @transform_4, window_bounds = array<i64: 32, 512>}, {transform_indices = @transform_5, window_bounds = array<i64: 32, 128>}]} {
    %c0_i32 = arith.constant 0 : i32
    %0 = arith.cmpi eq, %arg1, %c0_i32 : i32
    %1 = arith.extui %0 : i1 to i32
    %c0_i32_0 = arith.constant 0 : i32
    %2 = arith.cmpi ne, %1, %c0_i32_0 : i32
    scf.if %2 {
      %cst_15 = arith.constant 0.000000e+00 : f32
      %16 = vector.broadcast %cst_15 : f32 to vector<32x640xf32>
      %c0_16 = arith.constant 0 : index
      %c0_17 = arith.constant 0 : index
      %17 = vector.load %arg8[%c0_16, %c0_17] : memref<32x640xf32, #tpu.memory_space<vmem>>, vector<32x640xf32>
      tpu.vector_store %arg8[%c0_16, %c0_17], %16 {strides = array<i32>} : memref<32x640xf32, #tpu.memory_space<vmem>>, vector<32x640xf32>,
    } else {
    }
    %c0 = arith.constant 0 : index
    %c0_1 = arith.constant 0 : index
    %3 = vector.load %arg8[%c0, %c0_1] : memref<32x640xf32, #tpu.memory_space<vmem>>, vector<32x640xf32>
    %c0_2 = arith.constant 0 : index
    %c0_3 = arith.constant 0 : index
    %4 = vector.load %arg2[%c0_2, %c0_3] : memref<32x128xbf16, #tpu.memory_space<vmem>>, vector<32x128xbf16>
    %c0_4 = arith.constant 0 : index
    %c0_5 = arith.constant 0 : index
    %5 = vector.load %arg4[%c0_4, %c0_5] : memref<128x640xbf16, #tpu.memory_space<vmem>>, vector<128x640xbf16>
    %cst = arith.constant dense<0.000000e+00> : vector<32x640xf32>
    %6 = tpu.matmul %4, %5, %cst {dimension_numbers = #tpu.dot_dimension_numbers<[1], [0], [0], [1], [0, 0, 1, 1], [], []>} : vector<32x128xbf16>, vector<128x640xbf16>, vector<32x640xf32> -> vector<32x640xf32>
    %c0_6 = arith.constant 0 : index
    %c0_7 = arith.constant 0 : index
    %7 = vector.load %arg3[%c0_6, %c0_7] : memref<32x128xbf16, #tpu.memory_space<vmem>>, vector<32x128xbf16>
    %c0_8 = arith.constant 0 : index
    %c0_9 = arith.constant 0 : index
    %8 = vector.load %arg5[%c0_8, %c0_9] : memref<128x640xbf16, #tpu.memory_space<vmem>>, vector<128x640xbf16>
    %cst_10 = arith.constant dense<0.000000e+00> : vector<32x640xf32>
    %9 = tpu.matmul %7, %8, %cst_10 {dimension_numbers = #tpu.dot_dimension_numbers<[1], [0], [0], [1], [0, 0, 1, 1], [], []>} : vector<32x128xbf16>, vector<128x640xbf16>, vector<32x640xf32> -> vector<32x640xf32>
    %10 = arith.addf %6, %9 : vector<32x640xf32>
    %11 = arith.addf %3, %10 : vector<32x640xf32>
    %c0_11 = arith.constant 0 : index
    %c0_12 = arith.constant 0 : index
    %12 = vector.load %arg8[%c0_11, %c0_12] : memref<32x640xf32, #tpu.memory_space<vmem>>, vector<32x640xf32>
    tpu.vector_store %arg8[%c0_11, %c0_12], %11 {strides = array<i32>} : memref<32x640xf32, #tpu.memory_space<vmem>>, vector<32x640xf32>,
    %c0_i32_13 = arith.constant 0 : i32
    %13 = arith.cmpi eq, %arg1, %c0_i32_13 : i32
    %14 = arith.extui %13 : i1 to i32
    %c0_i32_14 = arith.constant 0 : i32
    %15 = arith.cmpi ne, %14, %c0_i32_14 : i32
    scf.if %15 {
      %c0_15 = arith.constant 0 : index
      %c0_16 = arith.constant 0 : index
      %16 = vector.load %arg8[%c0_15, %c0_16] : memref<32x640xf32, #tpu.memory_space<vmem>>, vector<32x512xf32>
      %17 = arith.negf %16 : vector<32x512xf32>
      %18 = math.exp %17 : vector<32x512xf32>
      %cst_17 = arith.constant 1.000000e+00 : f32
      %19 = vector.broadcast %cst_17 : f32 to vector<32x512xf32>
      %20 = arith.addf %19, %18 : vector<32x512xf32>
      %21 = arith.divf %19, %20 : vector<32x512xf32>
      %22 = arith.mulf %16, %21 : vector<32x512xf32>
      %23 = arith.truncf %22 : vector<32x512xf32> to vector<32x512xbf16>
      %c0_18 = arith.constant 0 : index
      %c0_19 = arith.constant 0 : index
      %24 = vector.load %arg6[%c0_18, %c0_19] : memref<32x512xbf16, #tpu.memory_space<vmem>>, vector<32x512xbf16>
      tpu.vector_store %arg6[%c0_18, %c0_19], %23 {strides = array<i32>} : memref<32x512xbf16, #tpu.memory_space<vmem>>, vector<32x512xbf16>,
      %c0_20 = arith.constant 0 : index
      %c512 = arith.constant 512 : index
      %25 = vector.load %arg8[%c0_20, %c512] : memref<32x640xf32, #tpu.memory_space<vmem>>, vector<32x128xf32>
      %26 = arith.negf %25 : vector<32x128xf32>
      %27 = math.exp %26 : vector<32x128xf32>
      %cst_21 = arith.constant 1.000000e+00 : f32
      %28 = vector.broadcast %cst_21 : f32 to vector<32x128xf32>
      %29 = arith.addf %28, %27 : vector<32x128xf32>
      %30 = arith.divf %28, %29 : vector<32x128xf32>
      %31 = arith.truncf %30 : vector<32x128xf32> to vector<32x128xbf16>
      %c0_22 = arith.constant 0 : index
      %c0_23 = arith.constant 0 : index
      %32 = vector.load %arg7[%c0_22, %c0_23] : memref<32x128xbf16, #tpu.memory_space<vmem>>, vector<32x128xbf16>
      tpu.vector_store %arg7[%c0_22, %c0_23], %31 {strides = array<i32>} : memref<32x128xbf16, #tpu.memory_space<vmem>>, vector<32x128xbf16>,
    } else {
    }
    return
  }
  func.func @transform_0(%arg0: i32, %arg1: i32) -> (i32, i32) {
    %c0_i32 = arith.constant 0 : i32
    return %arg0, %arg1 : i32, i32
  }
  func.func @transform_1(%arg0: i32, %arg1: i32) -> (i32, i32) {
    %c0_i32 = arith.constant 0 : i32
    return %arg0, %arg1 : i32, i32
  }
  func.func @transform_2(%arg0: i32, %arg1: i32) -> (i32, i32) {
    %c0_i32 = arith.constant 0 : i32
    %c0_i32_0 = arith.constant 0 : i32
    return %arg1, %c0_i32 : i32, i32
  }
  func.func @transform_3(%arg0: i32, %arg1: i32) -> (i32, i32) {
    %c0_i32 = arith.constant 0 : i32
    %c0_i32_0 = arith.constant 0 : i32
    return %arg1, %c0_i32 : i32, i32
  }
  func.func @transform_4(%arg0: i32, %arg1: i32) -> (i32, i32) {
    %c0_i32 = arith.constant 0 : i32
    %c0_i32_0 = arith.constant 0 : i32
    return %arg0, %c0_i32 : i32, i32
  }
  func.func @transform_5(%arg0: i32, %arg1: i32) -> (i32, i32) {
    %c0_i32 = arith.constant 0 : i32
    %c0_i32_0 = arith.constant 0 : i32
    return %arg0, %c0_i32 : i32, i32
  }
}

module attributes {stable_mosaic.version = 11 : i64} {
  func.func @_gated_resid_ln_kernel(%arg0: i32, %arg1: i32, %arg2: memref<32x512xbf16, #tpu.memory_space<vmem>>, %arg3: memref<512x128xbf16, #tpu.memory_space<vmem>>, %arg4: memref<32x128xbf16, #tpu.memory_space<vmem>>, %arg5: memref<32x128xf32, #tpu.memory_space<vmem>>, %arg6: memref<1x128xf32, #tpu.memory_space<vmem>>, %arg7: memref<1x128xf32, #tpu.memory_space<vmem>>, %arg8: memref<32x128xf32, #tpu.memory_space<vmem>>, %arg9: memref<32x128xbf16, #tpu.memory_space<vmem>>) attributes {dimension_semantics = [#tpu.dimension_semantics<parallel>, #tpu.dimension_semantics<arbitrary>], iteration_bounds = array<i64: 1, 1>, scalar_prefetch = 0 : i64, scratch_operands = 0 : i64, tpu.core_type = #tpu.core_type<tc>, window_params = [{transform_indices = @transform_0, window_bounds = array<i64: 32, 512>}, {transform_indices = @transform_1, window_bounds = array<i64: 512, 128>}, {transform_indices = @transform_2, window_bounds = array<i64: 32, 128>}, {transform_indices = @transform_3, window_bounds = array<i64: 32, 128>}, {pipeline_mode = #tpu.pipeline_mode<synchronous>, transform_indices = @transform_4, window_bounds = array<i64: 1, 128>}, {pipeline_mode = #tpu.pipeline_mode<synchronous>, transform_indices = @transform_5, window_bounds = array<i64: 1, 128>}, {transform_indices = @transform_6, window_bounds = array<i64: 32, 128>}, {transform_indices = @transform_7, window_bounds = array<i64: 32, 128>}]} {
    %c0_i32 = arith.constant 0 : i32
    %0 = arith.cmpi eq, %arg1, %c0_i32 : i32
    %1 = arith.extui %0 : i1 to i32
    %c0_i32_0 = arith.constant 0 : i32
    %2 = arith.cmpi ne, %1, %c0_i32_0 : i32
    scf.if %2 {
      %cst_10 = arith.constant 0.000000e+00 : f32
      %12 = vector.broadcast %cst_10 : f32 to vector<32x128xf32>
      %c0_11 = arith.constant 0 : index
      %c0_12 = arith.constant 0 : index
      %13 = vector.load %arg8[%c0_11, %c0_12] : memref<32x128xf32, #tpu.memory_space<vmem>>, vector<32x128xf32>
      tpu.vector_store %arg8[%c0_11, %c0_12], %12 {strides = array<i32>} : memref<32x128xf32, #tpu.memory_space<vmem>>, vector<32x128xf32>,
    } else {
    }
    %c0 = arith.constant 0 : index
    %c0_1 = arith.constant 0 : index
    %3 = vector.load %arg8[%c0, %c0_1] : memref<32x128xf32, #tpu.memory_space<vmem>>, vector<32x128xf32>
    %c0_2 = arith.constant 0 : index
    %c0_3 = arith.constant 0 : index
    %4 = vector.load %arg2[%c0_2, %c0_3] : memref<32x512xbf16, #tpu.memory_space<vmem>>, vector<32x512xbf16>
    %c0_4 = arith.constant 0 : index
    %c0_5 = arith.constant 0 : index
    %5 = vector.load %arg3[%c0_4, %c0_5] : memref<512x128xbf16, #tpu.memory_space<vmem>>, vector<512x128xbf16>
    %cst = arith.constant dense<0.000000e+00> : vector<32x128xf32>
    %6 = tpu.matmul %4, %5, %cst {dimension_numbers = #tpu.dot_dimension_numbers<[1], [0], [0], [1], [0, 0, 1, 1], [], []>} : vector<32x512xbf16>, vector<512x128xbf16>, vector<32x128xf32> -> vector<32x128xf32>
    %7 = arith.addf %3, %6 : vector<32x128xf32>
    %c0_6 = arith.constant 0 : index
    %c0_7 = arith.constant 0 : index
    %8 = vector.load %arg8[%c0_6, %c0_7] : memref<32x128xf32, #tpu.memory_space<vmem>>, vector<32x128xf32>
    tpu.vector_store %arg8[%c0_6, %c0_7], %7 {strides = array<i32>} : memref<32x128xf32, #tpu.memory_space<vmem>>, vector<32x128xf32>,
    %c0_i32_8 = arith.constant 0 : i32
    %9 = arith.cmpi eq, %arg1, %c0_i32_8 : i32
    %10 = arith.extui %9 : i1 to i32
    %c0_i32_9 = arith.constant 0 : i32
    %11 = arith.cmpi ne, %10, %c0_i32_9 : i32
    scf.if %11 {
      %c0_10 = arith.constant 0 : index
      %c0_11 = arith.constant 0 : index
      %12 = vector.load %arg5[%c0_10, %c0_11] : memref<32x128xf32, #tpu.memory_space<vmem>>, vector<32x128xf32>
      %c0_12 = arith.constant 0 : index
      %c0_13 = arith.constant 0 : index
      %13 = vector.load %arg4[%c0_12, %c0_13] : memref<32x128xbf16, #tpu.memory_space<vmem>>, vector<32x128xbf16>
      %14 = arith.extf %13 : vector<32x128xbf16> to vector<32x128xf32>
      %c0_14 = arith.constant 0 : index
      %c0_15 = arith.constant 0 : index
      %15 = vector.load %arg8[%c0_14, %c0_15] : memref<32x128xf32, #tpu.memory_space<vmem>>, vector<32x128xf32>
      %16 = arith.mulf %14, %15 : vector<32x128xf32>
      %17 = arith.addf %12, %16 : vector<32x128xf32>
      %c0_16 = arith.constant 0 : index
      %c0_17 = arith.constant 0 : index
      %18 = vector.load %arg8[%c0_16, %c0_17] : memref<32x128xf32, #tpu.memory_space<vmem>>, vector<32x128xf32>
      tpu.vector_store %arg8[%c0_16, %c0_17], %17 {strides = array<i32>} : memref<32x128xf32, #tpu.memory_space<vmem>>, vector<32x128xf32>,
      %cst_18 = arith.constant dense<0.000000e+00> : vector<32xf32>
      %19 = vector.multi_reduction <add>, %17, %cst_18 [1] : vector<32x128xf32> to vector<32xf32>
      %20 = vector.shape_cast %19 : vector<32xf32> to vector<32x1xf32>
      %cst_19 = arith.constant 1.280000e+02 : f32
      %21 = vector.broadcast %cst_19 : f32 to vector<32x1xf32>
      %22 = arith.divf %20, %21 : vector<32x1xf32>
      %23 = vector.broadcast %22 : vector<32x1xf32> to vector<32x128xf32>
      %24 = arith.subf %17, %23 : vector<32x128xf32>
      %25 = arith.mulf %24, %24 : vector<32x128xf32>
      %cst_20 = arith.constant dense<0.000000e+00> : vector<32xf32>
      %26 = vector.multi_reduction <add>, %25, %cst_20 [1] : vector<32x128xf32> to vector<32xf32>
      %27 = vector.shape_cast %26 : vector<32xf32> to vector<32x1xf32>
      %cst_21 = arith.constant 1.280000e+02 : f32
      %28 = vector.broadcast %cst_21 : f32 to vector<32x1xf32>
      %29 = arith.divf %27, %28 : vector<32x1xf32>
      %cst_22 = arith.constant 9.99999974E-6 : f32
      %30 = vector.broadcast %cst_22 : f32 to vector<32x1xf32>
      %31 = arith.addf %29, %30 : vector<32x1xf32>
      %32 = math.rsqrt %31 : vector<32x1xf32>
      %33 = vector.broadcast %32 : vector<32x1xf32> to vector<32x128xf32>
      %34 = arith.mulf %24, %33 : vector<32x128xf32>
      %c0_23 = arith.constant 0 : index
      %c0_24 = arith.constant 0 : index
      %35 = vector.load %arg6[%c0_23, %c0_24] : memref<1x128xf32, #tpu.memory_space<vmem>>, vector<1x128xf32>
      %36 = vector.broadcast %35 : vector<1x128xf32> to vector<32x128xf32>
      %37 = arith.mulf %34, %36 : vector<32x128xf32>
      %c0_25 = arith.constant 0 : index
      %c0_26 = arith.constant 0 : index
      %38 = vector.load %arg7[%c0_25, %c0_26] : memref<1x128xf32, #tpu.memory_space<vmem>>, vector<1x128xf32>
      %39 = vector.broadcast %38 : vector<1x128xf32> to vector<32x128xf32>
      %40 = arith.addf %37, %39 : vector<32x128xf32>
      %41 = arith.truncf %40 : vector<32x128xf32> to vector<32x128xbf16>
      %c0_27 = arith.constant 0 : index
      %c0_28 = arith.constant 0 : index
      %42 = vector.load %arg9[%c0_27, %c0_28] : memref<32x128xbf16, #tpu.memory_space<vmem>>, vector<32x128xbf16>
      tpu.vector_store %arg9[%c0_27, %c0_28], %41 {strides = array<i32>} : memref<32x128xbf16, #tpu.memory_space<vmem>>, vector<32x128xbf16>,
    } else {
    }
    return
  }
  func.func @transform_0(%arg0: i32, %arg1: i32) -> (i32, i32) {
    %c0_i32 = arith.constant 0 : i32
    return %arg0, %arg1 : i32, i32
  }
  func.func @transform_1(%arg0: i32, %arg1: i32) -> (i32, i32) {
    %c0_i32 = arith.constant 0 : i32
    %c0_i32_0 = arith.constant 0 : i32
    return %arg1, %c0_i32 : i32, i32
  }
  func.func @transform_2(%arg0: i32, %arg1: i32) -> (i32, i32) {
    %c0_i32 = arith.constant 0 : i32
    %c0_i32_0 = arith.constant 0 : i32
    return %arg0, %c0_i32 : i32, i32
  }
  func.func @transform_3(%arg0: i32, %arg1: i32) -> (i32, i32) {
    %c0_i32 = arith.constant 0 : i32
    %c0_i32_0 = arith.constant 0 : i32
    return %arg0, %c0_i32 : i32, i32
  }
  func.func @transform_4(%arg0: i32, %arg1: i32) -> (i32, i32) {
    %c0_i32 = arith.constant 0 : i32
    %c0_i32_0 = arith.constant 0 : i32
    %c0_i32_1 = arith.constant 0 : i32
    return %c0_i32, %c0_i32_0 : i32, i32
  }
  func.func @transform_5(%arg0: i32, %arg1: i32) -> (i32, i32) {
    %c0_i32 = arith.constant 0 : i32
    %c0_i32_0 = arith.constant 0 : i32
    %c0_i32_1 = arith.constant 0 : i32
    return %c0_i32, %c0_i32_0 : i32, i32
  }
  func.func @transform_6(%arg0: i32, %arg1: i32) -> (i32, i32) {
    %c0_i32 = arith.constant 0 : i32
    %c0_i32_0 = arith.constant 0 : i32
    return %arg0, %c0_i32 : i32, i32
  }
  func.func @transform_7(%arg0: i32, %arg1: i32) -> (i32, i32) {
    %c0_i32 = arith.constant 0 : i32
    %c0_i32_0 = arith.constant 0 : i32
    return %arg0, %c0_i32 : i32, i32
  }
}

module attributes {stable_mosaic.version = 11 : i64} {
  func.func @_gated_resid_ln_kernel(%arg0: i32, %arg1: i32, %arg2: memref<32x512xbf16, #tpu.memory_space<vmem>>, %arg3: memref<512x128xbf16, #tpu.memory_space<vmem>>, %arg4: memref<32x128xbf16, #tpu.memory_space<vmem>>, %arg5: memref<32x128xf32, #tpu.memory_space<vmem>>, %arg6: memref<1x128xf32, #tpu.memory_space<vmem>>, %arg7: memref<1x128xf32, #tpu.memory_space<vmem>>, %arg8: memref<32x128xf32, #tpu.memory_space<vmem>>, %arg9: memref<32x128xbf16, #tpu.memory_space<vmem>>) attributes {dimension_semantics = [#tpu.dimension_semantics<parallel>, #tpu.dimension_semantics<arbitrary>], iteration_bounds = array<i64: 1, 1>, scalar_prefetch = 0 : i64, scratch_operands = 0 : i64, tpu.core_type = #tpu.core_type<tc>, window_params = [{transform_indices = @transform_0, window_bounds = array<i64: 32, 512>}, {transform_indices = @transform_1, window_bounds = array<i64: 512, 128>}, {transform_indices = @transform_2, window_bounds = array<i64: 32, 128>}, {transform_indices = @transform_3, window_bounds = array<i64: 32, 128>}, {pipeline_mode = #tpu.pipeline_mode<synchronous>, transform_indices = @transform_4, window_bounds = array<i64: 1, 128>}, {pipeline_mode = #tpu.pipeline_mode<synchronous>, transform_indices = @transform_5, window_bounds = array<i64: 1, 128>}, {transform_indices = @transform_6, window_bounds = array<i64: 32, 128>}, {transform_indices = @transform_7, window_bounds = array<i64: 32, 128>}]} {
    %c0_i32 = arith.constant 0 : i32
    %0 = arith.cmpi eq, %arg1, %c0_i32 : i32
    %1 = arith.extui %0 : i1 to i32
    %c0_i32_0 = arith.constant 0 : i32
    %2 = arith.cmpi ne, %1, %c0_i32_0 : i32
    scf.if %2 {
      %cst_10 = arith.constant 0.000000e+00 : f32
      %12 = vector.broadcast %cst_10 : f32 to vector<32x128xf32>
      %c0_11 = arith.constant 0 : index
      %c0_12 = arith.constant 0 : index
      %13 = vector.load %arg8[%c0_11, %c0_12] : memref<32x128xf32, #tpu.memory_space<vmem>>, vector<32x128xf32>
      tpu.vector_store %arg8[%c0_11, %c0_12], %12 {strides = array<i32>} : memref<32x128xf32, #tpu.memory_space<vmem>>, vector<32x128xf32>,
    } else {
    }
    %c0 = arith.constant 0 : index
    %c0_1 = arith.constant 0 : index
    %3 = vector.load %arg8[%c0, %c0_1] : memref<32x128xf32, #tpu.memory_space<vmem>>, vector<32x128xf32>
    %c0_2 = arith.constant 0 : index
    %c0_3 = arith.constant 0 : index
    %4 = vector.load %arg2[%c0_2, %c0_3] : memref<32x512xbf16, #tpu.memory_space<vmem>>, vector<32x512xbf16>
    %c0_4 = arith.constant 0 : index
    %c0_5 = arith.constant 0 : index
    %5 = vector.load %arg3[%c0_4, %c0_5] : memref<512x128xbf16, #tpu.memory_space<vmem>>, vector<512x128xbf16>
    %cst = arith.constant dense<0.000000e+00> : vector<32x128xf32>
    %6 = tpu.matmul %4, %5, %cst {dimension_numbers = #tpu.dot_dimension_numbers<[1], [0], [0], [1], [0, 0, 1, 1], [], []>} : vector<32x512xbf16>, vector<512x128xbf16>, vector<32x128xf32> -> vector<32x128xf32>
    %7 = arith.addf %3, %6 : vector<32x128xf32>
    %c0_6 = arith.constant 0 : index
    %c0_7 = arith.constant 0 : index
    %8 = vector.load %arg8[%c0_6, %c0_7] : memref<32x128xf32, #tpu.memory_space<vmem>>, vector<32x128xf32>
    tpu.vector_store %arg8[%c0_6, %c0_7], %7 {strides = array<i32>} : memref<32x128xf32, #tpu.memory_space<vmem>>, vector<32x128xf32>,
    %c0_i32_8 = arith.constant 0 : i32
    %9 = arith.cmpi eq, %arg1, %c0_i32_8 : i32
    %10 = arith.extui %9 : i1 to i32
    %c0_i32_9 = arith.constant 0 : i32
    %11 = arith.cmpi ne, %10, %c0_i32_9 : i32
    scf.if %11 {
      %c0_10 = arith.constant 0 : index
      %c0_11 = arith.constant 0 : index
      %12 = vector.load %arg5[%c0_10, %c0_11] : memref<32x128xf32, #tpu.memory_space<vmem>>, vector<32x128xf32>
      %c0_12 = arith.constant 0 : index
      %c0_13 = arith.constant 0 : index
      %13 = vector.load %arg4[%c0_12, %c0_13] : memref<32x128xbf16, #tpu.memory_space<vmem>>, vector<32x128xbf16>
      %14 = arith.extf %13 : vector<32x128xbf16> to vector<32x128xf32>
      %c0_14 = arith.constant 0 : index
      %c0_15 = arith.constant 0 : index
      %15 = vector.load %arg8[%c0_14, %c0_15] : memref<32x128xf32, #tpu.memory_space<vmem>>, vector<32x128xf32>
      %16 = arith.mulf %14, %15 : vector<32x128xf32>
      %17 = arith.addf %12, %16 : vector<32x128xf32>
      %c0_16 = arith.constant 0 : index
      %c0_17 = arith.constant 0 : index
      %18 = vector.load %arg8[%c0_16, %c0_17] : memref<32x128xf32, #tpu.memory_space<vmem>>, vector<32x128xf32>
      tpu.vector_store %arg8[%c0_16, %c0_17], %17 {strides = array<i32>} : memref<32x128xf32, #tpu.memory_space<vmem>>, vector<32x128xf32>,
      %cst_18 = arith.constant dense<0.000000e+00> : vector<32xf32>
      %19 = vector.multi_reduction <add>, %17, %cst_18 [1] : vector<32x128xf32> to vector<32xf32>
      %20 = vector.shape_cast %19 : vector<32xf32> to vector<32x1xf32>
      %cst_19 = arith.constant 1.280000e+02 : f32
      %21 = vector.broadcast %cst_19 : f32 to vector<32x1xf32>
      %22 = arith.divf %20, %21 : vector<32x1xf32>
      %23 = vector.broadcast %22 : vector<32x1xf32> to vector<32x128xf32>
      %24 = arith.subf %17, %23 : vector<32x128xf32>
      %25 = arith.mulf %24, %24 : vector<32x128xf32>
      %cst_20 = arith.constant dense<0.000000e+00> : vector<32xf32>
      %26 = vector.multi_reduction <add>, %25, %cst_20 [1] : vector<32x128xf32> to vector<32xf32>
      %27 = vector.shape_cast %26 : vector<32xf32> to vector<32x1xf32>
      %cst_21 = arith.constant 1.280000e+02 : f32
      %28 = vector.broadcast %cst_21 : f32 to vector<32x1xf32>
      %29 = arith.divf %27, %28 : vector<32x1xf32>
      %cst_22 = arith.constant 9.99999974E-6 : f32
      %30 = vector.broadcast %cst_22 : f32 to vector<32x1xf32>
      %31 = arith.addf %29, %30 : vector<32x1xf32>
      %32 = math.rsqrt %31 : vector<32x1xf32>
      %33 = vector.broadcast %32 : vector<32x1xf32> to vector<32x128xf32>
      %34 = arith.mulf %24, %33 : vector<32x128xf32>
      %c0_23 = arith.constant 0 : index
      %c0_24 = arith.constant 0 : index
      %35 = vector.load %arg6[%c0_23, %c0_24] : memref<1x128xf32, #tpu.memory_space<vmem>>, vector<1x128xf32>
      %36 = vector.broadcast %35 : vector<1x128xf32> to vector<32x128xf32>
      %37 = arith.mulf %34, %36 : vector<32x128xf32>
      %c0_25 = arith.constant 0 : index
      %c0_26 = arith.constant 0 : index
      %38 = vector.load %arg7[%c0_25, %c0_26] : memref<1x128xf32, #tpu.memory_space<vmem>>, vector<1x128xf32>
      %39 = vector.broadcast %38 : vector<1x128xf32> to vector<32x128xf32>
      %40 = arith.addf %37, %39 : vector<32x128xf32>
      %41 = arith.truncf %40 : vector<32x128xf32> to vector<32x128xbf16>
      %c0_27 = arith.constant 0 : index
      %c0_28 = arith.constant 0 : index
      %42 = vector.load %arg9[%c0_27, %c0_28] : memref<32x128xbf16, #tpu.memory_space<vmem>>, vector<32x128xbf16>
      tpu.vector_store %arg9[%c0_27, %c0_28], %41 {strides = array<i32>} : memref<32x128xbf16, #tpu.memory_space<vmem>>, vector<32x128xbf16>,
    } else {
    }
    return
  }
  func.func @transform_0(%arg0: i32, %arg1: i32) -> (i32, i32) {
    %c0_i32 = arith.constant 0 : i32
    return %arg0, %arg1 : i32, i32
  }
  func.func @transform_1(%arg0: i32, %arg1: i32) -> (i32, i32) {
    %c0_i32 = arith.constant 0 : i32
    %c0_i32_0 = arith.constant 0 : i32
    return %arg1, %c0_i32 : i32, i32
  }
  func.func @transform_2(%arg0: i32, %arg1: i32) -> (i32, i32) {
    %c0_i32 = arith.constant 0 : i32
    %c0_i32_0 = arith.constant 0 : i32
    return %arg0, %c0_i32 : i32, i32
  }
  func.func @transform_3(%arg0: i32, %arg1: i32) -> (i32, i32) {
    %c0_i32 = arith.constant 0 : i32
    %c0_i32_0 = arith.constant 0 : i32
    return %arg0, %c0_i32 : i32, i32
  }
  func.func @transform_4(%arg0: i32, %arg1: i32) -> (i32, i32) {
    %c0_i32 = arith.constant 0 : i32
    %c0_i32_0 = arith.constant 0 : i32
    %c0_i32_1 = arith.constant 0 : i32
    return %c0_i32, %c0_i32_0 : i32, i32
  }
  func.func @transform_5(%arg0: i32, %arg1: i32) -> (i32, i32) {
    %c0_i32 = arith.constant 0 : i32
    %c0_i32_0 = arith.constant 0 : i32
    %c0_i32_1 = arith.constant 0 : i32
    return %c0_i32, %c0_i32_0 : i32, i32
  }
  func.func @transform_6(%arg0: i32, %arg1: i32) -> (i32, i32) {
    %c0_i32 = arith.constant 0 : i32
    %c0_i32_0 = arith.constant 0 : i32
    return %arg0, %c0_i32 : i32, i32
  }
  func.func @transform_7(%arg0: i32, %arg1: i32) -> (i32, i32) {
    %c0_i32 = arith.constant 0 : i32
    %c0_i32_0 = arith.constant 0 : i32
    return %arg0, %c0_i32 : i32, i32
  }
}

module attributes {stable_mosaic.version = 11 : i64} {
  func.func @_matmul_resid_ln_kernel(%arg0: i32, %arg1: i32, %arg2: memref<32x128xbf16, #tpu.memory_space<vmem>>, %arg3: memref<128x128xbf16, #tpu.memory_space<vmem>>, %arg4: memref<32x128xf32, #tpu.memory_space<vmem>>, %arg5: memref<1x128xf32, #tpu.memory_space<vmem>>, %arg6: memref<1x128xf32, #tpu.memory_space<vmem>>, %arg7: memref<32x128xf32, #tpu.memory_space<vmem>>, %arg8: memref<32x128xbf16, #tpu.memory_space<vmem>>) attributes {dimension_semantics = [#tpu.dimension_semantics<parallel>, #tpu.dimension_semantics<arbitrary>], iteration_bounds = array<i64: 1, 1>, scalar_prefetch = 0 : i64, scratch_operands = 0 : i64, tpu.core_type = #tpu.core_type<tc>, window_params = [{transform_indices = @transform_0, window_bounds = array<i64: 32, 128>}, {transform_indices = @transform_1, window_bounds = array<i64: 128, 128>}, {transform_indices = @transform_2, window_bounds = array<i64: 32, 128>}, {pipeline_mode = #tpu.pipeline_mode<synchronous>, transform_indices = @transform_3, window_bounds = array<i64: 1, 128>}, {pipeline_mode = #tpu.pipeline_mode<synchronous>, transform_indices = @transform_4, window_bounds = array<i64: 1, 128>}, {transform_indices = @transform_5, window_bounds = array<i64: 32, 128>}, {transform_indices = @transform_6, window_bounds = array<i64: 32, 128>}]} {
    %c0_i32 = arith.constant 0 : i32
    %0 = arith.cmpi eq, %arg1, %c0_i32 : i32
    %1 = arith.extui %0 : i1 to i32
    %c0_i32_0 = arith.constant 0 : i32
    %2 = arith.cmpi ne, %1, %c0_i32_0 : i32
    scf.if %2 {
      %cst_10 = arith.constant 0.000000e+00 : f32
      %12 = vector.broadcast %cst_10 : f32 to vector<32x128xf32>
      %c0_11 = arith.constant 0 : index
      %c0_12 = arith.constant 0 : index
      %13 = vector.load %arg7[%c0_11, %c0_12] : memref<32x128xf32, #tpu.memory_space<vmem>>, vector<32x128xf32>
      tpu.vector_store %arg7[%c0_11, %c0_12], %12 {strides = array<i32>} : memref<32x128xf32, #tpu.memory_space<vmem>>, vector<32x128xf32>,
    } else {
    }
    %c0 = arith.constant 0 : index
    %c0_1 = arith.constant 0 : index
    %3 = vector.load %arg7[%c0, %c0_1] : memref<32x128xf32, #tpu.memory_space<vmem>>, vector<32x128xf32>
    %c0_2 = arith.constant 0 : index
    %c0_3 = arith.constant 0 : index
    %4 = vector.load %arg2[%c0_2, %c0_3] : memref<32x128xbf16, #tpu.memory_space<vmem>>, vector<32x128xbf16>
    %c0_4 = arith.constant 0 : index
    %c0_5 = arith.constant 0 : index
    %5 = vector.load %arg3[%c0_4, %c0_5] : memref<128x128xbf16, #tpu.memory_space<vmem>>, vector<128x128xbf16>
    %cst = arith.constant dense<0.000000e+00> : vector<32x128xf32>
    %6 = tpu.matmul %4, %5, %cst {dimension_numbers = #tpu.dot_dimension_numbers<[1], [0], [0], [1], [0, 0, 1, 1], [], []>} : vector<32x128xbf16>, vector<128x128xbf16>, vector<32x128xf32> -> vector<32x128xf32>
    %7 = arith.addf %3, %6 : vector<32x128xf32>
    %c0_6 = arith.constant 0 : index
    %c0_7 = arith.constant 0 : index
    %8 = vector.load %arg7[%c0_6, %c0_7] : memref<32x128xf32, #tpu.memory_space<vmem>>, vector<32x128xf32>
    tpu.vector_store %arg7[%c0_6, %c0_7], %7 {strides = array<i32>} : memref<32x128xf32, #tpu.memory_space<vmem>>, vector<32x128xf32>,
    %c0_i32_8 = arith.constant 0 : i32
    %9 = arith.cmpi eq, %arg1, %c0_i32_8 : i32
    %10 = arith.extui %9 : i1 to i32
    %c0_i32_9 = arith.constant 0 : i32
    %11 = arith.cmpi ne, %10, %c0_i32_9 : i32
    scf.if %11 {
      %c0_10 = arith.constant 0 : index
      %c0_11 = arith.constant 0 : index
      %12 = vector.load %arg7[%c0_10, %c0_11] : memref<32x128xf32, #tpu.memory_space<vmem>>, vector<32x128xf32>
      %c0_12 = arith.constant 0 : index
      %c0_13 = arith.constant 0 : index
      %13 = vector.load %arg4[%c0_12, %c0_13] : memref<32x128xf32, #tpu.memory_space<vmem>>, vector<32x128xf32>
      %14 = arith.addf %12, %13 : vector<32x128xf32>
      %c0_14 = arith.constant 0 : index
      %c0_15 = arith.constant 0 : index
      %15 = vector.load %arg7[%c0_14, %c0_15] : memref<32x128xf32, #tpu.memory_space<vmem>>, vector<32x128xf32>
      tpu.vector_store %arg7[%c0_14, %c0_15], %14 {strides = array<i32>} : memref<32x128xf32, #tpu.memory_space<vmem>>, vector<32x128xf32>,
      %cst_16 = arith.constant dense<0.000000e+00> : vector<32xf32>
      %16 = vector.multi_reduction <add>, %14, %cst_16 [1] : vector<32x128xf32> to vector<32xf32>
      %17 = vector.shape_cast %16 : vector<32xf32> to vector<32x1xf32>
      %cst_17 = arith.constant 1.280000e+02 : f32
      %18 = vector.broadcast %cst_17 : f32 to vector<32x1xf32>
      %19 = arith.divf %17, %18 : vector<32x1xf32>
      %20 = vector.broadcast %19 : vector<32x1xf32> to vector<32x128xf32>
      %21 = arith.subf %14, %20 : vector<32x128xf32>
      %22 = arith.mulf %21, %21 : vector<32x128xf32>
      %cst_18 = arith.constant dense<0.000000e+00> : vector<32xf32>
      %23 = vector.multi_reduction <add>, %22, %cst_18 [1] : vector<32x128xf32> to vector<32xf32>
      %24 = vector.shape_cast %23 : vector<32xf32> to vector<32x1xf32>
      %cst_19 = arith.constant 1.280000e+02 : f32
      %25 = vector.broadcast %cst_19 : f32 to vector<32x1xf32>
      %26 = arith.divf %24, %25 : vector<32x1xf32>
      %cst_20 = arith.constant 9.99999974E-6 : f32
      %27 = vector.broadcast %cst_20 : f32 to vector<32x1xf32>
      %28 = arith.addf %26, %27 : vector<32x1xf32>
      %29 = math.rsqrt %28 : vector<32x1xf32>
      %30 = vector.broadcast %29 : vector<32x1xf32> to vector<32x128xf32>
      %31 = arith.mulf %21, %30 : vector<32x128xf32>
      %c0_21 = arith.constant 0 : index
      %c0_22 = arith.constant 0 : index
      %32 = vector.load %arg5[%c0_21, %c0_22] : memref<1x128xf32, #tpu.memory_space<vmem>>, vector<1x128xf32>
      %33 = vector.broadcast %32 : vector<1x128xf32> to vector<32x128xf32>
      %34 = arith.mulf %31, %33 : vector<32x128xf32>
      %c0_23 = arith.constant 0 : index
      %c0_24 = arith.constant 0 : index
      %35 = vector.load %arg6[%c0_23, %c0_24] : memref<1x128xf32, #tpu.memory_space<vmem>>, vector<1x128xf32>
      %36 = vector.broadcast %35 : vector<1x128xf32> to vector<32x128xf32>
      %37 = arith.addf %34, %36 : vector<32x128xf32>
      %38 = arith.truncf %37 : vector<32x128xf32> to vector<32x128xbf16>
      %c0_25 = arith.constant 0 : index
      %c0_26 = arith.constant 0 : index
      %39 = vector.load %arg8[%c0_25, %c0_26] : memref<32x128xbf16, #tpu.memory_space<vmem>>, vector<32x128xbf16>
      tpu.vector_store %arg8[%c0_25, %c0_26], %38 {strides = array<i32>} : memref<32x128xbf16, #tpu.memory_space<vmem>>, vector<32x128xbf16>,
    } else {
    }
    return
  }
  func.func @transform_0(%arg0: i32, %arg1: i32) -> (i32, i32) {
    %c0_i32 = arith.constant 0 : i32
    return %arg0, %arg1 : i32, i32
  }
  func.func @transform_1(%arg0: i32, %arg1: i32) -> (i32, i32) {
    %c0_i32 = arith.constant 0 : i32
    %c0_i32_0 = arith.constant 0 : i32
    return %arg1, %c0_i32 : i32, i32
  }
  func.func @transform_2(%arg0: i32, %arg1: i32) -> (i32, i32) {
    %c0_i32 = arith.constant 0 : i32
    %c0_i32_0 = arith.constant 0 : i32
    return %arg0, %c0_i32 : i32, i32
  }
  func.func @transform_3(%arg0: i32, %arg1: i32) -> (i32, i32) {
    %c0_i32 = arith.constant 0 : i32
    %c0_i32_0 = arith.constant 0 : i32
    %c0_i32_1 = arith.constant 0 : i32
    return %c0_i32, %c0_i32_0 : i32, i32
  }
  func.func @transform_4(%arg0: i32, %arg1: i32) -> (i32, i32) {
    %c0_i32 = arith.constant 0 : i32
    %c0_i32_0 = arith.constant 0 : i32
    %c0_i32_1 = arith.constant 0 : i32
    return %c0_i32, %c0_i32_0 : i32, i32
  }
  func.func @transform_5(%arg0: i32, %arg1: i32) -> (i32, i32) {
    %c0_i32 = arith.constant 0 : i32
    %c0_i32_0 = arith.constant 0 : i32
    return %arg0, %c0_i32 : i32, i32
  }
  func.func @transform_6(%arg0: i32, %arg1: i32) -> (i32, i32) {
    %c0_i32 = arith.constant 0 : i32
    %c0_i32_0 = arith.constant 0 : i32
    return %arg0, %c0_i32 : i32, i32
  }
}

module attributes {stable_mosaic.version = 11 : i64} {
  func.func @_lm_head_kernel(%arg0: i32, %arg1: i32, %arg2: i32, %arg3: memref<32x128xbf16, #tpu.memory_space<vmem>>, %arg4: memref<128x512xbf16, #tpu.memory_space<vmem>>, %arg5: memref<32x512xf32, #tpu.memory_space<vmem>>, %arg6: memref<32x512xf32, #tpu.memory_space<vmem>>) attributes {dimension_semantics = [#tpu.dimension_semantics<parallel>, #tpu.dimension_semantics<parallel>, #tpu.dimension_semantics<arbitrary>], iteration_bounds = array<i64: 1, 1, 1>, scalar_prefetch = 0 : i64, scratch_operands = 1 : i64, tpu.core_type = #tpu.core_type<tc>, window_params = [{transform_indices = @transform_0, window_bounds = array<i64: 32, 128>}, {transform_indices = @transform_1, window_bounds = array<i64: 128, 512>}, {transform_indices = @transform_2, window_bounds = array<i64: 32, 512>}]} {
    %c0_i32 = arith.constant 0 : i32
    %0 = arith.cmpi eq, %arg2, %c0_i32 : i32
    %1 = arith.extui %0 : i1 to i32
    %c0_i32_0 = arith.constant 0 : i32
    %2 = arith.cmpi ne, %1, %c0_i32_0 : i32
    scf.if %2 {
      %cst_10 = arith.constant 0.000000e+00 : f32
      %12 = vector.broadcast %cst_10 : f32 to vector<32x512xf32>
      %c0_11 = arith.constant 0 : index
      %c0_12 = arith.constant 0 : index
      %13 = vector.load %arg6[%c0_11, %c0_12] : memref<32x512xf32, #tpu.memory_space<vmem>>, vector<32x512xf32>
      tpu.vector_store %arg6[%c0_11, %c0_12], %12 {strides = array<i32>} : memref<32x512xf32, #tpu.memory_space<vmem>>, vector<32x512xf32>,
    } else {
    }
    %c0 = arith.constant 0 : index
    %c0_1 = arith.constant 0 : index
    %3 = vector.load %arg6[%c0, %c0_1] : memref<32x512xf32, #tpu.memory_space<vmem>>, vector<32x512xf32>
    %c0_2 = arith.constant 0 : index
    %c0_3 = arith.constant 0 : index
    %4 = vector.load %arg3[%c0_2, %c0_3] : memref<32x128xbf16, #tpu.memory_space<vmem>>, vector<32x128xbf16>
    %c0_4 = arith.constant 0 : index
    %c0_5 = arith.constant 0 : index
    %5 = vector.load %arg4[%c0_4, %c0_5] : memref<128x512xbf16, #tpu.memory_space<vmem>>, vector<128x512xbf16>
    %cst = arith.constant dense<0.000000e+00> : vector<32x512xf32>
    %6 = tpu.matmul %4, %5, %cst {dimension_numbers = #tpu.dot_dimension_numbers<[1], [0], [0], [1], [0, 0, 1, 1], [], []>} : vector<32x128xbf16>, vector<128x512xbf16>, vector<32x512xf32> -> vector<32x512xf32>
    %7 = arith.addf %3, %6 : vector<32x512xf32>
    %c0_6 = arith.constant 0 : index
    %c0_7 = arith.constant 0 : index
    %8 = vector.load %arg6[%c0_6, %c0_7] : memref<32x512xf32, #tpu.memory_space<vmem>>, vector<32x512xf32>
    tpu.vector_store %arg6[%c0_6, %c0_7], %7 {strides = array<i32>} : memref<32x512xf32, #tpu.memory_space<vmem>>, vector<32x512xf32>,
    %c0_i32_8 = arith.constant 0 : i32
    %9 = arith.cmpi eq, %arg2, %c0_i32_8 : i32
    %10 = arith.extui %9 : i1 to i32
    %c0_i32_9 = arith.constant 0 : i32
    %11 = arith.cmpi ne, %10, %c0_i32_9 : i32
    scf.if %11 {
      %c0_10 = arith.constant 0 : index
      %c0_11 = arith.constant 0 : index
      %12 = vector.load %arg6[%c0_10, %c0_11] : memref<32x512xf32, #tpu.memory_space<vmem>>, vector<32x512xf32>
      %c0_12 = arith.constant 0 : index
      %c0_13 = arith.constant 0 : index
      %13 = vector.load %arg5[%c0_12, %c0_13] : memref<32x512xf32, #tpu.memory_space<vmem>>, vector<32x512xf32>
      tpu.vector_store %arg5[%c0_12, %c0_13], %12 {strides = array<i32>} : memref<32x512xf32, #tpu.memory_space<vmem>>, vector<32x512xf32>,
    } else {
    }
    return
  }
  func.func @transform_0(%arg0: i32, %arg1: i32, %arg2: i32) -> (i32, i32) {
    %c0_i32 = arith.constant 0 : i32
    return %arg0, %arg2 : i32, i32
  }
  func.func @transform_1(%arg0: i32, %arg1: i32, %arg2: i32) -> (i32, i32) {
    %c0_i32 = arith.constant 0 : i32
    return %arg2, %arg1 : i32, i32
  }
  func.func @transform_2(%arg0: i32, %arg1: i32, %arg2: i32) -> (i32, i32) {
    %c0_i32 = arith.constant 0 : i32
    return %arg0, %arg1 : i32, i32
  }
}

</mosaic_0001>

<llo_original>
// kernel: forward.16
$region0: #{forward.16}
  #allocation0 [shape = 'u32[]', space=smem, size = 0x4, offset = 0x4, fixed_abs, tag = 'smem constant byte address 0x4 - core index']
  #allocation1 [shape = 'u32[144,128]{1,0:T(1,128)}', space=vmem, size = 0x12000, scoped, tag = 'internal scratch']
  %s0 = inlined_call_operand.vmem [shape: bf16[2,16,128], index: 0, kind: input, shape index: {}]
  %s1 = inlined_call_operand.vmem [shape: bf16[2,16,128], index: 1, kind: input, shape index: {}]
  %s2 = inlined_call_operand.vmem [shape: bf16[2,16,128], index: 2, kind: input, shape index: {}]
  %s3 = inlined_call_operand.vmem [shape: f32[9,128], index: 3, kind: input, shape index: {}]
  %s4 = inlined_call_operand.vmem [shape: bf16[2,16,128], index: 4, kind: output, shape index: {}]
  %s5 = sld [smem:[#allocation0]]
  $region56: #{forward.16} parent=0
    _
  %s7 = ssub.s32 1, %s5
  %s8 = scalar_select 0, %s7, %s5
  loop: start=0, step=1, limit=4
  $region2: #{forward.16} parent=0 // loop_pre_header
    _
  $region3: #{forward.16} parent=0 // loop_header
    %s10 = sphi 0, %s14
    %p11 = scmp.ge.s32.totalorder %s10, 4
    %s17 = sphi 0, %s29
    %s18 = sphi 0, %s25
    %s19 = sphi 0, %s17
    %s20 = sphi 0, %s18
    %s21 = sphi 0, %s19
    %s22 = sphi 0, %s20
    %s34 = sphi 0, %s36
    %s37 = sphi 0, %s34
    %s38 = sphi 0, %s37
    %s54 = sphi 0, %s38
    %s62 = sphi 0, %s64
    %s65 = sphi 0, %s62
    %s66 = sphi 0, %s65
    %s82 = sphi 0, %s66
    %s90 = sphi 0, %s92
    %s93 = sphi 0, %s90
    %s94 = sphi 0, %s93
    %s110 = sphi 0, %s94
    %s116 = sphi 0, %s118
    %s119 = sphi 0, %s116
    %s120 = sphi 0, %s119
    %s136 = sphi 0, %s120
    %s144 = sphi 0, %s146
    %s147 = sphi 0, %s144
    %s148 = sphi 0, %s147
    %s164 = sphi 0, %s148
  $region4: #{forward.16} parent=0 // loop_header_branch
    %13 = sbr.rel (%p11) target = $region8
  $region5: #{forward.16} parent=0 // loop_body
    %s15 = ssub.s32 %s10, 1
    %s16 = ssub.s32 %s10, 2
    %s23 = sadd.s32 1, %s18
    %p24 = scmp.ge.s32.totalorder %s23, 1
    %s25 = scalar_select %p24, 0, %s23
    %s26 = sadd.s32 1, %s17
    %s27 = scalar_select %p24, %s26, %s17
    %p28 = scmp.ge.s32.totalorder %s27, 2
    %s29 = scalar_select %p28, 0, %s27
    %s30 = ssub.s32 %s17, %s29
    %s31 = ssub.s32 %s18, %s25
    %s32 = sor.u32 %s30, %s31
    %p33 = scmp.eq.s32.totalorder %s32, 0
    %s35 = sadd.s32 %s34, 1
    %s36 = scalar_select %p33, %s34, %s35
    %p39 = pneg %p33
    %p40 = scmp.eq.s32.totalorder %s10, 1
    %p41 = por %p39, %p40
    %p42 = scmp.ne.s32.totalorder %s34, %s37
    %p43 = scmp.eq.s32.totalorder %s10, 0
    %p44 = por %p42, %p43
    %p45 = scmp.ne.s32.totalorder %s34, %s37
    %p46 = scmp.eq.s32.totalorder %s15, 1
    %p47 = por %p45, %p46
    %p48 = scmp.ne.s32.totalorder %s37, %s38
    %p49 = scmp.eq.s32.totalorder %s15, 0
    %p50 = por %p48, %p49
    %p51 = scmp.ne.s32.totalorder %s37, %s38
    %p52 = scmp.eq.s32.totalorder %s16, 1
    %p53 = por %p51, %p52
    %p55 = scmp.ne.s32.totalorder %s38, %s54
    %p56 = scmp.eq.s32.totalorder %s16, 0
    %p57 = por %p55, %p56
    %s58 = ssub.s32 %s17, %s29
    %s59 = ssub.s32 %s18, %s25
    %s60 = sor.u32 %s58, %s59
    %p61 = scmp.eq.s32.totalorder %s60, 0
    %s63 = sadd.s32 %s62, 1
    %s64 = scalar_select %p61, %s62, %s63
    %p67 = pneg %p61
    %p68 = scmp.eq.s32.totalorder %s10, 1
    %p69 = por %p67, %p68
    %p70 = scmp.ne.s32.totalorder %s62, %s65
    %p71 = scmp.eq.s32.totalorder %s10, 0
    %p72 = por %p70, %p71
    %p73 = scmp.ne.s32.totalorder %s62, %s65
    %p74 = scmp.eq.s32.totalorder %s15, 1
    %p75 = por %p73, %p74
    %p76 = scmp.ne.s32.totalorder %s65, %s66
    %p77 = scmp.eq.s32.totalorder %s15, 0
    %p78 = por %p76, %p77
    %p79 = scmp.ne.s32.totalorder %s65, %s66
    %p80 = scmp.eq.s32.totalorder %s16, 1
    %p81 = por %p79, %p80
    %p83 = scmp.ne.s32.totalorder %s66, %s82
    %p84 = scmp.eq.s32.totalorder %s16, 0
    %p85 = por %p83, %p84
    %s86 = ssub.s32 %s17, %s29
    %s87 = ssub.s32 %s18, %s25
    %s88 = sor.u32 %s86, %s87
    %p89 = scmp.eq.s32.totalorder %s88, 0
    %s91 = sadd.s32 %s90, 1
    %s92 = scalar_select %p89, %s90, %s91
    %p95 = pneg %p89
    %p96 = scmp.eq.s32.totalorder %s10, 1
    %p97 = por %p95, %p96
    %p98 = scmp.ne.s32.totalorder %s90, %s93
    %p99 = scmp.eq.s32.totalorder %s10, 0
    %p100 = por %p98, %p99
    %p101 = scmp.ne.s32.totalorder %s90, %s93
    %p102 = scmp.eq.s32.totalorder %s15, 1
    %p103 = por %p101, %p102
    %p104 = scmp.ne.s32.totalorder %s93, %s94
    %p105 = scmp.eq.s32.totalorder %s15, 0
    %p106 = por %p104, %p105
    %p107 = scmp.ne.s32.totalorder %s93, %s94
    %p108 = scmp.eq.s32.totalorder %s16, 1
    %p109 = por %p107, %p108
    %p111 = scmp.ne.s32.totalorder %s94, %s110
    %p112 = scmp.eq.s32.totalorder %s16, 0
    %p113 = por %p111, %p112
    %s114 = ssub.s32 %s18, %s25
    %p115 = scmp.eq.s32.totalorder %s114, 0
    %s117 = sadd.s32 %s116, 1
    %s118 = scalar_select %p115, %s116, %s117
    %p121 = pneg %p115
    %p122 = scmp.eq.s32.totalorder %s10, 1
    %p123 = por %p121, %p122
    %p124 = scmp.ne.s32.totalorder %s116, %s119
    %p125 = scmp.eq.s32.totalorder %s10, 0
    %p126 = por %p124, %p125
    %p127 = scmp.ne.s32.totalorder %s116, %s119
    %p128 = scmp.eq.s32.totalorder %s15, 1
    %p129 = por %p127, %p128
    %p130 = scmp.ne.s32.totalorder %s119, %s120
    %p131 = scmp.eq.s32.totalorder %s15, 0
    %p132 = por %p130, %p131
    %p133 = scmp.ne.s32.totalorder %s119, %s120
    %p134 = scmp.eq.s32.totalorder %s16, 1
    %p135 = por %p133, %p134
    %p137 = scmp.ne.s32.totalorder %s120, %s136
    %p138 = scmp.eq.s32.totalorder %s16, 0
    %p139 = por %p137, %p138
    %s140 = ssub.s32 %s17, %s29
    %s141 = ssub.s32 %s18, %s25
    %s142 = sor.u32 %s140, %s141
    %p143 = scmp.eq.s32.totalorder %s142, 0
    %s145 = sadd.s32 %s144, 1
    %s146 = scalar_select %p143, %s144, %s145
    %p149 = pneg %p143
    %p150 = scmp.eq.s32.totalorder %s10, 1
    %p151 = por %p149, %p150
    %p152 = scmp.ne.s32.totalorder %s144, %s147
    %p153 = scmp.eq.s32.totalorder %s10, 0
    %p154 = por %p152, %p153
    %p155 = scmp.ne.s32.totalorder %s144, %s147
    %p156 = scmp.eq.s32.totalorder %s15, 1
    %p157 = por %p155, %p156
    %p158 = scmp.ne.s32.totalorder %s147, %s148
    %p159 = scmp.eq.s32.totalorder %s15, 0
    %p160 = por %p158, %p159
    %p161 = scmp.ne.s32.totalorder %s147, %s148
    %p162 = scmp.eq.s32.totalorder %s16, 1
    %p163 = por %p161, %p162
    %p165 = scmp.ne.s32.totalorder %s148, %s164
    %p166 = scmp.eq.s32.totalorder %s16, 0
    %p167 = por %p165, %p166
    %p168 = scmp.le.s32.totalorder 1, %s10
    %p169 = scmp.lt.s32.totalorder %s10, 3
    %p170 = pnand %p168, %p169
    %p171 = pneg %p170
    // Predicated region
    $region9: #{forward.16} parent=5 // pred_check
      _
    $region10: #{forward.16} parent=5 // pred_check_branch
      %173 = sbr.rel (%p170) target = $region12
    $region11: #{forward.16} parent=5 // pred_region
      %s174 = ssub.s32 %s10, 1
      // Predicated region
      $region13: #{forward.16} parent=11 // pred_check
        %p175 = pneg %p132
      $region14: #{forward.16} parent=11 // pred_check_branch
        %177 = sbr.rel (%p175) target = $region16
      $region15: #{forward.16} parent=11 // pred_region
        %p178 = scmp.lt.s32.totalorder %s20, 0
        %s179 = scalar_select %p178, %s20, 0
        %s180 = smul.addr %s179, 8
        %s181 = scalar_lea.vmem %s3, %s180
      $region16: #{forward.16} parent=11 // pred_fallthru
        _
    $region12: #{forward.16} parent=5 // pred_fallthru
      _
    %p182 = scmp.lt.s32.totalorder %s10, 2
    // Predicated region
    $region17: #{forward.16} parent=5 // pred_check
      %p183 = pneg %p182
    $region18: #{forward.16} parent=5 // pred_check_branch
      %185 = sbr.rel (%p183) target = $region20
    $region19: #{forward.16} parent=5 // pred_region
      // Predicated region
      $region21: #{forward.16} parent=19 // pred_check
        %p186 = pneg %p44
      $region22: #{forward.16} parent=19 // pred_check_branch
        %188 = sbr.rel (%p186) target = $region24
      $region23: #{forward.16} parent=19 // pred_region
        %p189 = scmp.lt.s32.totalorder %s17, 1
        %s190 = scalar_select %p189, %s17, 1
        %p191 = scmp.lt.s32.totalorder %s18, 0
        %s192 = scalar_select %p191, %s18, 0
        %s193 = smul.addr %s190, 2
        %s194 = sadd.s32 %s192, %s193
        %s195 = smul.addr %s194, 4
        %s196 = scalar_lea.vmem %s0, %s195
      $region24: #{forward.16} parent=19 // pred_fallthru
        _
      // Predicated region
      $region25: #{forward.16} parent=19 // pred_check
        %p197 = pneg %p72
      $region26: #{forward.16} parent=19 // pred_check_branch
        %199 = sbr.rel (%p197) target = $region28
      $region27: #{forward.16} parent=19 // pred_region
        %p200 = scmp.lt.s32.totalorder %s17, 1
        %s201 = scalar_select %p200, %s17, 1
        %p202 = scmp.lt.s32.totalorder %s18, 0
        %s203 = scalar_select %p202, %s18, 0
        %s204 = smul.addr %s201, 2
        %s205 = sadd.s32 %s203, %s204
        %s206 = smul.addr %s205, 4
        %s207 = scalar_lea.vmem %s1, %s206
      $region28: #{forward.16} parent=19 // pred_fallthru
        _
      // Predicated region
      $region29: #{forward.16} parent=19 // pred_check
        %p208 = pneg %p100
      $region30: #{forward.16} parent=19 // pred_check_branch
        %210 = sbr.rel (%p208) target = $region32
      $region31: #{forward.16} parent=19 // pred_region
        %p211 = scmp.lt.s32.totalorder %s17, 1
        %s212 = scalar_select %p211, %s17, 1
        %p213 = scmp.lt.s32.totalorder %s18, 0
        %s214 = scalar_select %p213, %s18, 0
        %s215 = smul.addr %s212, 2
        %s216 = sadd.s32 %s214, %s215
        %s217 = smul.addr %s216, 4
        %s218 = scalar_lea.vmem %s2, %s217
      $region32: #{forward.16} parent=19 // pred_fallthru
        _
    $region20: #{forward.16} parent=5 // pred_fallthru
      _
    %p219 = scmp.le.s32.totalorder 1, %s10
    %p220 = scmp.lt.s32.totalorder %s10, 3
    %p221 = pnand %p219, %p220
    %p222 = pneg %p221
    // Predicated region
    $region33: #{forward.16} parent=5 // pred_check
      _
    $region34: #{forward.16} parent=5 // pred_check_branch
      %224 = sbr.rel (%p221) target = $region36
    $region35: #{forward.16} parent=5 // pred_region
      %s225 = ssub.s32 %s10, 1
      %p226 = scmp.lt.s32.totalorder %s19, 1
      %s227 = scalar_select %p226, %s19, 1
      %p228 = scmp.lt.s32.totalorder %s20, 0
      %s229 = scalar_select %p228, %s20, 0
      %s230 = smul.addr %s227, 2
      %s231 = sadd.s32 %s229, %s230
      %s232 = smul.addr %s231, 4
      %s233 = scalar_lea.vmem %s0, %s232
      %p234 = pneg %p50
      %p235 = pneg %p47
      %p236 = scmp.lt.s32.totalorder %s19, 1
      %s237 = scalar_select %p236, %s19, 1
      %p238 = scmp.lt.s32.totalorder %s20, 0
      %s239 = scalar_select %p238, %s20, 0
      %s240 = smul.addr %s237, 2
      %s241 = sadd.s32 %s239, %s240
      %s242 = smul.addr %s241, 4
      %s243 = scalar_lea.vmem %s1, %s242
      %p244 = pneg %p78
      %p245 = pneg %p75
      %p246 = scmp.lt.s32.totalorder %s19, 1
      %s247 = scalar_select %p246, %s19, 1
      %p248 = scmp.lt.s32.totalorder %s20, 0
      %s249 = scalar_select %p248, %s20, 0
      %s250 = smul.addr %s247, 2
      %s251 = sadd.s32 %s249, %s250
      %s252 = smul.addr %s251, 4
      %s253 = scalar_lea.vmem %s2, %s252
      %p254 = pneg %p106
      %p255 = pneg %p103
      %p256 = scmp.lt.s32.totalorder %s20, 0
      %s257 = scalar_select %p256, %s20, 0
      %s258 = smul.addr %s257, 8
      %s259 = scalar_lea.vmem %s3, %s258
      %p260 = pneg %p132
      %p261 = pneg %p129
      %p262 = pneg %p160
      %p263 = pneg %p157
      %p264 = scmp.lt.s32.totalorder %s19, 1
      %s265 = scalar_select %p264, %s19, 1
      %p266 = scmp.lt.s32.totalorder %s20, 0
      %s267 = scalar_select %p266, %s20, 0
      %s268 = smul.addr %s265, 2
      %s269 = sadd.s32 %s267, %s268
      %s270 = smul.addr %s269, 4
      %s271 = scalar_lea.vmem %s4, %s270
      %p272 = scmp.lt.s32.totalorder %s19, 1
      %s273 = scalar_select %p272, %s19, 1
      %p274 = scmp.lt.s32.totalorder %s20, 0
      %s275 = scalar_select %p274, %s20, 0
      %s276 = smul.addr %s273, 2
      %s277 = sadd.s32 %s275, %s276
      %s278 = smul.addr %s277, 4
      %s279 = scalar_lea.vmem %s0, %s278
      %p280 = scmp.lt.s32.totalorder %s19, 1
      %s281 = scalar_select %p280, %s19, 1
      %p282 = scmp.lt.s32.totalorder %s20, 0
      %s283 = scalar_select %p282, %s20, 0
      %s284 = smul.addr %s281, 2
      %s285 = sadd.s32 %s283, %s284
      %s286 = smul.addr %s285, 4
      %s287 = scalar_lea.vmem %s1, %s286
      %p288 = scmp.lt.s32.totalorder %s19, 1
      %s289 = scalar_select %p288, %s19, 1
      %p290 = scmp.lt.s32.totalorder %s20, 0
      %s291 = scalar_select %p290, %s20, 0
      %s292 = smul.addr %s289, 2
      %s293 = sadd.s32 %s291, %s292
      %s294 = smul.addr %s293, 4
      %s295 = scalar_lea.vmem %s2, %s294
      %p296 = scmp.lt.s32.totalorder %s20, 0
      %s297 = scalar_select %p296, %s20, 0
      %s298 = smul.addr %s297, 8
      %s299 = scalar_lea.vmem %s3, %s298
      %p300 = scmp.lt.s32.totalorder %s19, 1
      %s301 = scalar_select %p300, %s19, 1
      %p302 = scmp.lt.s32.totalorder %s20, 0
      %s303 = scalar_select %p302, %s20, 0
      %s304 = smul.addr %s301, 2
      %s305 = sadd.s32 %s303, %s304
      %s306 = smul.addr %s305, 4
      %s307 = scalar_lea.vmem %s4, %s306
      %v308 = vld [vmem:[%s299] sm:$0xff]
      %v309 = vld [vmem:[%s299 + $0x8] sm:$0x1]
      %v310 = vlaneseq
      %v311 = vshrl.u32 %v310, 7
      %vm312 = vcmp.ge.s32.totalorder %v311, 1
      %v313 = vlaneseq
      %v314 = vshrl.u32 %v313, 7
      %v315 = vsub.s32 1, %v314
      %v316 = vrot.slane %v308, %v315
      %v317 = vsel %vm312, %v316, 0.0
      %vm318 = vcmp.ge.s32.totalorder %v311, 2
      %v319 = vlaneseq
      %v320 = vshrl.u32 %v319, 7
      %v321 = vsub.s32 2, %v320
      %v322 = vrot.slane %v308, %v321
      %v323 = vsel %vm318, %v322, 0.0
      %vm324 = vcmp.ge.s32.totalorder %v311, 3
      %v325 = vlaneseq
      %v326 = vshrl.u32 %v325, 7
      %v327 = vsub.s32 3, %v326
      %v328 = vrot.slane %v308, %v327
      %v329 = vsel %vm324, %v328, 0.0
      %vm330 = vcmp.ge.s32.totalorder %v311, 4
      %v331 = vlaneseq
      %v332 = vshrl.u32 %v331, 7
      %v333 = vsub.s32 4, %v332
      %v334 = vrot.slane %v308, %v333
      %v335 = vsel %vm330, %v334, 0.0
      %vm336 = vcmp.ge.s32.totalorder %v311, 5
      %v337 = vlaneseq
      %v338 = vshrl.u32 %v337, 7
      %v339 = vsub.s32 5, %v338
      %v340 = vrot.slane %v308, %v339
      %v341 = vsel %vm336, %v340, 0.0
      %vm342 = vcmp.ge.s32.totalorder %v311, 6
      %v343 = vlaneseq
      %v344 = vshrl.u32 %v343, 7
      %v345 = vsub.s32 6, %v344
      %v346 = vrot.slane %v308, %v345
      %v347 = vsel %vm342, %v346, 0.0
      %vm348 = vcmp.ge.s32.totalorder %v311, 7
      %v349 = vlaneseq
      %v350 = vshrl.u32 %v349, 7
      %v351 = vsub.s32 7, %v350
      %v352 = vrot.slane %v308, %v351
      %v353 = vsel %vm348, %v352, 0.0
      loop: start=0, step=1, limit=2
      $region37: #{forward.16} parent=35 // loop_pre_header
        _
      $region38: #{forward.16} parent=35 // loop_header
        %s355 = sphi 0, %s359
        %p356 = scmp.ge.s32.totalorder %s355, 2
        %v360 = vphi 0.0, %v433
        %v361 = vphi 0.0, %v446
      $region39: #{forward.16} parent=35 // loop_header_branch
        %358 = sbr.rel (%p356) target = $region43
      $region40: #{forward.16} parent=35 // loop_body
        %s362 = smul.u32 %s355, 8
        %s363 = sshra.s32 %s362, 3
        %s364 = sand.u32 %s362, 7
        %s365 = smul.addr %s363, 4
        %s366 = scalar_lea.vmem %s279, %s365
        %v367 = vld [vmem:[%s366] sm:$0xf]
        %v368 = vunpack.c.l.bf16 %v367
        %s369 = smul.addr %s363, 4
        %s370 = scalar_lea.vmem %s287, %s369
        %v371 = vld [vmem:[%s370] sm:$0xf]
        %v372 = vunpack.c.l.bf16 %v371
        %s373 = smul.addr %s363, 4
        %s374 = scalar_lea.vmem %s295, %s373
        %v375 = vld [vmem:[%s374] sm:$0xf]
        %v376 = vunpack.c.l.bf16 %v375
        %v377 = vmul.f32 %v368, %v372
        %v378 = vrot.slane %v377, 7
        %v379 = vmul.f32 %v317, %v378
        %v380 = vadd.f32 %v377, %v379
        %v381 = vrot.slane %v368, 7
        %v382 = vmul.f32 %v317, %v381
        %v383 = vadd.f32 %v368, %v382
        %v384 = vrot.slane %v377, 6
        %v385 = vmul.f32 %v323, %v384
        %v386 = vadd.f32 %v380, %v385
        %v387 = vrot.slane %v368, 6
        %v388 = vmul.f32 %v323, %v387
        %v389 = vadd.f32 %v383, %v388
        %v390 = vrot.slane %v377, 5
        %v391 = vmul.f32 %v329, %v390
        %v392 = vadd.f32 %v386, %v391
        %v393 = vrot.slane %v368, 5
        %v394 = vmul.f32 %v329, %v393
        %v395 = vadd.f32 %v389, %v394
        %v396 = vrot.slane %v377, 4
        %v397 = vmul.f32 %v335, %v396
        %v398 = vadd.f32 %v392, %v397
        %v399 = vrot.slane %v368, 4
        %v400 = vmul.f32 %v335, %v399
        %v401 = vadd.f32 %v395, %v400
        %v402 = vrot.slane %v377, 3
        %v403 = vmul.f32 %v341, %v402
        %v404 = vadd.f32 %v398, %v403
        %v405 = vrot.slane %v368, 3
        %v406 = vmul.f32 %v341, %v405
        %v407 = vadd.f32 %v401, %v406
        %v408 = vrot.slane %v377, 2
        %v409 = vmul.f32 %v347, %v408
        %v410 = vadd.f32 %v404, %v409
        %v411 = vrot.slane %v368, 2
        %v412 = vmul.f32 %v347, %v411
        %v413 = vadd.f32 %v407, %v412
        %v414 = vrot.slane %v377, 1
        %v415 = vmul.f32 %v353, %v414
        %v416 = vadd.f32 %v410, %v415
        %v417 = vrot.slane %v368, 1
        %v418 = vmul.f32 %v353, %v417
        %v419 = vadd.f32 %v413, %v418
        %v420 = vlaneseq
        %v421 = vshrl.u32 %v420, 7
        %v422 = vsub.s32 7, %v421
        %v423 = vrot.slane %v360, %v422
        %v424 = vmul.f32 %v308, %v423
        %v425 = vmul.f32 %v309, %v423
        %vm428 = vcmask 1046528
        %v429 = vrot.slane %v424, 1
        %v430 = vrot.slane %v425, 1
        %v431 = vsel %vm428, %v429, %v430
        %v433 = vadd.f32 %v416, %v431
        %v434 = vlaneseq
        %v435 = vshrl.u32 %v434, 7
        %v436 = vsub.s32 7, %v435
        %v437 = vrot.slane %v361, %v436
        %v438 = vmul.f32 %v308, %v437
        %v439 = vmul.f32 %v309, %v437
        %v442 = vrot.slane %v438, 1
        %v443 = vrot.slane %v439, 1
        %v444 = vsel %vm428, %v442, %v443
        %v446 = vadd.f32 %v419, %v444
        %v447 = vrcp.pop %v446
        %v448 = vmul.f32 %v433, %v447
        %v449 = vmul.f32 %v376, %v448
        %v450 = vpack.c.bf16 %v449, %v449
        %s451 = smul.addr %s363, 4
        %s452 = scalar_lea.vmem %s307, %s451
        %453 = vst [vmem:[%s452] sm:$0xf] %v450
      $region41: #{forward.16} parent=35 // loop_footer
        %s359 = sadd.s32 1, %s355
      $region42: #{forward.16} parent=35 // loop_footer_branch
        %354 = sbr.rel target = $region38
      $region43: #{forward.16} parent=35 // loop_exit
        _
      %p454 = scmp.lt.s32.totalorder %s19, 1
      %s455 = scalar_select %p454, %s19, 1
      %p456 = scmp.lt.s32.totalorder %s20, 0
      %s457 = scalar_select %p456, %s20, 0
      %s458 = smul.addr %s455, 2
      %s459 = sadd.s32 %s457, %s458
      %s460 = smul.addr %s459, 4
      %s461 = scalar_lea.vmem %s4, %s460
      // Predicated region
      $region44: #{forward.16} parent=35 // pred_check
        %p462 = pneg %p157
      $region45: #{forward.16} parent=35 // pred_check_branch
        %464 = sbr.rel (%p462) target = $region47
      $region46: #{forward.16} parent=35 // pred_region
        _
      $region47: #{forward.16} parent=35 // pred_fallthru
        _
    $region36: #{forward.16} parent=5 // pred_fallthru
      _
    %p465 = scmp.le.s32.totalorder 2, %s10
    // Predicated region
    $region48: #{forward.16} parent=5 // pred_check
      %p466 = pneg %p465
    $region49: #{forward.16} parent=5 // pred_check_branch
      %468 = sbr.rel (%p466) target = $region51
    $region50: #{forward.16} parent=5 // pred_region
      %s469 = ssub.s32 %s10, 2
      // Predicated region
      $region52: #{forward.16} parent=50 // pred_check
        %p470 = pneg %p163
      $region53: #{forward.16} parent=50 // pred_check_branch
        %472 = sbr.rel (%p470) target = $region55
      $region54: #{forward.16} parent=50 // pred_region
        %p473 = scmp.lt.s32.totalorder %s21, 1
        %s474 = scalar_select %p473, %s21, 1
        %p475 = scmp.lt.s32.totalorder %s22, 0
        %s476 = scalar_select %p475, %s22, 0
        %s477 = smul.addr %s474, 2
        %s478 = sadd.s32 %s476, %s477
        %s479 = smul.addr %s478, 4
        %s480 = scalar_lea.vmem %s4, %s479
      $region55: #{forward.16} parent=50 // pred_fallthru
        _
    $region51: #{forward.16} parent=5 // pred_fallthru
      _
  $region6: #{forward.16} parent=0 // loop_footer
    %s14 = sadd.s32 1, %s10
  $region7: #{forward.16} parent=0 // loop_footer_branch
    %9 = sbr.rel target = $region3
  $region8: #{forward.16} parent=0 // loop_exit
    _

// kernel: forward.14
$region0: #{forward.14}
  #allocation0 [shape = 'u32[]', space=smem, size = 0x4, offset = 0x4, fixed_abs, tag = 'smem constant byte address 0x4 - core index']
  #allocation1 [shape = 'u32[144,128]{1,0:T(1,128)}', space=vmem, size = 0x12000, scoped, tag = 'internal scratch']
  %s0 = inlined_call_operand.vmem [shape: f32[32,128], index: 0, kind: input, shape index: {}]
  %s1 = inlined_call_operand.vmem [shape: f32[1,128], index: 1, kind: input, shape index: {}]
  %s2 = inlined_call_operand.vmem [shape: f32[1,128], index: 2, kind: input, shape index: {}]
  %s3 = inlined_call_operand.vmem [shape: bf16[32,128], index: 3, kind: output, shape index: {}]
  %s4 = sld [smem:[#allocation0]]
  $region22: #{forward.14} parent=0
    _
  %s6 = ssub.s32 1, %s4
  %s7 = scalar_select 0, %s6, %s4
  // Predicated region
  $region2: #{forward.14} parent=0 // pred_check
    _
  $region3: #{forward.14} parent=0 // pred_check_branch
    %9 = sbr.rel (0) target = $region5
  $region4: #{forward.14} parent=0 // pred_region
    _
  $region5: #{forward.14} parent=0 // pred_fallthru
    _
  // Predicated region
  $region6: #{forward.14} parent=0 // pred_check
    _
  $region7: #{forward.14} parent=0 // pred_check_branch
    %11 = sbr.rel (0) target = $region9
  $region8: #{forward.14} parent=0 // pred_region
    _
  $region9: #{forward.14} parent=0 // pred_fallthru
    _
  // Predicated region
  $region10: #{forward.14} parent=0 // pred_check
    _
  $region11: #{forward.14} parent=0 // pred_check_branch
    %13 = sbr.rel (0) target = $region13
  $region12: #{forward.14} parent=0 // pred_region
    _
  $region13: #{forward.14} parent=0 // pred_fallthru
    _
  %v14 = vld [vmem:[%s0] sm:$0xff]
  %v15 = vld [vmem:[%s0 + $0x8] sm:$0xff]
  %v16 = vld [vmem:[%s0 + $0x10] sm:$0xff]
  %v17 = vld [vmem:[%s0 + $0x18] sm:$0xff]
  %18 = vadd.xlane.f32.xlu0 %v14
  %v19 = vpop.xlane.xlu0 %18
  %20 = vadd.xlane.f32.xlu0 %v15
  %v21 = vpop.xlane.xlu0 %20
  %22 = vadd.xlane.f32.xlu0 %v16
  %v23 = vpop.xlane.xlu0 %22
  %24 = vadd.xlane.f32.xlu0 %v17
  %v25 = vpop.xlane.xlu0 %24
  %v26 = vrcp.pop 128.0
  %v27 = vmul.f32 %v19, %v26
  %v28 = vmul.f32 %v21, %v26
  %v29 = vmul.f32 %v23, %v26
  %v30 = vmul.f32 %v25, %v26
  %v31 = vsub.f32 %v14, %v27
  %v32 = vsub.f32 %v15, %v28
  %v33 = vsub.f32 %v16, %v29
  %v34 = vsub.f32 %v17, %v30
  %v35 = vmul.f32 %v31, %v31
  %v36 = vmul.f32 %v32, %v32
  %v37 = vmul.f32 %v33, %v33
  %v38 = vmul.f32 %v34, %v34
  %39 = vadd.xlane.f32.xlu0 %v35
  %v40 = vpop.xlane.xlu0 %39
  %41 = vadd.xlane.f32.xlu0 %v36
  %v42 = vpop.xlane.xlu0 %41
  %43 = vadd.xlane.f32.xlu0 %v37
  %v44 = vpop.xlane.xlu0 %43
  %45 = vadd.xlane.f32.xlu0 %v38
  %v46 = vpop.xlane.xlu0 %45
  %v47 = vmul.f32 %v40, %v26
  %v48 = vmul.f32 %v42, %v26
  %v49 = vmul.f32 %v44, %v26
  %v50 = vmul.f32 %v46, %v26
  %v51 = vadd.f32 %v47, 1e-05
  %v52 = vadd.f32 %v48, 1e-05
  %v53 = vadd.f32 %v49, 1e-05
  %v54 = vadd.f32 %v50, 1e-05
  %v55 = vrsqrt.pop %v51
  %v56 = vrsqrt.pop %v52
  %v57 = vrsqrt.pop %v53
  %v58 = vrsqrt.pop %v54
  %v59 = vmul.f32 %v31, %v55
  %v60 = vmul.f32 %v32, %v56
  %v61 = vmul.f32 %v33, %v57
  %v62 = vmul.f32 %v34, %v58
  %v63 = vld [vmem:[%s1] sm:$0x1]
  %v65 = vlaneseq
  %v66 = vshrl.u32 %v65, 7
  %v67 = vsub.s32 0, %v66
  %v68 = vrot.slane %v63, %v67
  %v70 = vmul.f32 %v59, %v68
  %v71 = vmul.f32 %v60, %v68
  %v72 = vmul.f32 %v61, %v68
  %v73 = vmul.f32 %v62, %v68
  %v74 = vld [vmem:[%s2] sm:$0x1]
  %v76 = vlaneseq
  %v77 = vshrl.u32 %v76, 7
  %v78 = vsub.s32 0, %v77
  %v79 = vrot.slane %v74, %v78
  %v81 = vadd.f32 %v70, %v79
  %v82 = vadd.f32 %v71, %v79
  %v83 = vadd.f32 %v72, %v79
  %v84 = vadd.f32 %v73, %v79
  %v85 = vpack.c.bf16 %v82, %v81
  %v86 = vpack.c.bf16 %v84, %v83
  %v89 = vunpack.c.l.b16 %v85
  %v90 = vunpack.c.h.b16 %v85
  %v91 = vunpack.c.l.b16 %v86
  %v92 = vunpack.c.h.b16 %v86
  %v93 = vpack.c.b16 %v89, %v89
  %v94 = vpack.c.b16 %v90, %v90
  %v95 = vpack.c.b16 %v91, %v91
  %v96 = vpack.c.b16 %v92, %v92
  %101 = vst [vmem:[%s3] sm:$0xf] %v93
  %102 = vst [vmem:[%s3 + $0x4] sm:$0xf] %v94
  %103 = vst [vmem:[%s3 + $0x8] sm:$0xf] %v95
  %104 = vst [vmem:[%s3 + $0xc] sm:$0xf] %v96
  // Predicated region
  $region14: #{forward.14} parent=0 // pred_check
    _
  $region15: #{forward.14} parent=0 // pred_check_branch
    %106 = sbr.rel (0) target = $region17
  $region16: #{forward.14} parent=0 // pred_region
    _
  $region17: #{forward.14} parent=0 // pred_fallthru
    _
  // Predicated region
  $region18: #{forward.14} parent=0 // pred_check
    _
  $region19: #{forward.14} parent=0 // pred_check_branch
    %108 = sbr.rel (0) target = $region21
  $region20: #{forward.14} parent=0 // pred_region
    _
  $region21: #{forward.14} parent=0 // pred_fallthru
    _

// kernel: forward.13
$region0: #{forward.13}
  #allocation0 [shape = 'u32[]', space=smem, size = 0x4, offset = 0x4, fixed_abs, tag = 'smem constant byte address 0x4 - core index']
  #allocation1 [shape = 'u32[144,128]{1,0:T(1,128)}', space=vmem, size = 0x12000, scoped, tag = 'internal scratch']
  %s0 = inlined_call_operand.vmem [shape: f32[32,128], index: 0, kind: input, shape index: {}]
  %s1 = inlined_call_operand.vmem [shape: f32[1,128], index: 1, kind: input, shape index: {}]
  %s2 = inlined_call_operand.vmem [shape: f32[1,128], index: 2, kind: input, shape index: {}]
  %s3 = inlined_call_operand.vmem [shape: f32[32,128], index: 3, kind: output, shape index: {}]
  %s4 = sld [smem:[#allocation0]]
  $region22: #{forward.13} parent=0
    _
  %s6 = ssub.s32 1, %s4
  %s7 = scalar_select 0, %s6, %s4
  // Predicated region
  $region2: #{forward.13} parent=0 // pred_check
    _
  $region3: #{forward.13} parent=0 // pred_check_branch
    %9 = sbr.rel (0) target = $region5
  $region4: #{forward.13} parent=0 // pred_region
    _
  $region5: #{forward.13} parent=0 // pred_fallthru
    _
  // Predicated region
  $region6: #{forward.13} parent=0 // pred_check
    _
  $region7: #{forward.13} parent=0 // pred_check_branch
    %11 = sbr.rel (0) target = $region9
  $region8: #{forward.13} parent=0 // pred_region
    _
  $region9: #{forward.13} parent=0 // pred_fallthru
    _
  // Predicated region
  $region10: #{forward.13} parent=0 // pred_check
    _
  $region11: #{forward.13} parent=0 // pred_check_branch
    %13 = sbr.rel (0) target = $region13
  $region12: #{forward.13} parent=0 // pred_region
    _
  $region13: #{forward.13} parent=0 // pred_fallthru
    _
  %v14 = vld [vmem:[%s0] sm:$0xff]
  %v15 = vld [vmem:[%s0 + $0x8] sm:$0xff]
  %v16 = vld [vmem:[%s0 + $0x10] sm:$0xff]
  %v17 = vld [vmem:[%s0 + $0x18] sm:$0xff]
  %18 = vadd.xlane.f32.xlu0 %v14
  %v19 = vpop.xlane.xlu0 %18
  %20 = vadd.xlane.f32.xlu0 %v15
  %v21 = vpop.xlane.xlu0 %20
  %22 = vadd.xlane.f32.xlu0 %v16
  %v23 = vpop.xlane.xlu0 %22
  %24 = vadd.xlane.f32.xlu0 %v17
  %v25 = vpop.xlane.xlu0 %24
  %v26 = vrcp.pop 128.0
  %v27 = vmul.f32 %v19, %v26
  %v28 = vmul.f32 %v21, %v26
  %v29 = vmul.f32 %v23, %v26
  %v30 = vmul.f32 %v25, %v26
  %v31 = vsub.f32 %v14, %v27
  %v32 = vsub.f32 %v15, %v28
  %v33 = vsub.f32 %v16, %v29
  %v34 = vsub.f32 %v17, %v30
  %v35 = vmul.f32 %v31, %v31
  %v36 = vmul.f32 %v32, %v32
  %v37 = vmul.f32 %v33, %v33
  %v38 = vmul.f32 %v34, %v34
  %39 = vadd.xlane.f32.xlu0 %v35
  %v40 = vpop.xlane.xlu0 %39
  %41 = vadd.xlane.f32.xlu0 %v36
  %v42 = vpop.xlane.xlu0 %41
  %43 = vadd.xlane.f32.xlu0 %v37
  %v44 = vpop.xlane.xlu0 %43
  %45 = vadd.xlane.f32.xlu0 %v38
  %v46 = vpop.xlane.xlu0 %45
  %v47 = vmul.f32 %v40, %v26
  %v48 = vmul.f32 %v42, %v26
  %v49 = vmul.f32 %v44, %v26
  %v50 = vmul.f32 %v46, %v26
  %v51 = vadd.f32 %v47, 1e-05
  %v52 = vadd.f32 %v48, 1e-05
  %v53 = vadd.f32 %v49, 1e-05
  %v54 = vadd.f32 %v50, 1e-05
  %v55 = vrsqrt.pop %v51
  %v56 = vrsqrt.pop %v52
  %v57 = vrsqrt.pop %v53
  %v58 = vrsqrt.pop %v54
  %v59 = vmul.f32 %v31, %v55
  %v60 = vmul.f32 %v32, %v56
  %v61 = vmul.f32 %v33, %v57
  %v62 = vmul.f32 %v34, %v58
  %v63 = vld [vmem:[%s1] sm:$0x1]
  %v65 = vlaneseq
  %v66 = vshrl.u32 %v65, 7
  %v67 = vsub.s32 0, %v66
  %v68 = vrot.slane %v63, %v67
  %v70 = vmul.f32 %v59, %v68
  %v71 = vmul.f32 %v60, %v68
  %v72 = vmul.f32 %v61, %v68
  %v73 = vmul.f32 %v62, %v68
  %v74 = vld [vmem:[%s2] sm:$0x1]
  %v76 = vlaneseq
  %v77 = vshrl.u32 %v76, 7
  %v78 = vsub.s32 0, %v77
  %v79 = vrot.slane %v74, %v78
  %v81 = vadd.f32 %v70, %v79
  %v82 = vadd.f32 %v71, %v79
  %v83 = vadd.f32 %v72, %v79
  %v84 = vadd.f32 %v73, %v79
  %85 = vst [vmem:[%s3] sm:$0xff] %v81
  %86 = vst [vmem:[%s3 + $0x8] sm:$0xff] %v82
  %87 = vst [vmem:[%s3 + $0x10] sm:$0xff] %v83
  %88 = vst [vmem:[%s3 + $0x18] sm:$0xff] %v84
  // Predicated region
  $region14: #{forward.13} parent=0 // pred_check
    _
  $region15: #{forward.13} parent=0 // pred_check_branch
    %90 = sbr.rel (0) target = $region17
  $region16: #{forward.13} parent=0 // pred_region
    _
  $region17: #{forward.13} parent=0 // pred_fallthru
    _
  // Predicated region
  $region18: #{forward.13} parent=0 // pred_check
    _
  $region19: #{forward.13} parent=0 // pred_check_branch
    %92 = sbr.rel (0) target = $region21
  $region20: #{forward.13} parent=0 // pred_region
    _
  $region21: #{forward.13} parent=0 // pred_fallthru
    _

// kernel: forward.15
$region0: #{forward.15}
  #allocation0 [shape = 'u32[]', space=smem, size = 0x4, offset = 0x4, fixed_abs, tag = 'smem constant byte address 0x4 - core index']
  #allocation1 [shape = 'u32[144,128]{1,0:T(1,128)}', space=vmem, size = 0x12000, scoped, tag = 'internal scratch']
  #allocation2 [shape = 'f32[32,384]{1,0:T(8,128)}', space=vmem, size = 0xc000, scoped, tag = 'scratch operand']
  %s0 = inlined_call_operand.vmem [shape: bf16[32,128], index: 0, kind: input, shape index: {}]
  %s1 = inlined_call_operand.vmem [shape: bf16[32,128], index: 1, kind: input, shape index: {}]
  %s2 = inlined_call_operand.vmem [shape: bf16[128,384], index: 2, kind: input, shape index: {}]
  %s3 = inlined_call_operand.vmem [shape: bf16[128,384], index: 3, kind: input, shape index: {}]
  %s4 = inlined_call_operand.vmem [shape: bf16[32,128], index: 4, kind: output, shape index: {0}]
  %s5 = inlined_call_operand.vmem [shape: bf16[32,128], index: 5, kind: output, shape index: {1}]
  %s6 = inlined_call_operand.vmem [shape: bf16[32,128], index: 6, kind: output, shape index: {2}]
  %7 = xla_tuple %s4, %s5, %s6
  %s8 = sld [smem:[#allocation0]]
  $region50: #{forward.15} parent=0
    _
  %s10 = ssub.s32 1, %s8
  %s11 = scalar_select 0, %s10, %s8
  // Predicated region
  $region2: #{forward.15} parent=0 // pred_check
    _
  $region3: #{forward.15} parent=0 // pred_check_branch
    %13 = sbr.rel (0) target = $region5
  $region4: #{forward.15} parent=0 // pred_region
    _
  $region5: #{forward.15} parent=0 // pred_fallthru
    _
  // Predicated region
  $region6: #{forward.15} parent=0 // pred_check
    _
  $region7: #{forward.15} parent=0 // pred_check_branch
    %15 = sbr.rel (0) target = $region9
  $region8: #{forward.15} parent=0 // pred_region
    _
  $region9: #{forward.15} parent=0 // pred_fallthru
    _
  // Predicated region
  $region10: #{forward.15} parent=0 // pred_check
    _
  $region11: #{forward.15} parent=0 // pred_check_branch
    %17 = sbr.rel (0) target = $region13
  $region12: #{forward.15} parent=0 // pred_region
    _
  $region13: #{forward.15} parent=0 // pred_fallthru
    _
  // Predicated region
  $region14: #{forward.15} parent=0 // pred_check
    _
  $region15: #{forward.15} parent=0 // pred_check_branch
    %19 = sbr.rel (0) target = $region17
  $region16: #{forward.15} parent=0 // pred_region
    _
  $region17: #{forward.15} parent=0 // pred_fallthru
    _
  %p21 = scmp.eq.s32.totalorder 0, 0
  // Predicated region
  $region18: #{forward.15} parent=0 // pred_check
    %p22 = pneg %p21
  $region19: #{forward.15} parent=0 // pred_check_branch
    %24 = sbr.rel (%p22) target = $region21
  $region20: #{forward.15} parent=0 // pred_region
    %25 = vst [vmem:[#allocation2] sm:$0xff] 0.0
    %26 = vst [vmem:[#allocation2 + $0x8] sm:$0xff] 0.0
    %27 = vst [vmem:[#allocation2 + $0x10] sm:$0xff] 0.0
    %28 = vst [vmem:[#allocation2 + $0x18] sm:$0xff] 0.0
    %29 = vst [vmem:[#allocation2 + $0x20] sm:$0xff] 0.0
    %30 = vst [vmem:[#allocation2 + $0x28] sm:$0xff] 0.0
    %31 = vst [vmem:[#allocation2 + $0x30] sm:$0xff] 0.0
    %32 = vst [vmem:[#allocation2 + $0x38] sm:$0xff] 0.0
    %33 = vst [vmem:[#allocation2 + $0x40] sm:$0xff] 0.0
    %34 = vst [vmem:[#allocation2 + $0x48] sm:$0xff] 0.0
    %35 = vst [vmem:[#allocation2 + $0x50] sm:$0xff] 0.0
    %36 = vst [vmem:[#allocation2 + $0x58] sm:$0xff] 0.0
  $region21: #{forward.15} parent=0 // pred_fallthru
    _
  %v37 = vld [vmem:[#allocation2] sm:$0xff]
  %v38 = vld [vmem:[#allocation2 + $0x8] sm:$0xff]
  %v39 = vld [vmem:[#allocation2 + $0x10] sm:$0xff]
  %v40 = vld [vmem:[#allocation2 + $0x18] sm:$0xff]
  %v41 = vld [vmem:[#allocation2 + $0x20] sm:$0xff]
  %v42 = vld [vmem:[#allocation2 + $0x28] sm:$0xff]
  %v43 = vld [vmem:[#allocation2 + $0x30] sm:$0xff]
  %v44 = vld [vmem:[#allocation2 + $0x38] sm:$0xff]
  %v45 = vld [vmem:[#allocation2 + $0x40] sm:$0xff]
  %v46 = vld [vmem:[#allocation2 + $0x48] sm:$0xff]
  %v47 = vld [vmem:[#allocation2 + $0x50] sm:$0xff]
  %v48 = vld [vmem:[#allocation2 + $0x58] sm:$0xff]
  %v49 = vld [vmem:[%s0] sm:$0xf]
  %v50 = vld [vmem:[%s0 + $0x4] sm:$0xf]
  %v51 = vld [vmem:[%s0 + $0x8] sm:$0xf]
  %v52 = vld [vmem:[%s0 + $0xc] sm:$0xf]
  %v53 = vld [vmem:[%s2] sm:$0xff]
  %v54 = vld [vmem:[%s2 + $0x8] sm:$0xf]
  %v55 = vld [vmem:[%s2 + $0xc] sm:$0xff]
  %v56 = vld [vmem:[%s2 + $0x14] sm:$0xf]
  %v57 = vld [vmem:[%s2 + $0x18] sm:$0xff]
  %v58 = vld [vmem:[%s2 + $0x20] sm:$0xf]
  %v59 = vld [vmem:[%s2 + $0x24] sm:$0xff]
  %v60 = vld [vmem:[%s2 + $0x2c] sm:$0xf]
  %v61 = vld [vmem:[%s2 + $0x30] sm:$0xff]
  %v62 = vld [vmem:[%s2 + $0x38] sm:$0xf]
  %v63 = vld [vmem:[%s2 + $0x3c] sm:$0xff]
  %v64 = vld [vmem:[%s2 + $0x44] sm:$0xf]
  %v65 = vld [vmem:[%s2 + $0x48] sm:$0xff]
  %v66 = vld [vmem:[%s2 + $0x50] sm:$0xf]
  %v67 = vld [vmem:[%s2 + $0x54] sm:$0xff]
  %v68 = vld [vmem:[%s2 + $0x5c] sm:$0xf]
  %v69 = vld [vmem:[%s2 + $0x60] sm:$0xff]
  %v70 = vld [vmem:[%s2 + $0x68] sm:$0xf]
  %v71 = vld [vmem:[%s2 + $0x6c] sm:$0xff]
  %v72 = vld [vmem:[%s2 + $0x74] sm:$0xf]
  %v73 = vld [vmem:[%s2 + $0x78] sm:$0xff]
  %v74 = vld [vmem:[%s2 + $0x80] sm:$0xf]
  %v75 = vld [vmem:[%s2 + $0x84] sm:$0xff]
  %v76 = vld [vmem:[%s2 + $0x8c] sm:$0xf]
  %v77 = vld [vmem:[%s2 + $0x90] sm:$0xff]
  %v78 = vld [vmem:[%s2 + $0x98] sm:$0xf]
  %v79 = vld [vmem:[%s2 + $0x9c] sm:$0xff]
  %v80 = vld [vmem:[%s2 + $0xa4] sm:$0xf]
  %v81 = vld [vmem:[%s2 + $0xa8] sm:$0xff]
  %v82 = vld [vmem:[%s2 + $0xb0] sm:$0xf]
  %v83 = vld [vmem:[%s2 + $0xb4] sm:$0xff]
  %v84 = vld [vmem:[%s2 + $0xbc] sm:$0xf]
  %v85 = vld [vmem:[%s1] sm:$0xf]
  %v86 = vld [vmem:[%s1 + $0x4] sm:$0xf]
  %v87 = vld [vmem:[%s1 + $0x8] sm:$0xf]
  %v88 = vld [vmem:[%s1 + $0xc] sm:$0xf]
  %v89 = vld [vmem:[%s3] sm:$0xff]
  %v90 = vld [vmem:[%s3 + $0x8] sm:$0xf]
  %v91 = vld [vmem:[%s3 + $0xc] sm:$0xff]
  %v92 = vld [vmem:[%s3 + $0x14] sm:$0xf]
  %v93 = vld [vmem:[%s3 + $0x18] sm:$0xff]
  %v94 = vld [vmem:[%s3 + $0x20] sm:$0xf]
  %v95 = vld [vmem:[%s3 + $0x24] sm:$0xff]
  %v96 = vld [vmem:[%s3 + $0x2c] sm:$0xf]
  %v97 = vld [vmem:[%s3 + $0x30] sm:$0xff]
  %v98 = vld [vmem:[%s3 + $0x38] sm:$0xf]
  %v99 = vld [vmem:[%s3 + $0x3c] sm:$0xff]
  %v100 = vld [vmem:[%s3 + $0x44] sm:$0xf]
  %v101 = vld [vmem:[%s3 + $0x48] sm:$0xff]
  %v102 = vld [vmem:[%s3 + $0x50] sm:$0xf]
  %v103 = vld [vmem:[%s3 + $0x54] sm:$0xff]
  %v104 = vld [vmem:[%s3 + $0x5c] sm:$0xf]
  %v105 = vld [vmem:[%s3 + $0x60] sm:$0xff]
  %v106 = vld [vmem:[%s3 + $0x68] sm:$0xf]
  %v107 = vld [vmem:[%s3 + $0x6c] sm:$0xff]
  %v108 = vld [vmem:[%s3 + $0x74] sm:$0xf]
  %v109 = vld [vmem:[%s3 + $0x78] sm:$0xff]
  %v110 = vld [vmem:[%s3 + $0x80] sm:$0xf]
  %v111 = vld [vmem:[%s3 + $0x84] sm:$0xff]
  %v112 = vld [vmem:[%s3 + $0x8c] sm:$0xf]
  %v113 = vld [vmem:[%s3 + $0x90] sm:$0xff]
  %v114 = vld [vmem:[%s3 + $0x98] sm:$0xf]
  %v115 = vld [vmem:[%s3 + $0x9c] sm:$0xff]
  %v116 = vld [vmem:[%s3 + $0xa4] sm:$0xf]
  %v117 = vld [vmem:[%s3 + $0xa8] sm:$0xff]
  %v118 = vld [vmem:[%s3 + $0xb0] sm:$0xf]
  %v119 = vld [vmem:[%s3 + $0xb4] sm:$0xff]
  %v120 = vld [vmem:[%s3 + $0xbc] sm:$0xf]
  %v125 = vunpack.c.l.b16 %v85
  %v126 = vunpack.c.l.b16 %v86
  %v127 = vunpack.c.l.b16 %v87
  %v128 = vunpack.c.l.b16 %v88
  %v129 = vpack.c.b16 %v126, %v125
  %v130 = vpack.c.b16 %v128, %v127
  %v165 = vunpack.c.l.b16 %v89
  %v166 = vunpack.c.h.b16 %v89
  %v167 = vunpack.c.l.b16 %v90
  %v168 = vunpack.c.l.b16 %v91
  %v169 = vunpack.c.h.b16 %v91
  %v170 = vunpack.c.l.b16 %v92
  %v171 = vunpack.c.l.b16 %v93
  %v172 = vunpack.c.h.b16 %v93
  %v173 = vunpack.c.l.b16 %v94
  %v174 = vunpack.c.l.b16 %v95
  %v175 = vunpack.c.h.b16 %v95
  %v176 = vunpack.c.l.b16 %v96
  %v177 = vunpack.c.l.b16 %v97
  %v178 = vunpack.c.h.b16 %v97
  %v179 = vunpack.c.l.b16 %v98
  %v180 = vunpack.c.l.b16 %v99
  %v181 = vunpack.c.h.b16 %v99
  %v182 = vunpack.c.l.b16 %v100
  %v183 = vunpack.c.l.b16 %v101
  %v184 = vunpack.c.h.b16 %v101
  %v185 = vunpack.c.l.b16 %v102
  %v186 = vunpack.c.l.b16 %v103
  %v187 = vunpack.c.h.b16 %v103
  %v188 = vunpack.c.l.b16 %v104
  %v189 = vunpack.c.l.b16 %v105
  %v190 = vunpack.c.h.b16 %v105
  %v191 = vunpack.c.l.b16 %v106
  %v192 = vunpack.c.l.b16 %v107
  %v193 = vunpack.c.h.b16 %v107
  %v194 = vunpack.c.l.b16 %v108
  %v195 = vunpack.c.l.b16 %v109
  %v196 = vunpack.c.h.b16 %v109
  %v197 = vunpack.c.l.b16 %v110
  %v198 = vunpack.c.l.b16 %v111
  %v199 = vunpack.c.h.b16 %v111
  %v200 = vunpack.c.l.b16 %v112
  %v201 = vunpack.c.l.b16 %v113
  %v202 = vunpack.c.h.b16 %v113
  %v203 = vunpack.c.l.b16 %v114
  %v204 = vunpack.c.l.b16 %v115
  %v205 = vunpack.c.h.b16 %v115
  %v206 = vunpack.c.l.b16 %v116
  %v207 = vunpack.c.l.b16 %v117
  %v208 = vunpack.c.h.b16 %v117
  %v209 = vunpack.c.l.b16 %v118
  %v210 = vunpack.c.l.b16 %v119
  %v211 = vunpack.c.h.b16 %v119
  %v212 = vunpack.c.l.b16 %v120
  %v213 = vpack.c.b16 %v168, %v165
  %v214 = vpack.c.b16 %v169, %v166
  %v215 = vpack.c.b16 %v170, %v167
  %v216 = vpack.c.b16 %v174, %v171
  %v217 = vpack.c.b16 %v175, %v172
  %v218 = vpack.c.b16 %v176, %v173
  %v219 = vpack.c.b16 %v180, %v177
  %v220 = vpack.c.b16 %v181, %v178
  %v221 = vpack.c.b16 %v182, %v179
  %v222 = vpack.c.b16 %v186, %v183
  %v223 = vpack.c.b16 %v187, %v184
  %v224 = vpack.c.b16 %v188, %v185
  %v225 = vpack.c.b16 %v192, %v189
  %v226 = vpack.c.b16 %v193, %v190
  %v227 = vpack.c.b16 %v194, %v191
  %v228 = vpack.c.b16 %v198, %v195
  %v229 = vpack.c.b16 %v199, %v196
  %v230 = vpack.c.b16 %v200, %v197
  %v231 = vpack.c.b16 %v204, %v201
  %v232 = vpack.c.b16 %v205, %v202
  %v233 = vpack.c.b16 %v206, %v203
  %v234 = vpack.c.b16 %v210, %v207
  %v235 = vpack.c.b16 %v211, %v208
  %v236 = vpack.c.b16 %v212, %v209
  %261 = vmatprep.subr.bf16.mxu0 %v235
  %262 = vmatpush1.bf16.msra.mxu0 %v234
  %263 = vmatprep.subr.bf16.mxu0 %v232
  %264 = vmatpush1.bf16.msra.mxu0 %v231
  %265 = vmatprep.subr.bf16.mxu0 %v229
  %266 = vmatpush1.bf16.msra.mxu0 %v228
  %267 = vmatprep.subr.bf16.mxu0 %v226
  %268 = vmatpush1.bf16.msra.mxu0 %v225
  %269 = vmatprep.subr.bf16.mxu0 %v223
  %270 = vmatpush1.bf16.msra.mxu0 %v222
  %271 = vmatprep.subr.bf16.mxu0 %v220
  %272 = vmatpush1.bf16.msra.mxu0 %v219
  %273 = vmatprep.subr.bf16.mxu0 %v217
  %274 = vmatpush1.bf16.msra.mxu0 %v216
  %275 = vmatprep.subr.bf16.mxu0 %v214
  %276 = vmatpush1.bf16.msra.mxu0 %v213
  %277 = vmatprep.subr.bf16.mxu0 0
  %278 = vmatpush2.bf16.msra.mxu0 0
  %279 = vmatprep.subr.bf16.mxu0 0
  %280 = vmatpush2.bf16.msra.mxu0 0
  %281 = vmatprep.subr.bf16.mxu0 0
  %282 = vmatpush2.bf16.msra.mxu0 0
  %283 = vmatprep.subr.bf16.mxu0 0
  %284 = vmatpush2.bf16.msra.mxu0 0
  %285 = vmatprep.subr.bf16.mxu0 0
  %286 = vmatpush2.bf16.msra.mxu0 0
  %287 = vmatprep.subr.bf16.mxu0 0
  %288 = vmatpush2.bf16.msra.mxu0 0
  %289 = vmatprep.subr.bf16.mxu0 0
  %290 = vmatpush2.bf16.msra.mxu0 0
  %291 = vmatprep.subr.bf16.mxu0 0
  %292 = vmatpush2.bf16.msra.mxu0 0
  %293 = vmatprep.mubr.bf16.mxu0 0
  %294 = vmatmul.mubr.bf16.gmra.mxu0 %v129
  %v295 = vpop.f32.mrf.mxu0
  %v296 = vadd.f32 0.0, %v295
  %v297 = vpop.f32.mrf.mxu0
  %v298 = vadd.f32 0.0, %v297
  %v299 = vpop.f32.mrf.mxu0
  %v300 = vadd.f32 0.0, %v299
  %v301 = vpop.f32.mrf.mxu0
  %v302 = vadd.f32 0.0, %v301
  %303 = vmatprep.mubr.bf16.mxu0 0
  %304 = vmatmul.mubr.bf16.gmra.mxu0 %v130
  %v305 = vpop.f32.mrf.mxu0
  %v306 = vadd.f32 0.0, %v305
  %v307 = vpop.f32.mrf.mxu0
  %v308 = vadd.f32 0.0, %v307
  %v309 = vpop.f32.mrf.mxu0
  %v310 = vadd.f32 0.0, %v309
  %v311 = vpop.f32.mrf.mxu0
  %v312 = vadd.f32 0.0, %v311
  %313 = vdwg.mxu0
  %314 = vmatprep.subr.bf16.mxu0 0
  %315 = vmatpush1.bf16.msra.mxu0 %v236
  %316 = vmatprep.subr.bf16.mxu0 0
  %317 = vmatpush1.bf16.msra.mxu0 %v233
  %318 = vmatprep.subr.bf16.mxu0 0
  %319 = vmatpush1.bf16.msra.mxu0 %v230
  %320 = vmatprep.subr.bf16.mxu0 0
  %321 = vmatpush1.bf16.msra.mxu0 %v227
  %322 = vmatprep.subr.bf16.mxu0 0
  %323 = vmatpush1.bf16.msra.mxu0 %v224
  %324 = vmatprep.subr.bf16.mxu0 0
  %325 = vmatpush1.bf16.msra.mxu0 %v221
  %326 = vmatprep.subr.bf16.mxu0 0
  %327 = vmatpush1.bf16.msra.mxu0 %v218
  %328 = vmatprep.subr.bf16.mxu0 0
  %329 = vmatpush1.bf16.msra.mxu0 %v215
  %330 = vmatprep.subr.bf16.mxu0 0
  %331 = vmatpush2.bf16.msra.mxu0 0
  %332 = vmatprep.subr.bf16.mxu0 0
  %333 = vmatpush2.bf16.msra.mxu0 0
  %334 = vmatprep.subr.bf16.mxu0 0
  %335 = vmatpush2.bf16.msra.mxu0 0
  %336 = vmatprep.subr.bf16.mxu0 0
  %337 = vmatpush2.bf16.msra.mxu0 0
  %338 = vmatprep.subr.bf16.mxu0 0
  %339 = vmatpush2.bf16.msra.mxu0 0
  %340 = vmatprep.subr.bf16.mxu0 0
  %341 = vmatpush2.bf16.msra.mxu0 0
  %342 = vmatprep.subr.bf16.mxu0 0
  %343 = vmatpush2.bf16.msra.mxu0 0
  %344 = vmatprep.subr.bf16.mxu0 0
  %345 = vmatpush2.bf16.msra.mxu0 0
  %346 = vmatprep.mubr.bf16.mxu0 0
  %347 = vmatmul.mubr.bf16.gmra.mxu0 %v129
  %v348 = vpop.f32.mrf.mxu0
  %v349 = vadd.f32 0.0, %v348
  %v350 = vpop.f32.mrf.mxu0
  %v351 = vpop.f32.mrf.mxu0
  %v352 = vadd.f32 0.0, %v351
  %v353 = vpop.f32.mrf.mxu0
  %354 = vmatprep.mubr.bf16.mxu0 0
  %355 = vmatmul.mubr.bf16.gmra.mxu0 %v130
  %v356 = vpop.f32.mrf.mxu0
  %v357 = vadd.f32 0.0, %v356
  %v358 = vpop.f32.mrf.mxu0
  %v359 = vpop.f32.mrf.mxu0
  %v360 = vadd.f32 0.0, %v359
  %v361 = vpop.f32.mrf.mxu0
  %362 = vdwg.mxu0
  %v367 = vunpack.c.l.b16 %v49
  %v368 = vunpack.c.l.b16 %v50
  %v369 = vunpack.c.l.b16 %v51
  %v370 = vunpack.c.l.b16 %v52
  %v371 = vpack.c.b16 %v368, %v367
  %v372 = vpack.c.b16 %v370, %v369
  %v407 = vunpack.c.l.b16 %v53
  %v408 = vunpack.c.h.b16 %v53
  %v409 = vunpack.c.l.b16 %v54
  %v410 = vunpack.c.l.b16 %v55
  %v411 = vunpack.c.h.b16 %v55
  %v412 = vunpack.c.l.b16 %v56
  %v413 = vunpack.c.l.b16 %v57
  %v414 = vunpack.c.h.b16 %v57
  %v415 = vunpack.c.l.b16 %v58
  %v416 = vunpack.c.l.b16 %v59
  %v417 = vunpack.c.h.b16 %v59
  %v418 = vunpack.c.l.b16 %v60
  %v419 = vunpack.c.l.b16 %v61
  %v420 = vunpack.c.h.b16 %v61
  %v421 = vunpack.c.l.b16 %v62
  %v422 = vunpack.c.l.b16 %v63
  %v423 = vunpack.c.h.b16 %v63
  %v424 = vunpack.c.l.b16 %v64
  %v425 = vunpack.c.l.b16 %v65
  %v426 = vunpack.c.h.b16 %v65
  %v427 = vunpack.c.l.b16 %v66
  %v428 = vunpack.c.l.b16 %v67
  %v429 = vunpack.c.h.b16 %v67
  %v430 = vunpack.c.l.b16 %v68
  %v431 = vunpack.c.l.b16 %v69
  %v432 = vunpack.c.h.b16 %v69
  %v433 = vunpack.c.l.b16 %v70
  %v434 = vunpack.c.l.b16 %v71
  %v435 = vunpack.c.h.b16 %v71
  %v436 = vunpack.c.l.b16 %v72
  %v437 = vunpack.c.l.b16 %v73
  %v438 = vunpack.c.h.b16 %v73
  %v439 = vunpack.c.l.b16 %v74
  %v440 = vunpack.c.l.b16 %v75
  %v441 = vunpack.c.h.b16 %v75
  %v442 = vunpack.c.l.b16 %v76
  %v443 = vunpack.c.l.b16 %v77
  %v444 = vunpack.c.h.b16 %v77
  %v445 = vunpack.c.l.b16 %v78
  %v446 = vunpack.c.l.b16 %v79
  %v447 = vunpack.c.h.b16 %v79
  %v448 = vunpack.c.l.b16 %v80
  %v449 = vunpack.c.l.b16 %v81
  %v450 = vunpack.c.h.b16 %v81
  %v451 = vunpack.c.l.b16 %v82
  %v452 = vunpack.c.l.b16 %v83
  %v453 = vunpack.c.h.b16 %v83
  %v454 = vunpack.c.l.b16 %v84
  %v455 = vpack.c.b16 %v410, %v407
  %v456 = vpack.c.b16 %v411, %v408
  %v457 = vpack.c.b16 %v412, %v409
  %v458 = vpack.c.b16 %v416, %v413
  %v459 = vpack.c.b16 %v417, %v414
  %v460 = vpack.c.b16 %v418, %v415
  %v461 = vpack.c.b16 %v422, %v419
  %v462 = vpack.c.b16 %v423, %v420
  %v463 = vpack.c.b16 %v424, %v421
  %v464 = vpack.c.b16 %v428, %v425
  %v465 = vpack.c.b16 %v429, %v426
  %v466 = vpack.c.b16 %v430, %v427
  %v467 = vpack.c.b16 %v434, %v431
  %v468 = vpack.c.b16 %v435, %v432
  %v469 = vpack.c.b16 %v436, %v433
  %v470 = vpack.c.b16 %v440, %v437
  %v471 = vpack.c.b16 %v441, %v438
  %v472 = vpack.c.b16 %v442, %v439
  %v473 = vpack.c.b16 %v446, %v443
  %v474 = vpack.c.b16 %v447, %v444
  %v475 = vpack.c.b16 %v448, %v445
  %v476 = vpack.c.b16 %v452, %v449
  %v477 = vpack.c.b16 %v453, %v450
  %v478 = vpack.c.b16 %v454, %v451
  %503 = vmatprep.subr.bf16.mxu0 %v477
  %504 = vmatpush1.bf16.msra.mxu0 %v476
  %505 = vmatprep.subr.bf16.mxu0 %v474
  %506 = vmatpush1.bf16.msra.mxu0 %v473
  %507 = vmatprep.subr.bf16.mxu0 %v471
  %508 = vmatpush1.bf16.msra.mxu0 %v470
  %509 = vmatprep.subr.bf16.mxu0 %v468
  %510 = vmatpush1.bf16.msra.mxu0 %v467
  %511 = vmatprep.subr.bf16.mxu0 %v465
  %512 = vmatpush1.bf16.msra.mxu0 %v464
  %513 = vmatprep.subr.bf16.mxu0 %v462
  %514 = vmatpush1.bf16.msra.mxu0 %v461
  %515 = vmatprep.subr.bf16.mxu0 %v459
  %516 = vmatpush1.bf16.msra.mxu0 %v458
  %517 = vmatprep.subr.bf16.mxu0 %v456
  %518 = vmatpush1.bf16.msra.mxu0 %v455
  %519 = vmatprep.subr.bf16.mxu0 0
  %520 = vmatpush2.bf16.msra.mxu0 0
  %521 = vmatprep.subr.bf16.mxu0 0
  %522 = vmatpush2.bf16.msra.mxu0 0
  %523 = vmatprep.subr.bf16.mxu0 0
  %524 = vmatpush2.bf16.msra.mxu0 0
  %525 = vmatprep.subr.bf16.mxu0 0
  %526 = vmatpush2.bf16.msra.mxu0 0
  %527 = vmatprep.subr.bf16.mxu0 0
  %528 = vmatpush2.bf16.msra.mxu0 0
  %529 = vmatprep.subr.bf16.mxu0 0
  %530 = vmatpush2.bf16.msra.mxu0 0
  %531 = vmatprep.subr.bf16.mxu0 0
  %532 = vmatpush2.bf16.msra.mxu0 0
  %533 = vmatprep.subr.bf16.mxu0 0
  %534 = vmatpush2.bf16.msra.mxu0 0
  %535 = vmatprep.mubr.bf16.mxu0 0
  %536 = vmatmul.mubr.bf16.gmra.mxu0 %v371
  %v537 = vpop.f32.mrf.mxu0
  %v538 = vadd.f32 %v296, %v537
  %v539 = vpop.f32.mrf.mxu0
  %v540 = vadd.f32 %v298, %v539
  %v541 = vpop.f32.mrf.mxu0
  %v542 = vadd.f32 %v300, %v541
  %v543 = vpop.f32.mrf.mxu0
  %v544 = vadd.f32 %v302, %v543
  %545 = vmatprep.mubr.bf16.mxu0 0
  %546 = vmatmul.mubr.bf16.gmra.mxu0 %v372
  %v547 = vpop.f32.mrf.mxu0
  %v548 = vadd.f32 %v306, %v547
  %v549 = vpop.f32.mrf.mxu0
  %v550 = vadd.f32 %v308, %v549
  %v551 = vpop.f32.mrf.mxu0
  %v552 = vadd.f32 %v310, %v551
  %v553 = vpop.f32.mrf.mxu0
  %v554 = vadd.f32 %v312, %v553
  %555 = vdwg.mxu0
  %556 = vmatprep.subr.bf16.mxu0 0
  %557 = vmatpush1.bf16.msra.mxu0 %v478
  %558 = vmatprep.subr.bf16.mxu0 0
  %559 = vmatpush1.bf16.msra.mxu0 %v475
  %560 = vmatprep.subr.bf16.mxu0 0
  %561 = vmatpush1.bf16.msra.mxu0 %v472
  %562 = vmatprep.subr.bf16.mxu0 0
  %563 = vmatpush1.bf16.msra.mxu0 %v469
  %564 = vmatprep.subr.bf16.mxu0 0
  %565 = vmatpush1.bf16.msra.mxu0 %v466
  %566 = vmatprep.subr.bf16.mxu0 0
  %567 = vmatpush1.bf16.msra.mxu0 %v463
  %568 = vmatprep.subr.bf16.mxu0 0
  %569 = vmatpush1.bf16.msra.mxu0 %v460
  %570 = vmatprep.subr.bf16.mxu0 0
  %571 = vmatpush1.bf16.msra.mxu0 %v457
  %572 = vmatprep.subr.bf16.mxu0 0
  %573 = vmatpush2.bf16.msra.mxu0 0
  %574 = vmatprep.subr.bf16.mxu0 0
  %575 = vmatpush2.bf16.msra.mxu0 0
  %576 = vmatprep.subr.bf16.mxu0 0
  %577 = vmatpush2.bf16.msra.mxu0 0
  %578 = vmatprep.subr.bf16.mxu0 0
  %579 = vmatpush2.bf16.msra.mxu0 0
  %580 = vmatprep.subr.bf16.mxu0 0
  %581 = vmatpush2.bf16.msra.mxu0 0
  %582 = vmatprep.subr.bf16.mxu0 0
  %583 = vmatpush2.bf16.msra.mxu0 0
  %584 = vmatprep.subr.bf16.mxu0 0
  %585 = vmatpush2.bf16.msra.mxu0 0
  %586 = vmatprep.subr.bf16.mxu0 0
  %587 = vmatpush2.bf16.msra.mxu0 0
  %588 = vmatprep.mubr.bf16.mxu0 0
  %589 = vmatmul.mubr.bf16.gmra.mxu0 %v371
  %v590 = vpop.f32.mrf.mxu0
  %v591 = vadd.f32 %v349, %v590
  %v592 = vpop.f32.mrf.mxu0
  %v593 = vpop.f32.mrf.mxu0
  %v594 = vadd.f32 %v352, %v593
  %v595 = vpop.f32.mrf.mxu0
  %596 = vmatprep.mubr.bf16.mxu0 0
  %597 = vmatmul.mubr.bf16.gmra.mxu0 %v372
  %v598 = vpop.f32.mrf.mxu0
  %v599 = vadd.f32 %v357, %v598
  %v600 = vpop.f32.mrf.mxu0
  %v601 = vpop.f32.mrf.mxu0
  %v602 = vadd.f32 %v360, %v601
  %v603 = vpop.f32.mrf.mxu0
  %604 = vdwg.mxu0
  %v605 = vadd.f32 %v37, %v538
  %v606 = vadd.f32 %v38, %v540
  %v607 = vadd.f32 %v39, %v591
  %v608 = vadd.f32 %v40, %v542
  %v609 = vadd.f32 %v41, %v544
  %v610 = vadd.f32 %v42, %v594
  %v611 = vadd.f32 %v43, %v548
  %v612 = vadd.f32 %v44, %v550
  %v613 = vadd.f32 %v45, %v599
  %v614 = vadd.f32 %v46, %v552
  %v615 = vadd.f32 %v47, %v554
  %v616 = vadd.f32 %v48, %v602
  %617 = vst [vmem:[#allocation2] sm:$0xff] %v605
  %618 = vst [vmem:[#allocation2 + $0x8] sm:$0xff] %v606
  %619 = vst [vmem:[#allocation2 + $0x10] sm:$0xff] %v607
  %620 = vst [vmem:[#allocation2 + $0x18] sm:$0xff] %v608
  %621 = vst [vmem:[#allocation2 + $0x20] sm:$0xff] %v609
  %622 = vst [vmem:[#allocation2 + $0x28] sm:$0xff] %v610
  %623 = vst [vmem:[#allocation2 + $0x30] sm:$0xff] %v611
  %624 = vst [vmem:[#allocation2 + $0x38] sm:$0xff] %v612
  %625 = vst [vmem:[#allocation2 + $0x40] sm:$0xff] %v613
  %626 = vst [vmem:[#allocation2 + $0x48] sm:$0xff] %v614
  %627 = vst [vmem:[#allocation2 + $0x50] sm:$0xff] %v615
  %628 = vst [vmem:[#allocation2 + $0x58] sm:$0xff] %v616
  // Predicated region
  $region22: #{forward.15} parent=0 // pred_check
    %p629 = pneg %p21
  $region23: #{forward.15} parent=0 // pred_check_branch
    %631 = sbr.rel (%p629) target = $region25
  $region24: #{forward.15} parent=0 // pred_region
    %v632 = vld [vmem:[#allocation2] sm:$0xff]
    %v633 = vld [vmem:[#allocation2 + $0x18] sm:$0xff]
    %v634 = vld [vmem:[#allocation2 + $0x30] sm:$0xff]
    %v635 = vld [vmem:[#allocation2 + $0x48] sm:$0xff]
    %v636 = vpack.c.bf16 %v633, %v632
    %v637 = vpack.c.bf16 %v635, %v634
    %v640 = vunpack.c.l.b16 %v636
    %v641 = vunpack.c.h.b16 %v636
    %v642 = vunpack.c.l.b16 %v637
    %v643 = vunpack.c.h.b16 %v637
    %v644 = vpack.c.b16 %v640, %v640
    %v645 = vpack.c.b16 %v641, %v641
    %v646 = vpack.c.b16 %v642, %v642
    %v647 = vpack.c.b16 %v643, %v643
    %652 = vst [vmem:[%s4] sm:$0xf] %v644
    %653 = vst [vmem:[%s4 + $0x4] sm:$0xf] %v645
    %654 = vst [vmem:[%s4 + $0x8] sm:$0xf] %v646
    %655 = vst [vmem:[%s4 + $0xc] sm:$0xf] %v647
    %v656 = vld [vmem:[#allocation2 + $0x8] sm:$0xff]
    %v657 = vld [vmem:[#allocation2 + $0x20] sm:$0xff]
    %v658 = vld [vmem:[#allocation2 + $0x38] sm:$0xff]
    %v659 = vld [vmem:[#allocation2 + $0x50] sm:$0xff]
    %v660 = vpack.c.bf16 %v657, %v656
    %v661 = vpack.c.bf16 %v659, %v658
    %v664 = vunpack.c.l.b16 %v660
    %v665 = vunpack.c.h.b16 %v660
    %v666 = vunpack.c.l.b16 %v661
    %v667 = vunpack.c.h.b16 %v661
    %v668 = vpack.c.b16 %v664, %v664
    %v669 = vpack.c.b16 %v665, %v665
    %v670 = vpack.c.b16 %v666, %v666
    %v671 = vpack.c.b16 %v667, %v667
    %676 = vst [vmem:[%s5] sm:$0xf] %v668
    %677 = vst [vmem:[%s5 + $0x4] sm:$0xf] %v669
    %678 = vst [vmem:[%s5 + $0x8] sm:$0xf] %v670
    %679 = vst [vmem:[%s5 + $0xc] sm:$0xf] %v671
    %v680 = vld [vmem:[#allocation2 + $0x10] sm:$0xff]
    %v681 = vld [vmem:[#allocation2 + $0x28] sm:$0xff]
    %v682 = vld [vmem:[#allocation2 + $0x40] sm:$0xff]
    %v683 = vld [vmem:[#allocation2 + $0x58] sm:$0xff]
    %v684 = vxor.u32 %v680, 2147483648
    %v685 = vxor.u32 %v681, 2147483648
    %v686 = vxor.u32 %v682, 2147483648
    %v687 = vxor.u32 %v683, 2147483648
    %v688 = vmul.f32 %v684, 1.442695
    %v689 = vpow.pop %v688
    %v690 = vmul.f32 %v685, 1.442695
    %v691 = vpow.pop %v690
    %v692 = vmul.f32 %v686, 1.442695
    %v693 = vpow.pop %v692
    %v694 = vmul.f32 %v687, 1.442695
    %v695 = vpow.pop %v694
    %v696 = vadd.f32 %v689, 1.0
    %v697 = vadd.f32 %v691, 1.0
    %v698 = vadd.f32 %v693, 1.0
    %v699 = vadd.f32 %v695, 1.0
    %v700 = vrcp.pop %v696
    %v701 = vmul.f32 1.0, %v700
    %v702 = vrcp.pop %v697
    %v703 = vmul.f32 1.0, %v702
    %v704 = vrcp.pop %v698
    %v705 = vmul.f32 1.0, %v704
    %v706 = vrcp.pop %v699
    %v707 = vmul.f32 1.0, %v706
    %v708 = vpack.c.bf16 %v703, %v701
    %v709 = vpack.c.bf16 %v707, %v705
    %v712 = vunpack.c.l.b16 %v708
    %v713 = vunpack.c.h.b16 %v708
    %v714 = vunpack.c.l.b16 %v709
    %v715 = vunpack.c.h.b16 %v709
    %v716 = vpack.c.b16 %v712, %v712
    %v717 = vpack.c.b16 %v713, %v713
    %v718 = vpack.c.b16 %v714, %v714
    %v719 = vpack.c.b16 %v715, %v715
    %724 = vst [vmem:[%s6] sm:$0xf] %v716
    %725 = vst [vmem:[%s6 + $0x4] sm:$0xf] %v717
    %726 = vst [vmem:[%s6 + $0x8] sm:$0xf] %v718
    %727 = vst [vmem:[%s6 + $0xc] sm:$0xf] %v719
  $region25: #{forward.15} parent=0 // pred_fallthru
    _
  // Predicated region
  $region26: #{forward.15} parent=0 // pred_check
    _
  $region27: #{forward.15} parent=0 // pred_check_branch
    %729 = sbr.rel (0) target = $region29
  $region28: #{forward.15} parent=0 // pred_region
    _
  $region29: #{forward.15} parent=0 // pred_fallthru
    _
  // Predicated region
  $region30: #{forward.15} parent=0 // pred_check
    _
  $region31: #{forward.15} parent=0 // pred_check_branch
    %731 = sbr.rel (0) target = $region33
  $region32: #{forward.15} parent=0 // pred_region
    _
  $region33: #{forward.15} parent=0 // pred_fallthru
    _
  // Predicated region
  $region34: #{forward.15} parent=0 // pred_check
    _
  $region35: #{forward.15} parent=0 // pred_check_branch
    %733 = sbr.rel (0) target = $region37
  $region36: #{forward.15} parent=0 // pred_region
    _
  $region37: #{forward.15} parent=0 // pred_fallthru
    _
  // Predicated region
  $region38: #{forward.15} parent=0 // pred_check
    _
  $region39: #{forward.15} parent=0 // pred_check_branch
    %735 = sbr.rel (0) target = $region41
  $region40: #{forward.15} parent=0 // pred_region
    _
  $region41: #{forward.15} parent=0 // pred_fallthru
    _
  // Predicated region
  $region42: #{forward.15} parent=0 // pred_check
    _
  $region43: #{forward.15} parent=0 // pred_check_branch
    %737 = sbr.rel (0) target = $region45
  $region44: #{forward.15} parent=0 // pred_region
    _
  $region45: #{forward.15} parent=0 // pred_fallthru
    _
  // Predicated region
  $region46: #{forward.15} parent=0 // pred_check
    _
  $region47: #{forward.15} parent=0 // pred_check_branch
    %739 = sbr.rel (0) target = $region49
  $region48: #{forward.15} parent=0 // pred_region
    _
  $region49: #{forward.15} parent=0 // pred_fallthru
    _

// kernel: forward.19
$region0: #{forward.19}
  #allocation0 [shape = 'u32[]', space=smem, size = 0x4, offset = 0x4, fixed_abs, tag = 'smem constant byte address 0x4 - core index']
  #allocation1 [shape = 'u32[144,128]{1,0:T(1,128)}', space=vmem, size = 0x12000, scoped, tag = 'internal scratch']
  %s0 = inlined_call_operand.vmem [shape: bf16[32,512], index: 0, kind: input, shape index: {}]
  %s1 = inlined_call_operand.vmem [shape: bf16[512,128], index: 1, kind: input, shape index: {}]
  %s2 = inlined_call_operand.vmem [shape: bf16[32,128], index: 2, kind: input, shape index: {}]
  %s3 = inlined_call_operand.vmem [shape: f32[32,128], index: 3, kind: input, shape index: {}]
  %s4 = inlined_call_operand.vmem [shape: f32[1,128], index: 4, kind: input, shape index: {}]
  %s5 = inlined_call_operand.vmem [shape: f32[1,128], index: 5, kind: input, shape index: {}]
  %s6 = inlined_call_operand.vmem [shape: f32[32,128], index: 6, kind: output, shape index: {0}]
  %s7 = inlined_call_operand.vmem [shape: bf16[32,128], index: 7, kind: output, shape index: {1}]
  %8 = xla_tuple %s6, %s7
  %s9 = sld [smem:[#allocation0]]
  $region50: #{forward.19} parent=0
    _
  %s11 = ssub.s32 1, %s9
  %s12 = scalar_select 0, %s11, %s9
  // Predicated region
  $region2: #{forward.19} parent=0 // pred_check
    _
  $region3: #{forward.19} parent=0 // pred_check_branch
    %14 = sbr.rel (0) target = $region5
  $region4: #{forward.19} parent=0 // pred_region
    _
  $region5: #{forward.19} parent=0 // pred_fallthru
    _
  // Predicated region
  $region6: #{forward.19} parent=0 // pred_check
    _
  $region7: #{forward.19} parent=0 // pred_check_branch
    %16 = sbr.rel (0) target = $region9
  $region8: #{forward.19} parent=0 // pred_region
    _
  $region9: #{forward.19} parent=0 // pred_fallthru
    _
  // Predicated region
  $region10: #{forward.19} parent=0 // pred_check
    _
  $region11: #{forward.19} parent=0 // pred_check_branch
    %18 = sbr.rel (0) target = $region13
  $region12: #{forward.19} parent=0 // pred_region
    _
  $region13: #{forward.19} parent=0 // pred_fallthru
    _
  // Predicated region
  $region14: #{forward.19} parent=0 // pred_check
    _
  $region15: #{forward.19} parent=0 // pred_check_branch
    %20 = sbr.rel (0) target = $region17
  $region16: #{forward.19} parent=0 // pred_region
    _
  $region17: #{forward.19} parent=0 // pred_fallthru
    _
  // Predicated region
  $region18: #{forward.19} parent=0 // pred_check
    _
  $region19: #{forward.19} parent=0 // pred_check_branch
    %22 = sbr.rel (0) target = $region21
  $region20: #{forward.19} parent=0 // pred_region
    _
  $region21: #{forward.19} parent=0 // pred_fallthru
    _
  // Predicated region
  $region22: #{forward.19} parent=0 // pred_check
    _
  $region23: #{forward.19} parent=0 // pred_check_branch
    %24 = sbr.rel (0) target = $region25
  $region24: #{forward.19} parent=0 // pred_region
    _
  $region25: #{forward.19} parent=0 // pred_fallthru
    _
  %p26 = scmp.eq.s32.totalorder 0, 0
  // Predicated region
  $region26: #{forward.19} parent=0 // pred_check
    %p27 = pneg %p26
  $region27: #{forward.19} parent=0 // pred_check_branch
    %29 = sbr.rel (%p27) target = $region29
  $region28: #{forward.19} parent=0 // pred_region
    %30 = vst [vmem:[%s6] sm:$0xff] 0.0
    %31 = vst [vmem:[%s6 + $0x8] sm:$0xff] 0.0
    %32 = vst [vmem:[%s6 + $0x10] sm:$0xff] 0.0
    %33 = vst [vmem:[%s6 + $0x18] sm:$0xff] 0.0
  $region29: #{forward.19} parent=0 // pred_fallthru
    _
  %v34 = vld [vmem:[%s6] sm:$0xff]
  %v35 = vld [vmem:[%s6 + $0x8] sm:$0xff]
  %v36 = vld [vmem:[%s6 + $0x10] sm:$0xff]
  %v37 = vld [vmem:[%s6 + $0x18] sm:$0xff]
  %v38 = vld [vmem:[%s0] sm:$0xff]
  %v39 = vld [vmem:[%s0 + $0x8] sm:$0xff]
  %v40 = vld [vmem:[%s0 + $0x10] sm:$0xff]
  %v41 = vld [vmem:[%s0 + $0x18] sm:$0xff]
  %v42 = vld [vmem:[%s0 + $0x20] sm:$0xff]
  %v43 = vld [vmem:[%s0 + $0x28] sm:$0xff]
  %v44 = vld [vmem:[%s0 + $0x30] sm:$0xff]
  %v45 = vld [vmem:[%s0 + $0x38] sm:$0xff]
  %v46 = vld [vmem:[%s1] sm:$0xf]
  %v47 = vld [vmem:[%s1 + $0x4] sm:$0xf]
  %v48 = vld [vmem:[%s1 + $0x8] sm:$0xf]
  %v49 = vld [vmem:[%s1 + $0xc] sm:$0xf]
  %v50 = vld [vmem:[%s1 + $0x10] sm:$0xf]
  %v51 = vld [vmem:[%s1 + $0x14] sm:$0xf]
  %v52 = vld [vmem:[%s1 + $0x18] sm:$0xf]
  %v53 = vld [vmem:[%s1 + $0x1c] sm:$0xf]
  %v54 = vld [vmem:[%s1 + $0x20] sm:$0xf]
  %v55 = vld [vmem:[%s1 + $0x24] sm:$0xf]
  %v56 = vld [vmem:[%s1 + $0x28] sm:$0xf]
  %v57 = vld [vmem:[%s1 + $0x2c] sm:$0xf]
  %v58 = vld [vmem:[%s1 + $0x30] sm:$0xf]
  %v59 = vld [vmem:[%s1 + $0x34] sm:$0xf]
  %v60 = vld [vmem:[%s1 + $0x38] sm:$0xf]
  %v61 = vld [vmem:[%s1 + $0x3c] sm:$0xf]
  %v62 = vld [vmem:[%s1 + $0x40] sm:$0xf]
  %v63 = vld [vmem:[%s1 + $0x44] sm:$0xf]
  %v64 = vld [vmem:[%s1 + $0x48] sm:$0xf]
  %v65 = vld [vmem:[%s1 + $0x4c] sm:$0xf]
  %v66 = vld [vmem:[%s1 + $0x50] sm:$0xf]
  %v67 = vld [vmem:[%s1 + $0x54] sm:$0xf]
  %v68 = vld [vmem:[%s1 + $0x58] sm:$0xf]
  %v69 = vld [vmem:[%s1 + $0x5c] sm:$0xf]
  %v70 = vld [vmem:[%s1 + $0x60] sm:$0xf]
  %v71 = vld [vmem:[%s1 + $0x64] sm:$0xf]
  %v72 = vld [vmem:[%s1 + $0x68] sm:$0xf]
  %v73 = vld [vmem:[%s1 + $0x6c] sm:$0xf]
  %v74 = vld [vmem:[%s1 + $0x70] sm:$0xf]
  %v75 = vld [vmem:[%s1 + $0x74] sm:$0xf]
  %v76 = vld [vmem:[%s1 + $0x78] sm:$0xf]
  %v77 = vld [vmem:[%s1 + $0x7c] sm:$0xf]
  %v78 = vld [vmem:[%s1 + $0x80] sm:$0xf]
  %v79 = vld [vmem:[%s1 + $0x84] sm:$0xf]
  %v80 = vld [vmem:[%s1 + $0x88] sm:$0xf]
  %v81 = vld [vmem:[%s1 + $0x8c] sm:$0xf]
  %v82 = vld [vmem:[%s1 + $0x90] sm:$0xf]
  %v83 = vld [vmem:[%s1 + $0x94] sm:$0xf]
  %v84 = vld [vmem:[%s1 + $0x98] sm:$0xf]
  %v85 = vld [vmem:[%s1 + $0x9c] sm:$0xf]
  %v86 = vld [vmem:[%s1 + $0xa0] sm:$0xf]
  %v87 = vld [vmem:[%s1 + $0xa4] sm:$0xf]
  %v88 = vld [vmem:[%s1 + $0xa8] sm:$0xf]
  %v89 = vld [vmem:[%s1 + $0xac] sm:$0xf]
  %v90 = vld [vmem:[%s1 + $0xb0] sm:$0xf]
  %v91 = vld [vmem:[%s1 + $0xb4] sm:$0xf]
  %v92 = vld [vmem:[%s1 + $0xb8] sm:$0xf]
  %v93 = vld [vmem:[%s1 + $0xbc] sm:$0xf]
  %v94 = vld [vmem:[%s1 + $0xc0] sm:$0xf]
  %v95 = vld [vmem:[%s1 + $0xc4] sm:$0xf]
  %v96 = vld [vmem:[%s1 + $0xc8] sm:$0xf]
  %v97 = vld [vmem:[%s1 + $0xcc] sm:$0xf]
  %v98 = vld [vmem:[%s1 + $0xd0] sm:$0xf]
  %v99 = vld [vmem:[%s1 + $0xd4] sm:$0xf]
  %v100 = vld [vmem:[%s1 + $0xd8] sm:$0xf]
  %v101 = vld [vmem:[%s1 + $0xdc] sm:$0xf]
  %v102 = vld [vmem:[%s1 + $0xe0] sm:$0xf]
  %v103 = vld [vmem:[%s1 + $0xe4] sm:$0xf]
  %v104 = vld [vmem:[%s1 + $0xe8] sm:$0xf]
  %v105 = vld [vmem:[%s1 + $0xec] sm:$0xf]
  %v106 = vld [vmem:[%s1 + $0xf0] sm:$0xf]
  %v107 = vld [vmem:[%s1 + $0xf4] sm:$0xf]
  %v108 = vld [vmem:[%s1 + $0xf8] sm:$0xf]
  %v109 = vld [vmem:[%s1 + $0xfc] sm:$0xf]
  %v118 = vunpack.c.l.b16 %v38
  %v119 = vunpack.c.h.b16 %v38
  %v120 = vunpack.c.l.b16 %v39
  %v121 = vunpack.c.h.b16 %v39
  %v122 = vunpack.c.l.b16 %v40
  %v123 = vunpack.c.h.b16 %v40
  %v124 = vunpack.c.l.b16 %v41
  %v125 = vunpack.c.h.b16 %v41
  %v126 = vunpack.c.l.b16 %v42
  %v127 = vunpack.c.h.b16 %v42
  %v128 = vunpack.c.l.b16 %v43
  %v129 = vunpack.c.h.b16 %v43
  %v130 = vunpack.c.l.b16 %v44
  %v131 = vunpack.c.h.b16 %v44
  %v132 = vunpack.c.l.b16 %v45
  %v133 = vunpack.c.h.b16 %v45
  %v134 = vpack.c.b16 %v122, %v118
  %v135 = vpack.c.b16 %v123, %v119
  %v136 = vpack.c.b16 %v124, %v120
  %v137 = vpack.c.b16 %v125, %v121
  %v138 = vpack.c.b16 %v130, %v126
  %v139 = vpack.c.b16 %v131, %v127
  %v140 = vpack.c.b16 %v132, %v128
  %v141 = vpack.c.b16 %v133, %v129
  %v214 = vunpack.c.l.b16 %v46
  %v215 = vunpack.c.l.b16 %v47
  %v216 = vunpack.c.l.b16 %v48
  %v217 = vunpack.c.l.b16 %v49
  %v218 = vunpack.c.l.b16 %v50
  %v219 = vunpack.c.l.b16 %v51
  %v220 = vunpack.c.l.b16 %v52
  %v221 = vunpack.c.l.b16 %v53
  %v222 = vunpack.c.l.b16 %v54
  %v223 = vunpack.c.l.b16 %v55
  %v224 = vunpack.c.l.b16 %v56
  %v225 = vunpack.c.l.b16 %v57
  %v226 = vunpack.c.l.b16 %v58
  %v227 = vunpack.c.l.b16 %v59
  %v228 = vunpack.c.l.b16 %v60
  %v229 = vunpack.c.l.b16 %v61
  %v230 = vunpack.c.l.b16 %v62
  %v231 = vunpack.c.l.b16 %v63
  %v232 = vunpack.c.l.b16 %v64
  %v233 = vunpack.c.l.b16 %v65
  %v234 = vunpack.c.l.b16 %v66
  %v235 = vunpack.c.l.b16 %v67
  %v236 = vunpack.c.l.b16 %v68
  %v237 = vunpack.c.l.b16 %v69
  %v238 = vunpack.c.l.b16 %v70
  %v239 = vunpack.c.l.b16 %v71
  %v240 = vunpack.c.l.b16 %v72
  %v241 = vunpack.c.l.b16 %v73
  %v242 = vunpack.c.l.b16 %v74
  %v243 = vunpack.c.l.b16 %v75
  %v244 = vunpack.c.l.b16 %v76
  %v245 = vunpack.c.l.b16 %v77
  %v246 = vunpack.c.l.b16 %v78
  %v247 = vunpack.c.l.b16 %v79
  %v248 = vunpack.c.l.b16 %v80
  %v249 = vunpack.c.l.b16 %v81
  %v250 = vunpack.c.l.b16 %v82
  %v251 = vunpack.c.l.b16 %v83
  %v252 = vunpack.c.l.b16 %v84
  %v253 = vunpack.c.l.b16 %v85
  %v254 = vunpack.c.l.b16 %v86
  %v255 = vunpack.c.l.b16 %v87
  %v256 = vunpack.c.l.b16 %v88
  %v257 = vunpack.c.l.b16 %v89
  %v258 = vunpack.c.l.b16 %v90
  %v259 = vunpack.c.l.b16 %v91
  %v260 = vunpack.c.l.b16 %v92
  %v261 = vunpack.c.l.b16 %v93
  %v262 = vunpack.c.l.b16 %v94
  %v263 = vunpack.c.l.b16 %v95
  %v264 = vunpack.c.l.b16 %v96
  %v265 = vunpack.c.l.b16 %v97
  %v266 = vunpack.c.l.b16 %v98
  %v267 = vunpack.c.l.b16 %v99
  %v268 = vunpack.c.l.b16 %v100
  %v269 = vunpack.c.l.b16 %v101
  %v270 = vunpack.c.l.b16 %v102
  %v271 = vunpack.c.l.b16 %v103
  %v272 = vunpack.c.l.b16 %v104
  %v273 = vunpack.c.l.b16 %v105
  %v274 = vunpack.c.l.b16 %v106
  %v275 = vunpack.c.l.b16 %v107
  %v276 = vunpack.c.l.b16 %v108
  %v277 = vunpack.c.l.b16 %v109
  %v278 = vpack.c.b16 %v215, %v214
  %v279 = vpack.c.b16 %v217, %v216
  %v280 = vpack.c.b16 %v219, %v218
  %v281 = vpack.c.b16 %v221, %v220
  %v282 = vpack.c.b16 %v223, %v222
  %v283 = vpack.c.b16 %v225, %v224
  %v284 = vpack.c.b16 %v227, %v226
  %v285 = vpack.c.b16 %v229, %v228
  %v286 = vpack.c.b16 %v231, %v230
  %v287 = vpack.c.b16 %v233, %v232
  %v288 = vpack.c.b16 %v235, %v234
  %v289 = vpack.c.b16 %v237, %v236
  %v290 = vpack.c.b16 %v239, %v238
  %v291 = vpack.c.b16 %v241, %v240
  %v292 = vpack.c.b16 %v243, %v242
  %v293 = vpack.c.b16 %v245, %v244
  %v294 = vpack.c.b16 %v247, %v246
  %v295 = vpack.c.b16 %v249, %v248
  %v296 = vpack.c.b16 %v251, %v250
  %v297 = vpack.c.b16 %v253, %v252
  %v298 = vpack.c.b16 %v255, %v254
  %v299 = vpack.c.b16 %v257, %v256
  %v300 = vpack.c.b16 %v259, %v258
  %v301 = vpack.c.b16 %v261, %v260
  %v302 = vpack.c.b16 %v263, %v262
  %v303 = vpack.c.b16 %v265, %v264
  %v304 = vpack.c.b16 %v267, %v266
  %v305 = vpack.c.b16 %v269, %v268
  %v306 = vpack.c.b16 %v271, %v270
  %v307 = vpack.c.b16 %v273, %v272
  %v308 = vpack.c.b16 %v275, %v274
  %v309 = vpack.c.b16 %v277, %v276
  %342 = vmatprep.subr.bf16.mxu0 0
  %343 = vmatpush1.bf16.msra.mxu0 %v285
  %344 = vmatprep.subr.bf16.mxu0 0
  %345 = vmatpush1.bf16.msra.mxu0 %v284
  %346 = vmatprep.subr.bf16.mxu0 0
  %347 = vmatpush1.bf16.msra.mxu0 %v283
  %348 = vmatprep.subr.bf16.mxu0 0
  %349 = vmatpush1.bf16.msra.mxu0 %v282
  %350 = vmatprep.subr.bf16.mxu0 0
  %351 = vmatpush1.bf16.msra.mxu0 %v281
  %352 = vmatprep.subr.bf16.mxu0 0
  %353 = vmatpush1.bf16.msra.mxu0 %v280
  %354 = vmatprep.subr.bf16.mxu0 0
  %355 = vmatpush1.bf16.msra.mxu0 %v279
  %356 = vmatprep.subr.bf16.mxu0 0
  %357 = vmatpush1.bf16.msra.mxu0 %v278
  %358 = vmatprep.subr.bf16.mxu0 0
  %359 = vmatpush2.bf16.msra.mxu0 %v293
  %360 = vmatprep.subr.bf16.mxu0 0
  %361 = vmatpush2.bf16.msra.mxu0 %v292
  %362 = vmatprep.subr.bf16.mxu0 0
  %363 = vmatpush2.bf16.msra.mxu0 %v291
  %364 = vmatprep.subr.bf16.mxu0 0
  %365 = vmatpush2.bf16.msra.mxu0 %v290
  %366 = vmatprep.subr.bf16.mxu0 0
  %367 = vmatpush2.bf16.msra.mxu0 %v289
  %368 = vmatprep.subr.bf16.mxu0 0
  %369 = vmatpush2.bf16.msra.mxu0 %v288
  %370 = vmatprep.subr.bf16.mxu0 0
  %371 = vmatpush2.bf16.msra.mxu0 %v287
  %372 = vmatprep.subr.bf16.mxu0 0
  %373 = vmatpush2.bf16.msra.mxu0 %v286
  %374 = vmatprep.mubr.bf16.mxu0 %v135
  %375 = vmatmul.mubr.bf16.gmra.mxu0 %v134
  %v376 = vpop.f32.mrf.mxu0
  %v377 = vadd.f32 0.0, %v376
  %v378 = vpop.f32.mrf.mxu0
  %v379 = vpop.f32.mrf.mxu0
  %v380 = vadd.f32 0.0, %v379
  %v381 = vpop.f32.mrf.mxu0
  %382 = vmatprep.mubr.bf16.mxu0 %v139
  %383 = vmatmul.mubr.bf16.gmra.mxu0 %v138
  %v384 = vpop.f32.mrf.mxu0
  %v385 = vadd.f32 0.0, %v384
  %v386 = vpop.f32.mrf.mxu0
  %v387 = vpop.f32.mrf.mxu0
  %v388 = vadd.f32 0.0, %v387
  %v389 = vpop.f32.mrf.mxu0
  %390 = vdwg.mxu0
  %391 = vmatprep.subr.bf16.mxu0 0
  %392 = vmatpush1.bf16.msra.mxu0 %v301
  %393 = vmatprep.subr.bf16.mxu0 0
  %394 = vmatpush1.bf16.msra.mxu0 %v300
  %395 = vmatprep.subr.bf16.mxu0 0
  %396 = vmatpush1.bf16.msra.mxu0 %v299
  %397 = vmatprep.subr.bf16.mxu0 0
  %398 = vmatpush1.bf16.msra.mxu0 %v298
  %399 = vmatprep.subr.bf16.mxu0 0
  %400 = vmatpush1.bf16.msra.mxu0 %v297
  %401 = vmatprep.subr.bf16.mxu0 0
  %402 = vmatpush1.bf16.msra.mxu0 %v296
  %403 = vmatprep.subr.bf16.mxu0 0
  %404 = vmatpush1.bf16.msra.mxu0 %v295
  %405 = vmatprep.subr.bf16.mxu0 0
  %406 = vmatpush1.bf16.msra.mxu0 %v294
  %407 = vmatprep.subr.bf16.mxu0 0
  %408 = vmatpush2.bf16.msra.mxu0 %v309
  %409 = vmatprep.subr.bf16.mxu0 0
  %410 = vmatpush2.bf16.msra.mxu0 %v308
  %411 = vmatprep.subr.bf16.mxu0 0
  %412 = vmatpush2.bf16.msra.mxu0 %v307
  %413 = vmatprep.subr.bf16.mxu0 0
  %414 = vmatpush2.bf16.msra.mxu0 %v306
  %415 = vmatprep.subr.bf16.mxu0 0
  %416 = vmatpush2.bf16.msra.mxu0 %v305
  %417 = vmatprep.subr.bf16.mxu0 0
  %418 = vmatpush2.bf16.msra.mxu0 %v304
  %419 = vmatprep.subr.bf16.mxu0 0
  %420 = vmatpush2.bf16.msra.mxu0 %v303
  %421 = vmatprep.subr.bf16.mxu0 0
  %422 = vmatpush2.bf16.msra.mxu0 %v302
  %423 = vmatprep.mubr.bf16.mxu0 %v137
  %424 = vmatmul.mubr.bf16.gmra.mxu0 %v136
  %v425 = vpop.f32.mrf.mxu0
  %v426 = vadd.f32 %v377, %v425
  %v427 = vpop.f32.mrf.mxu0
  %v428 = vpop.f32.mrf.mxu0
  %v429 = vadd.f32 %v380, %v428
  %v430 = vpop.f32.mrf.mxu0
  %431 = vmatprep.mubr.bf16.mxu0 %v141
  %432 = vmatmul.mubr.bf16.gmra.mxu0 %v140
  %v433 = vpop.f32.mrf.mxu0
  %v434 = vadd.f32 %v385, %v433
  %v435 = vpop.f32.mrf.mxu0
  %v436 = vpop.f32.mrf.mxu0
  %v437 = vadd.f32 %v388, %v436
  %v438 = vpop.f32.mrf.mxu0
  %439 = vdwg.mxu0
  %v440 = vadd.f32 %v34, %v426
  %v441 = vadd.f32 %v35, %v429
  %v442 = vadd.f32 %v36, %v434
  %v443 = vadd.f32 %v37, %v437
  %444 = vst [vmem:[%s6] sm:$0xff] %v440
  %445 = vst [vmem:[%s6 + $0x8] sm:$0xff] %v441
  %446 = vst [vmem:[%s6 + $0x10] sm:$0xff] %v442
  %447 = vst [vmem:[%s6 + $0x18] sm:$0xff] %v443
  // Predicated region
  $region30: #{forward.19} parent=0 // pred_check
    %p448 = pneg %p26
  $region31: #{forward.19} parent=0 // pred_check_branch
    %450 = sbr.rel (%p448) target = $region33
  $region32: #{forward.19} parent=0 // pred_region
    %v451 = vld [vmem:[%s3] sm:$0xff]
    %v452 = vld [vmem:[%s3 + $0x8] sm:$0xff]
    %v453 = vld [vmem:[%s3 + $0x10] sm:$0xff]
    %v454 = vld [vmem:[%s3 + $0x18] sm:$0xff]
    %v455 = vld [vmem:[%s2] sm:$0xf]
    %v456 = vld [vmem:[%s2 + $0x4] sm:$0xf]
    %v457 = vld [vmem:[%s2 + $0x8] sm:$0xf]
    %v458 = vld [vmem:[%s2 + $0xc] sm:$0xf]
    %v459 = vunpack.c.l.bf16 %v455
    %v460 = vunpack.c.l.bf16 %v456
    %v461 = vunpack.c.l.bf16 %v457
    %v462 = vunpack.c.l.bf16 %v458
    %v463 = vld [vmem:[%s6] sm:$0xff]
    %v464 = vld [vmem:[%s6 + $0x8] sm:$0xff]
    %v465 = vld [vmem:[%s6 + $0x10] sm:$0xff]
    %v466 = vld [vmem:[%s6 + $0x18] sm:$0xff]
    %v467 = vmul.f32 %v459, %v463
    %v468 = vmul.f32 %v460, %v464
    %v469 = vmul.f32 %v461, %v465
    %v470 = vmul.f32 %v462, %v466
    %v471 = vadd.f32 %v451, %v467
    %v472 = vadd.f32 %v452, %v468
    %v473 = vadd.f32 %v453, %v469
    %v474 = vadd.f32 %v454, %v470
    %475 = vst [vmem:[%s6] sm:$0xff] %v471
    %476 = vst [vmem:[%s6 + $0x8] sm:$0xff] %v472
    %477 = vst [vmem:[%s6 + $0x10] sm:$0xff] %v473
    %478 = vst [vmem:[%s6 + $0x18] sm:$0xff] %v474
    %479 = vadd.xlane.f32.xlu0 %v471
    %v480 = vpop.xlane.xlu0 %479
    %481 = vadd.xlane.f32.xlu0 %v472
    %v482 = vpop.xlane.xlu0 %481
    %483 = vadd.xlane.f32.xlu0 %v473
    %v484 = vpop.xlane.xlu0 %483
    %485 = vadd.xlane.f32.xlu0 %v474
    %v486 = vpop.xlane.xlu0 %485
    %v487 = vrcp.pop 128.0
    %v488 = vmul.f32 %v480, %v487
    %v489 = vmul.f32 %v482, %v487
    %v490 = vmul.f32 %v484, %v487
    %v491 = vmul.f32 %v486, %v487
    %v492 = vsub.f32 %v471, %v488
    %v493 = vsub.f32 %v472, %v489
    %v494 = vsub.f32 %v473, %v490
    %v495 = vsub.f32 %v474, %v491
    %v496 = vmul.f32 %v492, %v492
    %v497 = vmul.f32 %v493, %v493
    %v498 = vmul.f32 %v494, %v494
    %v499 = vmul.f32 %v495, %v495
    %500 = vadd.xlane.f32.xlu0 %v496
    %v501 = vpop.xlane.xlu0 %500
    %502 = vadd.xlane.f32.xlu0 %v497
    %v503 = vpop.xlane.xlu0 %502
    %504 = vadd.xlane.f32.xlu0 %v498
    %v505 = vpop.xlane.xlu0 %504
    %506 = vadd.xlane.f32.xlu0 %v499
    %v507 = vpop.xlane.xlu0 %506
    %v508 = vmul.f32 %v501, %v487
    %v509 = vmul.f32 %v503, %v487
    %v510 = vmul.f32 %v505, %v487
    %v511 = vmul.f32 %v507, %v487
    %v512 = vadd.f32 %v508, 1e-05
    %v513 = vadd.f32 %v509, 1e-05
    %v514 = vadd.f32 %v510, 1e-05
    %v515 = vadd.f32 %v511, 1e-05
    %v516 = vrsqrt.pop %v512
    %v517 = vrsqrt.pop %v513
    %v518 = vrsqrt.pop %v514
    %v519 = vrsqrt.pop %v515
    %v520 = vmul.f32 %v492, %v516
    %v521 = vmul.f32 %v493, %v517
    %v522 = vmul.f32 %v494, %v518
    %v523 = vmul.f32 %v495, %v519
    %v524 = vld [vmem:[%s4] sm:$0x1]
    %v526 = vlaneseq
    %v527 = vshrl.u32 %v526, 7
    %v528 = vsub.s32 0, %v527
    %v529 = vrot.slane %v524, %v528
    %v531 = vmul.f32 %v520, %v529
    %v532 = vmul.f32 %v521, %v529
    %v533 = vmul.f32 %v522, %v529
    %v534 = vmul.f32 %v523, %v529
    %v535 = vld [vmem:[%s5] sm:$0x1]
    %v537 = vlaneseq
    %v538 = vshrl.u32 %v537, 7
    %v539 = vsub.s32 0, %v538
    %v540 = vrot.slane %v535, %v539
    %v542 = vadd.f32 %v531, %v540
    %v543 = vadd.f32 %v532, %v540
    %v544 = vadd.f32 %v533, %v540
    %v545 = vadd.f32 %v534, %v540
    %v546 = vpack.c.bf16 %v543, %v542
    %v547 = vpack.c.bf16 %v545, %v544
    %v550 = vunpack.c.l.b16 %v546
    %v551 = vunpack.c.h.b16 %v546
    %v552 = vunpack.c.l.b16 %v547
    %v553 = vunpack.c.h.b16 %v547
    %v554 = vpack.c.b16 %v550, %v550
    %v555 = vpack.c.b16 %v551, %v551
    %v556 = vpack.c.b16 %v552, %v552
    %v557 = vpack.c.b16 %v553, %v553
    %562 = vst [vmem:[%s7] sm:$0xf] %v554
    %563 = vst [vmem:[%s7 + $0x4] sm:$0xf] %v555
    %564 = vst [vmem:[%s7 + $0x8] sm:$0xf] %v556
    %565 = vst [vmem:[%s7 + $0xc] sm:$0xf] %v557
  $region33: #{forward.19} parent=0 // pred_fallthru
    _
  // Predicated region
  $region34: #{forward.19} parent=0 // pred_check
    _
  $region35: #{forward.19} parent=0 // pred_check_branch
    %567 = sbr.rel (0) target = $region37
  $region36: #{forward.19} parent=0 // pred_region
    _
  $region37: #{forward.19} parent=0 // pred_fallthru
    _
  // Predicated region
  $region38: #{forward.19} parent=0 // pred_check
    _
  $region39: #{forward.19} parent=0 // pred_check_branch
    %569 = sbr.rel (0) target = $region41
  $region40: #{forward.19} parent=0 // pred_region
    _
  $region41: #{forward.19} parent=0 // pred_fallthru
    _
  // Predicated region
  $region42: #{forward.19} parent=0 // pred_check
    _
  $region43: #{forward.19} parent=0 // pred_check_branch
    %571 = sbr.rel (0) target = $region45
  $region44: #{forward.19} parent=0 // pred_region
    _
  $region45: #{forward.19} parent=0 // pred_fallthru
    _
  // Predicated region
  $region46: #{forward.19} parent=0 // pred_check
    _
  $region47: #{forward.19} parent=0 // pred_check_branch
    %573 = sbr.rel (0) target = $region49
  $region48: #{forward.19} parent=0 // pred_region
    _
  $region49: #{forward.19} parent=0 // pred_fallthru
    _

// kernel: forward.24
$region0: #{forward.24}
  #allocation0 [shape = 'u32[]', space=smem, size = 0x4, offset = 0x4, fixed_abs, tag = 'smem constant byte address 0x4 - core index']
  #allocation1 [shape = 'u32[144,128]{1,0:T(1,128)}', space=vmem, size = 0x12000, scoped, tag = 'internal scratch']
  %s0 = inlined_call_operand.vmem [shape: bf16[32,512], index: 0, kind: input, shape index: {}]
  %s1 = inlined_call_operand.vmem [shape: bf16[512,128], index: 1, kind: input, shape index: {}]
  %s2 = inlined_call_operand.vmem [shape: bf16[32,128], index: 2, kind: input, shape index: {}]
  %s3 = inlined_call_operand.vmem [shape: f32[32,128], index: 3, kind: input, shape index: {}]
  %s4 = inlined_call_operand.vmem [shape: f32[1,128], index: 4, kind: input, shape index: {}]
  %s5 = inlined_call_operand.vmem [shape: f32[1,128], index: 5, kind: input, shape index: {}]
  %s6 = inlined_call_operand.hbm [shape: f32[32,128], index: 6, kind: output, shape index: {0}]
  %s7 = inlined_call_operand.vmem [shape: bf16[32,128], index: 7, kind: output, shape index: {1}]
  %8 = xla_tuple %s6, %s7
  %s9 = sld [smem:[#allocation0]]
  $region50: #{forward.24} parent=0
    _
  %s11 = ssub.s32 1, %s9
  %s12 = scalar_select 0, %s11, %s9
  $region1: #{forward.24} parent=0
    #allocation2 [shape = 'u8[16384]{0}', space=vmem, size = 0x4000, scoped, tag = 'output window, operand 0, single buffered']
    #allocation3 [shape = 's32[1]{0}', space=sflag, size = 0x4, scoped, tag = 'scoped memory for forward.24']
    %13 = vsyncpa [#allocation3], 0
    // Predicated region
    $region2: #{forward.24} parent=1 // pred_check
      _
    $region3: #{forward.24} parent=1 // pred_check_branch
      %15 = sbr.rel (0) target = $region5
    $region4: #{forward.24} parent=1 // pred_region
      _
    $region5: #{forward.24} parent=1 // pred_fallthru
      _
    // Predicated region
    $region6: #{forward.24} parent=1 // pred_check
      _
    $region7: #{forward.24} parent=1 // pred_check_branch
      %17 = sbr.rel (0) target = $region9
    $region8: #{forward.24} parent=1 // pred_region
      _
    $region9: #{forward.24} parent=1 // pred_fallthru
      _
    // Predicated region
    $region10: #{forward.24} parent=1 // pred_check
      _
    $region11: #{forward.24} parent=1 // pred_check_branch
      %19 = sbr.rel (0) target = $region13
    $region12: #{forward.24} parent=1 // pred_region
      _
    $region13: #{forward.24} parent=1 // pred_fallthru
      _
    // Predicated region
    $region14: #{forward.24} parent=1 // pred_check
      _
    $region15: #{forward.24} parent=1 // pred_check_branch
      %21 = sbr.rel (0) target = $region17
    $region16: #{forward.24} parent=1 // pred_region
      _
    $region17: #{forward.24} parent=1 // pred_fallthru
      _
    // Predicated region
    $region18: #{forward.24} parent=1 // pred_check
      _
    $region19: #{forward.24} parent=1 // pred_check_branch
      %23 = sbr.rel (0) target = $region21
    $region20: #{forward.24} parent=1 // pred_region
      _
    $region21: #{forward.24} parent=1 // pred_fallthru
      _
    // Predicated region
    $region22: #{forward.24} parent=1 // pred_check
      _
    $region23: #{forward.24} parent=1 // pred_check_branch
      %25 = sbr.rel (0) target = $region25
    $region24: #{forward.24} parent=1 // pred_region
      _
    $region25: #{forward.24} parent=1 // pred_fallthru
      _
    %p27 = scmp.eq.s32.totalorder 0, 0
    // Predicated region
    $region26: #{forward.24} parent=1 // pred_check
      %p28 = pneg %p27
    $region27: #{forward.24} parent=1 // pred_check_branch
      %30 = sbr.rel (%p28) target = $region29
    $region28: #{forward.24} parent=1 // pred_region
      %31 = vst [vmem:[#allocation2] sm:$0xff] 0.0
      %32 = vst [vmem:[#allocation2 + $0x8] sm:$0xff] 0.0
      %33 = vst [vmem:[#allocation2 + $0x10] sm:$0xff] 0.0
      %34 = vst [vmem:[#allocation2 + $0x18] sm:$0xff] 0.0
    $region29: #{forward.24} parent=1 // pred_fallthru
      _
    %v35 = vld [vmem:[#allocation2] sm:$0xff]
    %v36 = vld [vmem:[#allocation2 + $0x8] sm:$0xff]
    %v37 = vld [vmem:[#allocation2 + $0x10] sm:$0xff]
    %v38 = vld [vmem:[#allocation2 + $0x18] sm:$0xff]
    %v39 = vld [vmem:[%s0] sm:$0xff]
    %v40 = vld [vmem:[%s0 + $0x8] sm:$0xff]
    %v41 = vld [vmem:[%s0 + $0x10] sm:$0xff]
    %v42 = vld [vmem:[%s0 + $0x18] sm:$0xff]
    %v43 = vld [vmem:[%s0 + $0x20] sm:$0xff]
    %v44 = vld [vmem:[%s0 + $0x28] sm:$0xff]
    %v45 = vld [vmem:[%s0 + $0x30] sm:$0xff]
    %v46 = vld [vmem:[%s0 + $0x38] sm:$0xff]
    %v47 = vld [vmem:[%s1] sm:$0xf]
    %v48 = vld [vmem:[%s1 + $0x4] sm:$0xf]
    %v49 = vld [vmem:[%s1 + $0x8] sm:$0xf]
    %v50 = vld [vmem:[%s1 + $0xc] sm:$0xf]
    %v51 = vld [vmem:[%s1 + $0x10] sm:$0xf]
    %v52 = vld [vmem:[%s1 + $0x14] sm:$0xf]
    %v53 = vld [vmem:[%s1 + $0x18] sm:$0xf]
    %v54 = vld [vmem:[%s1 + $0x1c] sm:$0xf]
    %v55 = vld [vmem:[%s1 + $0x20] sm:$0xf]
    %v56 = vld [vmem:[%s1 + $0x24] sm:$0xf]
    %v57 = vld [vmem:[%s1 + $0x28] sm:$0xf]
    %v58 = vld [vmem:[%s1 + $0x2c] sm:$0xf]
    %v59 = vld [vmem:[%s1 + $0x30] sm:$0xf]
    %v60 = vld [vmem:[%s1 + $0x34] sm:$0xf]
    %v61 = vld [vmem:[%s1 + $0x38] sm:$0xf]
    %v62 = vld [vmem:[%s1 + $0x3c] sm:$0xf]
    %v63 = vld [vmem:[%s1 + $0x40] sm:$0xf]
    %v64 = vld [vmem:[%s1 + $0x44] sm:$0xf]
    %v65 = vld [vmem:[%s1 + $0x48] sm:$0xf]
    %v66 = vld [vmem:[%s1 + $0x4c] sm:$0xf]
    %v67 = vld [vmem:[%s1 + $0x50] sm:$0xf]
    %v68 = vld [vmem:[%s1 + $0x54] sm:$0xf]
    %v69 = vld [vmem:[%s1 + $0x58] sm:$0xf]
    %v70 = vld [vmem:[%s1 + $0x5c] sm:$0xf]
    %v71 = vld [vmem:[%s1 + $0x60] sm:$0xf]
    %v72 = vld [vmem:[%s1 + $0x64] sm:$0xf]
    %v73 = vld [vmem:[%s1 + $0x68] sm:$0xf]
    %v74 = vld [vmem:[%s1 + $0x6c] sm:$0xf]
    %v75 = vld [vmem:[%s1 + $0x70] sm:$0xf]
    %v76 = vld [vmem:[%s1 + $0x74] sm:$0xf]
    %v77 = vld [vmem:[%s1 + $0x78] sm:$0xf]
    %v78 = vld [vmem:[%s1 + $0x7c] sm:$0xf]
    %v79 = vld [vmem:[%s1 + $0x80] sm:$0xf]
    %v80 = vld [vmem:[%s1 + $0x84] sm:$0xf]
    %v81 = vld [vmem:[%s1 + $0x88] sm:$0xf]
    %v82 = vld [vmem:[%s1 + $0x8c] sm:$0xf]
    %v83 = vld [vmem:[%s1 + $0x90] sm:$0xf]
    %v84 = vld [vmem:[%s1 + $0x94] sm:$0xf]
    %v85 = vld [vmem:[%s1 + $0x98] sm:$0xf]
    %v86 = vld [vmem:[%s1 + $0x9c] sm:$0xf]
    %v87 = vld [vmem:[%s1 + $0xa0] sm:$0xf]
    %v88 = vld [vmem:[%s1 + $0xa4] sm:$0xf]
    %v89 = vld [vmem:[%s1 + $0xa8] sm:$0xf]
    %v90 = vld [vmem:[%s1 + $0xac] sm:$0xf]
    %v91 = vld [vmem:[%s1 + $0xb0] sm:$0xf]
    %v92 = vld [vmem:[%s1 + $0xb4] sm:$0xf]
    %v93 = vld [vmem:[%s1 + $0xb8] sm:$0xf]
    %v94 = vld [vmem:[%s1 + $0xbc] sm:$0xf]
    %v95 = vld [vmem:[%s1 + $0xc0] sm:$0xf]
    %v96 = vld [vmem:[%s1 + $0xc4] sm:$0xf]
    %v97 = vld [vmem:[%s1 + $0xc8] sm:$0xf]
    %v98 = vld [vmem:[%s1 + $0xcc] sm:$0xf]
    %v99 = vld [vmem:[%s1 + $0xd0] sm:$0xf]
    %v100 = vld [vmem:[%s1 + $0xd4] sm:$0xf]
    %v101 = vld [vmem:[%s1 + $0xd8] sm:$0xf]
    %v102 = vld [vmem:[%s1 + $0xdc] sm:$0xf]
    %v103 = vld [vmem:[%s1 + $0xe0] sm:$0xf]
    %v104 = vld [vmem:[%s1 + $0xe4] sm:$0xf]
    %v105 = vld [vmem:[%s1 + $0xe8] sm:$0xf]
    %v106 = vld [vmem:[%s1 + $0xec] sm:$0xf]
    %v107 = vld [vmem:[%s1 + $0xf0] sm:$0xf]
    %v108 = vld [vmem:[%s1 + $0xf4] sm:$0xf]
    %v109 = vld [vmem:[%s1 + $0xf8] sm:$0xf]
    %v110 = vld [vmem:[%s1 + $0xfc] sm:$0xf]
    %v119 = vunpack.c.l.b16 %v39
    %v120 = vunpack.c.h.b16 %v39
    %v121 = vunpack.c.l.b16 %v40
    %v122 = vunpack.c.h.b16 %v40
    %v123 = vunpack.c.l.b16 %v41
    %v124 = vunpack.c.h.b16 %v41
    %v125 = vunpack.c.l.b16 %v42
    %v126 = vunpack.c.h.b16 %v42
    %v127 = vunpack.c.l.b16 %v43
    %v128 = vunpack.c.h.b16 %v43
    %v129 = vunpack.c.l.b16 %v44
    %v130 = vunpack.c.h.b16 %v44
    %v131 = vunpack.c.l.b16 %v45
    %v132 = vunpack.c.h.b16 %v45
    %v133 = vunpack.c.l.b16 %v46
    %v134 = vunpack.c.h.b16 %v46
    %v135 = vpack.c.b16 %v123, %v119
    %v136 = vpack.c.b16 %v124, %v120
    %v137 = vpack.c.b16 %v125, %v121
    %v138 = vpack.c.b16 %v126, %v122
    %v139 = vpack.c.b16 %v131, %v127
    %v140 = vpack.c.b16 %v132, %v128
    %v141 = vpack.c.b16 %v133, %v129
    %v142 = vpack.c.b16 %v134, %v130
    %v215 = vunpack.c.l.b16 %v47
    %v216 = vunpack.c.l.b16 %v48
    %v217 = vunpack.c.l.b16 %v49
    %v218 = vunpack.c.l.b16 %v50
    %v219 = vunpack.c.l.b16 %v51
    %v220 = vunpack.c.l.b16 %v52
    %v221 = vunpack.c.l.b16 %v53
    %v222 = vunpack.c.l.b16 %v54
    %v223 = vunpack.c.l.b16 %v55
    %v224 = vunpack.c.l.b16 %v56
    %v225 = vunpack.c.l.b16 %v57
    %v226 = vunpack.c.l.b16 %v58
    %v227 = vunpack.c.l.b16 %v59
    %v228 = vunpack.c.l.b16 %v60
    %v229 = vunpack.c.l.b16 %v61
    %v230 = vunpack.c.l.b16 %v62
    %v231 = vunpack.c.l.b16 %v63
    %v232 = vunpack.c.l.b16 %v64
    %v233 = vunpack.c.l.b16 %v65
    %v234 = vunpack.c.l.b16 %v66
    %v235 = vunpack.c.l.b16 %v67
    %v236 = vunpack.c.l.b16 %v68
    %v237 = vunpack.c.l.b16 %v69
    %v238 = vunpack.c.l.b16 %v70
    %v239 = vunpack.c.l.b16 %v71
    %v240 = vunpack.c.l.b16 %v72
    %v241 = vunpack.c.l.b16 %v73
    %v242 = vunpack.c.l.b16 %v74
    %v243 = vunpack.c.l.b16 %v75
    %v244 = vunpack.c.l.b16 %v76
    %v245 = vunpack.c.l.b16 %v77
    %v246 = vunpack.c.l.b16 %v78
    %v247 = vunpack.c.l.b16 %v79
    %v248 = vunpack.c.l.b16 %v80
    %v249 = vunpack.c.l.b16 %v81
    %v250 = vunpack.c.l.b16 %v82
    %v251 = vunpack.c.l.b16 %v83
    %v252 = vunpack.c.l.b16 %v84
    %v253 = vunpack.c.l.b16 %v85
    %v254 = vunpack.c.l.b16 %v86
    %v255 = vunpack.c.l.b16 %v87
    %v256 = vunpack.c.l.b16 %v88
    %v257 = vunpack.c.l.b16 %v89
    %v258 = vunpack.c.l.b16 %v90
    %v259 = vunpack.c.l.b16 %v91
    %v260 = vunpack.c.l.b16 %v92
    %v261 = vunpack.c.l.b16 %v93
    %v262 = vunpack.c.l.b16 %v94
    %v263 = vunpack.c.l.b16 %v95
    %v264 = vunpack.c.l.b16 %v96
    %v265 = vunpack.c.l.b16 %v97
    %v266 = vunpack.c.l.b16 %v98
    %v267 = vunpack.c.l.b16 %v99
    %v268 = vunpack.c.l.b16 %v100
    %v269 = vunpack.c.l.b16 %v101
    %v270 = vunpack.c.l.b16 %v102
    %v271 = vunpack.c.l.b16 %v103
    %v272 = vunpack.c.l.b16 %v104
    %v273 = vunpack.c.l.b16 %v105
    %v274 = vunpack.c.l.b16 %v106
    %v275 = vunpack.c.l.b16 %v107
    %v276 = vunpack.c.l.b16 %v108
    %v277 = vunpack.c.l.b16 %v109
    %v278 = vunpack.c.l.b16 %v110
    %v279 = vpack.c.b16 %v216, %v215
    %v280 = vpack.c.b16 %v218, %v217
    %v281 = vpack.c.b16 %v220, %v219
    %v282 = vpack.c.b16 %v222, %v221
    %v283 = vpack.c.b16 %v224, %v223
    %v284 = vpack.c.b16 %v226, %v225
    %v285 = vpack.c.b16 %v228, %v227
    %v286 = vpack.c.b16 %v230, %v229
    %v287 = vpack.c.b16 %v232, %v231
    %v288 = vpack.c.b16 %v234, %v233
    %v289 = vpack.c.b16 %v236, %v235
    %v290 = vpack.c.b16 %v238, %v237
    %v291 = vpack.c.b16 %v240, %v239
    %v292 = vpack.c.b16 %v242, %v241
    %v293 = vpack.c.b16 %v244, %v243
    %v294 = vpack.c.b16 %v246, %v245
    %v295 = vpack.c.b16 %v248, %v247
    %v296 = vpack.c.b16 %v250, %v249
    %v297 = vpack.c.b16 %v252, %v251
    %v298 = vpack.c.b16 %v254, %v253
    %v299 = vpack.c.b16 %v256, %v255
    %v300 = vpack.c.b16 %v258, %v257
    %v301 = vpack.c.b16 %v260, %v259
    %v302 = vpack.c.b16 %v262, %v261
    %v303 = vpack.c.b16 %v264, %v263
    %v304 = vpack.c.b16 %v266, %v265
    %v305 = vpack.c.b16 %v268, %v267
    %v306 = vpack.c.b16 %v270, %v269
    %v307 = vpack.c.b16 %v272, %v271
    %v308 = vpack.c.b16 %v274, %v273
    %v309 = vpack.c.b16 %v276, %v275
    %v310 = vpack.c.b16 %v278, %v277
    %343 = vmatprep.subr.bf16.mxu0 0
    %344 = vmatpush1.bf16.msra.mxu0 %v286
    %345 = vmatprep.subr.bf16.mxu0 0
    %346 = vmatpush1.bf16.msra.mxu0 %v285
    %347 = vmatprep.subr.bf16.mxu0 0
    %348 = vmatpush1.bf16.msra.mxu0 %v284
    %349 = vmatprep.subr.bf16.mxu0 0
    %350 = vmatpush1.bf16.msra.mxu0 %v283
    %351 = vmatprep.subr.bf16.mxu0 0
    %352 = vmatpush1.bf16.msra.mxu0 %v282
    %353 = vmatprep.subr.bf16.mxu0 0
    %354 = vmatpush1.bf16.msra.mxu0 %v281
    %355 = vmatprep.subr.bf16.mxu0 0
    %356 = vmatpush1.bf16.msra.mxu0 %v280
    %357 = vmatprep.subr.bf16.mxu0 0
    %358 = vmatpush1.bf16.msra.mxu0 %v279
    %359 = vmatprep.subr.bf16.mxu0 0
    %360 = vmatpush2.bf16.msra.mxu0 %v294
    %361 = vmatprep.subr.bf16.mxu0 0
    %362 = vmatpush2.bf16.msra.mxu0 %v293
    %363 = vmatprep.subr.bf16.mxu0 0
    %364 = vmatpush2.bf16.msra.mxu0 %v292
    %365 = vmatprep.subr.bf16.mxu0 0
    %366 = vmatpush2.bf16.msra.mxu0 %v291
    %367 = vmatprep.subr.bf16.mxu0 0
    %368 = vmatpush2.bf16.msra.mxu0 %v290
    %369 = vmatprep.subr.bf16.mxu0 0
    %370 = vmatpush2.bf16.msra.mxu0 %v289
    %371 = vmatprep.subr.bf16.mxu0 0
    %372 = vmatpush2.bf16.msra.mxu0 %v288
    %373 = vmatprep.subr.bf16.mxu0 0
    %374 = vmatpush2.bf16.msra.mxu0 %v287
    %375 = vmatprep.mubr.bf16.mxu0 %v136
    %376 = vmatmul.mubr.bf16.gmra.mxu0 %v135
    %v377 = vpop.f32.mrf.mxu0
    %v378 = vadd.f32 0.0, %v377
    %v379 = vpop.f32.mrf.mxu0
    %v380 = vpop.f32.mrf.mxu0
    %v381 = vadd.f32 0.0, %v380
    %v382 = vpop.f32.mrf.mxu0
    %383 = vmatprep.mubr.bf16.mxu0 %v140
    %384 = vmatmul.mubr.bf16.gmra.mxu0 %v139
    %v385 = vpop.f32.mrf.mxu0
    %v386 = vadd.f32 0.0, %v385
    %v387 = vpop.f32.mrf.mxu0
    %v388 = vpop.f32.mrf.mxu0
    %v389 = vadd.f32 0.0, %v388
    %v390 = vpop.f32.mrf.mxu0
    %391 = vdwg.mxu0
    %392 = vmatprep.subr.bf16.mxu0 0
    %393 = vmatpush1.bf16.msra.mxu0 %v302
    %394 = vmatprep.subr.bf16.mxu0 0
    %395 = vmatpush1.bf16.msra.mxu0 %v301
    %396 = vmatprep.subr.bf16.mxu0 0
    %397 = vmatpush1.bf16.msra.mxu0 %v300
    %398 = vmatprep.subr.bf16.mxu0 0
    %399 = vmatpush1.bf16.msra.mxu0 %v299
    %400 = vmatprep.subr.bf16.mxu0 0
    %401 = vmatpush1.bf16.msra.mxu0 %v298
    %402 = vmatprep.subr.bf16.mxu0 0
    %403 = vmatpush1.bf16.msra.mxu0 %v297
    %404 = vmatprep.subr.bf16.mxu0 0
    %405 = vmatpush1.bf16.msra.mxu0 %v296
    %406 = vmatprep.subr.bf16.mxu0 0
    %407 = vmatpush1.bf16.msra.mxu0 %v295
    %408 = vmatprep.subr.bf16.mxu0 0
    %409 = vmatpush2.bf16.msra.mxu0 %v310
    %410 = vmatprep.subr.bf16.mxu0 0
    %411 = vmatpush2.bf16.msra.mxu0 %v309
    %412 = vmatprep.subr.bf16.mxu0 0
    %413 = vmatpush2.bf16.msra.mxu0 %v308
    %414 = vmatprep.subr.bf16.mxu0 0
    %415 = vmatpush2.bf16.msra.mxu0 %v307
    %416 = vmatprep.subr.bf16.mxu0 0
    %417 = vmatpush2.bf16.msra.mxu0 %v306
    %418 = vmatprep.subr.bf16.mxu0 0
    %419 = vmatpush2.bf16.msra.mxu0 %v305
    %420 = vmatprep.subr.bf16.mxu0 0
    %421 = vmatpush2.bf16.msra.mxu0 %v304
    %422 = vmatprep.subr.bf16.mxu0 0
    %423 = vmatpush2.bf16.msra.mxu0 %v303
    %424 = vmatprep.mubr.bf16.mxu0 %v138
    %425 = vmatmul.mubr.bf16.gmra.mxu0 %v137
    %v426 = vpop.f32.mrf.mxu0
    %v427 = vadd.f32 %v378, %v426
    %v428 = vpop.f32.mrf.mxu0
    %v429 = vpop.f32.mrf.mxu0
    %v430 = vadd.f32 %v381, %v429
    %v431 = vpop.f32.mrf.mxu0
    %432 = vmatprep.mubr.bf16.mxu0 %v142
    %433 = vmatmul.mubr.bf16.gmra.mxu0 %v141
    %v434 = vpop.f32.mrf.mxu0
    %v435 = vadd.f32 %v386, %v434
    %v436 = vpop.f32.mrf.mxu0
    %v437 = vpop.f32.mrf.mxu0
    %v438 = vadd.f32 %v389, %v437
    %v439 = vpop.f32.mrf.mxu0
    %440 = vdwg.mxu0
    %v441 = vadd.f32 %v35, %v427
    %v442 = vadd.f32 %v36, %v430
    %v443 = vadd.f32 %v37, %v435
    %v444 = vadd.f32 %v38, %v438
    %445 = vst [vmem:[#allocation2] sm:$0xff] %v441
    %446 = vst [vmem:[#allocation2 + $0x8] sm:$0xff] %v442
    %447 = vst [vmem:[#allocation2 + $0x10] sm:$0xff] %v443
    %448 = vst [vmem:[#allocation2 + $0x18] sm:$0xff] %v444
    // Predicated region
    $region30: #{forward.24} parent=1 // pred_check
      %p449 = pneg %p27
    $region31: #{forward.24} parent=1 // pred_check_branch
      %451 = sbr.rel (%p449) target = $region33
    $region32: #{forward.24} parent=1 // pred_region
      %v452 = vld [vmem:[%s3] sm:$0xff]
      %v453 = vld [vmem:[%s3 + $0x8] sm:$0xff]
      %v454 = vld [vmem:[%s3 + $0x10] sm:$0xff]
      %v455 = vld [vmem:[%s3 + $0x18] sm:$0xff]
      %v456 = vld [vmem:[%s2] sm:$0xf]
      %v457 = vld [vmem:[%s2 + $0x4] sm:$0xf]
      %v458 = vld [vmem:[%s2 + $0x8] sm:$0xf]
      %v459 = vld [vmem:[%s2 + $0xc] sm:$0xf]
      %v460 = vunpack.c.l.bf16 %v456
      %v461 = vunpack.c.l.bf16 %v457
      %v462 = vunpack.c.l.bf16 %v458
      %v463 = vunpack.c.l.bf16 %v459
      %v464 = vld [vmem:[#allocation2] sm:$0xff]
      %v465 = vld [vmem:[#allocation2 + $0x8] sm:$0xff]
      %v466 = vld [vmem:[#allocation2 + $0x10] sm:$0xff]
      %v467 = vld [vmem:[#allocation2 + $0x18] sm:$0xff]
      %v468 = vmul.f32 %v460, %v464
      %v469 = vmul.f32 %v461, %v465
      %v470 = vmul.f32 %v462, %v466
      %v471 = vmul.f32 %v463, %v467
      %v472 = vadd.f32 %v452, %v468
      %v473 = vadd.f32 %v453, %v469
      %v474 = vadd.f32 %v454, %v470
      %v475 = vadd.f32 %v455, %v471
      %476 = vst [vmem:[#allocation2] sm:$0xff] %v472
      %477 = vst [vmem:[#allocation2 + $0x8] sm:$0xff] %v473
      %478 = vst [vmem:[#allocation2 + $0x10] sm:$0xff] %v474
      %479 = vst [vmem:[#allocation2 + $0x18] sm:$0xff] %v475
      %480 = vadd.xlane.f32.xlu0 %v472
      %v481 = vpop.xlane.xlu0 %480
      %482 = vadd.xlane.f32.xlu0 %v473
      %v483 = vpop.xlane.xlu0 %482
      %484 = vadd.xlane.f32.xlu0 %v474
      %v485 = vpop.xlane.xlu0 %484
      %486 = vadd.xlane.f32.xlu0 %v475
      %v487 = vpop.xlane.xlu0 %486
      %v488 = vrcp.pop 128.0
      %v489 = vmul.f32 %v481, %v488
      %v490 = vmul.f32 %v483, %v488
      %v491 = vmul.f32 %v485, %v488
      %v492 = vmul.f32 %v487, %v488
      %v493 = vsub.f32 %v472, %v489
      %v494 = vsub.f32 %v473, %v490
      %v495 = vsub.f32 %v474, %v491
      %v496 = vsub.f32 %v475, %v492
      %v497 = vmul.f32 %v493, %v493
      %v498 = vmul.f32 %v494, %v494
      %v499 = vmul.f32 %v495, %v495
      %v500 = vmul.f32 %v496, %v496
      %501 = vadd.xlane.f32.xlu0 %v497
      %v502 = vpop.xlane.xlu0 %501
      %503 = vadd.xlane.f32.xlu0 %v498
      %v504 = vpop.xlane.xlu0 %503
      %505 = vadd.xlane.f32.xlu0 %v499
      %v506 = vpop.xlane.xlu0 %505
      %507 = vadd.xlane.f32.xlu0 %v500
      %v508 = vpop.xlane.xlu0 %507
      %v509 = vmul.f32 %v502, %v488
      %v510 = vmul.f32 %v504, %v488
      %v511 = vmul.f32 %v506, %v488
      %v512 = vmul.f32 %v508, %v488
      %v513 = vadd.f32 %v509, 1e-05
      %v514 = vadd.f32 %v510, 1e-05
      %v515 = vadd.f32 %v511, 1e-05
      %v516 = vadd.f32 %v512, 1e-05
      %v517 = vrsqrt.pop %v513
      %v518 = vrsqrt.pop %v514
      %v519 = vrsqrt.pop %v515
      %v520 = vrsqrt.pop %v516
      %v521 = vmul.f32 %v493, %v517
      %v522 = vmul.f32 %v494, %v518
      %v523 = vmul.f32 %v495, %v519
      %v524 = vmul.f32 %v496, %v520
      %v525 = vld [vmem:[%s4] sm:$0x1]
      %v527 = vlaneseq
      %v528 = vshrl.u32 %v527, 7
      %v529 = vsub.s32 0, %v528
      %v530 = vrot.slane %v525, %v529
      %v532 = vmul.f32 %v521, %v530
      %v533 = vmul.f32 %v522, %v530
      %v534 = vmul.f32 %v523, %v530
      %v535 = vmul.f32 %v524, %v530
      %v536 = vld [vmem:[%s5] sm:$0x1]
      %v538 = vlaneseq
      %v539 = vshrl.u32 %v538, 7
      %v540 = vsub.s32 0, %v539
      %v541 = vrot.slane %v536, %v540
      %v543 = vadd.f32 %v532, %v541
      %v544 = vadd.f32 %v533, %v541
      %v545 = vadd.f32 %v534, %v541
      %v546 = vadd.f32 %v535, %v541
      %v547 = vpack.c.bf16 %v544, %v543
      %v548 = vpack.c.bf16 %v546, %v545
      %v551 = vunpack.c.l.b16 %v547
      %v552 = vunpack.c.h.b16 %v547
      %v553 = vunpack.c.l.b16 %v548
      %v554 = vunpack.c.h.b16 %v548
      %v555 = vpack.c.b16 %v551, %v551
      %v556 = vpack.c.b16 %v552, %v552
      %v557 = vpack.c.b16 %v553, %v553
      %v558 = vpack.c.b16 %v554, %v554
      %563 = vst [vmem:[%s7] sm:$0xf] %v555
      %564 = vst [vmem:[%s7 + $0x4] sm:$0xf] %v556
      %565 = vst [vmem:[%s7 + $0x8] sm:$0xf] %v557
      %566 = vst [vmem:[%s7 + $0xc] sm:$0xf] %v558
    $region33: #{forward.24} parent=1 // pred_fallthru
      _
    // Predicated region
    $region34: #{forward.24} parent=1 // pred_check
      _
    $region35: #{forward.24} parent=1 // pred_check_branch
      %568 = sbr.rel (0) target = $region37
    $region36: #{forward.24} parent=1 // pred_region
      %s570 = ssub.s32 512, 512
      %571 = vsyncadd [#allocation3], %s570
      %s572 = sshll.u32 [#allocation2], 4
      %s573 = int_to_ptr.vmem [resolvable:$true] %s572
      %578 = dma.vmem_to_hbm [thread:$0]  %s573, 512, %s6, [#allocation3], 128, 128, 8
    $region37: #{forward.24} parent=1 // pred_fallthru
      _
    // Predicated region
    $region38: #{forward.24} parent=1 // pred_check
      _
    $region39: #{forward.24} parent=1 // pred_check_branch
      %580 = sbr.rel (0) target = $region41
    $region40: #{forward.24} parent=1 // pred_region
      _
    $region41: #{forward.24} parent=1 // pred_fallthru
      _
    // Predicated region
    $region42: #{forward.24} parent=1 // pred_check
      _
    $region43: #{forward.24} parent=1 // pred_check_branch
      %582 = sbr.rel (0) target = $region45
    $region44: #{forward.24} parent=1 // pred_region
      %583 = dma.done [#allocation3], 512
    $region45: #{forward.24} parent=1 // pred_fallthru
      _
    // Predicated region
    $region46: #{forward.24} parent=1 // pred_check
      _
    $region47: #{forward.24} parent=1 // pred_check_branch
      %585 = sbr.rel (0) target = $region49
    $region48: #{forward.24} parent=1 // pred_region
      _
    $region49: #{forward.24} parent=1 // pred_fallthru
      _
    %586 = vsyncpa [#allocation3], 1

// kernel: forward.17
$region0: #{forward.17}
  #allocation0 [shape = 'u32[]', space=smem, size = 0x4, offset = 0x4, fixed_abs, tag = 'smem constant byte address 0x4 - core index']
  #allocation1 [shape = 'u32[144,128]{1,0:T(1,128)}', space=vmem, size = 0x12000, scoped, tag = 'internal scratch']
  %s0 = inlined_call_operand.vmem [shape: bf16[32,128], index: 0, kind: input, shape index: {}]
  %s1 = inlined_call_operand.vmem [shape: bf16[128,128], index: 1, kind: input, shape index: {}]
  %s2 = inlined_call_operand.vmem [shape: f32[32,128], index: 2, kind: input, shape index: {}]
  %s3 = inlined_call_operand.vmem [shape: f32[1,128], index: 3, kind: input, shape index: {}]
  %s4 = inlined_call_operand.vmem [shape: f32[1,128], index: 4, kind: input, shape index: {}]
  %s5 = inlined_call_operand.vmem [shape: f32[32,128], index: 5, kind: output, shape index: {0}]
  %s6 = inlined_call_operand.vmem [shape: bf16[32,128], index: 6, kind: output, shape index: {1}]
  %7 = xla_tuple %s5, %s6
  %s8 = sld [smem:[#allocation0]]
  $region46: #{forward.17} parent=0
    _
  %s10 = ssub.s32 1, %s8
  %s11 = scalar_select 0, %s10, %s8
  // Predicated region
  $region2: #{forward.17} parent=0 // pred_check
    _
  $region3: #{forward.17} parent=0 // pred_check_branch
    %13 = sbr.rel (0) target = $region5
  $region4: #{forward.17} parent=0 // pred_region
    _
  $region5: #{forward.17} parent=0 // pred_fallthru
    _
  // Predicated region
  $region6: #{forward.17} parent=0 // pred_check
    _
  $region7: #{forward.17} parent=0 // pred_check_branch
    %15 = sbr.rel (0) target = $region9
  $region8: #{forward.17} parent=0 // pred_region
    _
  $region9: #{forward.17} parent=0 // pred_fallthru
    _
  // Predicated region
  $region10: #{forward.17} parent=0 // pred_check
    _
  $region11: #{forward.17} parent=0 // pred_check_branch
    %17 = sbr.rel (0) target = $region13
  $region12: #{forward.17} parent=0 // pred_region
    _
  $region13: #{forward.17} parent=0 // pred_fallthru
    _
  // Predicated region
  $region14: #{forward.17} parent=0 // pred_check
    _
  $region15: #{forward.17} parent=0 // pred_check_branch
    %19 = sbr.rel (0) target = $region17
  $region16: #{forward.17} parent=0 // pred_region
    _
  $region17: #{forward.17} parent=0 // pred_fallthru
    _
  // Predicated region
  $region18: #{forward.17} parent=0 // pred_check
    _
  $region19: #{forward.17} parent=0 // pred_check_branch
    %21 = sbr.rel (0) target = $region21
  $region20: #{forward.17} parent=0 // pred_region
    _
  $region21: #{forward.17} parent=0 // pred_fallthru
    _
  %p23 = scmp.eq.s32.totalorder 0, 0
  // Predicated region
  $region22: #{forward.17} parent=0 // pred_check
    %p24 = pneg %p23
  $region23: #{forward.17} parent=0 // pred_check_branch
    %26 = sbr.rel (%p24) target = $region25
  $region24: #{forward.17} parent=0 // pred_region
    %27 = vst [vmem:[%s5] sm:$0xff] 0.0
    %28 = vst [vmem:[%s5 + $0x8] sm:$0xff] 0.0
    %29 = vst [vmem:[%s5 + $0x10] sm:$0xff] 0.0
    %30 = vst [vmem:[%s5 + $0x18] sm:$0xff] 0.0
  $region25: #{forward.17} parent=0 // pred_fallthru
    _
  %v31 = vld [vmem:[%s5] sm:$0xff]
  %v32 = vld [vmem:[%s5 + $0x8] sm:$0xff]
  %v33 = vld [vmem:[%s5 + $0x10] sm:$0xff]
  %v34 = vld [vmem:[%s5 + $0x18] sm:$0xff]
  %v35 = vld [vmem:[%s0] sm:$0xf]
  %v36 = vld [vmem:[%s0 + $0x4] sm:$0xf]
  %v37 = vld [vmem:[%s0 + $0x8] sm:$0xf]
  %v38 = vld [vmem:[%s0 + $0xc] sm:$0xf]
  %v39 = vld [vmem:[%s1] sm:$0xf]
  %v40 = vld [vmem:[%s1 + $0x4] sm:$0xf]
  %v41 = vld [vmem:[%s1 + $0x8] sm:$0xf]
  %v42 = vld [vmem:[%s1 + $0xc] sm:$0xf]
  %v43 = vld [vmem:[%s1 + $0x10] sm:$0xf]
  %v44 = vld [vmem:[%s1 + $0x14] sm:$0xf]
  %v45 = vld [vmem:[%s1 + $0x18] sm:$0xf]
  %v46 = vld [vmem:[%s1 + $0x1c] sm:$0xf]
  %v47 = vld [vmem:[%s1 + $0x20] sm:$0xf]
  %v48 = vld [vmem:[%s1 + $0x24] sm:$0xf]
  %v49 = vld [vmem:[%s1 + $0x28] sm:$0xf]
  %v50 = vld [vmem:[%s1 + $0x2c] sm:$0xf]
  %v51 = vld [vmem:[%s1 + $0x30] sm:$0xf]
  %v52 = vld [vmem:[%s1 + $0x34] sm:$0xf]
  %v53 = vld [vmem:[%s1 + $0x38] sm:$0xf]
  %v54 = vld [vmem:[%s1 + $0x3c] sm:$0xf]
  %v59 = vunpack.c.l.b16 %v35
  %v60 = vunpack.c.l.b16 %v36
  %v61 = vunpack.c.l.b16 %v37
  %v62 = vunpack.c.l.b16 %v38
  %v63 = vpack.c.b16 %v60, %v59
  %v64 = vpack.c.b16 %v62, %v61
  %v83 = vunpack.c.l.b16 %v39
  %v84 = vunpack.c.l.b16 %v40
  %v85 = vunpack.c.l.b16 %v41
  %v86 = vunpack.c.l.b16 %v42
  %v87 = vunpack.c.l.b16 %v43
  %v88 = vunpack.c.l.b16 %v44
  %v89 = vunpack.c.l.b16 %v45
  %v90 = vunpack.c.l.b16 %v46
  %v91 = vunpack.c.l.b16 %v47
  %v92 = vunpack.c.l.b16 %v48
  %v93 = vunpack.c.l.b16 %v49
  %v94 = vunpack.c.l.b16 %v50
  %v95 = vunpack.c.l.b16 %v51
  %v96 = vunpack.c.l.b16 %v52
  %v97 = vunpack.c.l.b16 %v53
  %v98 = vunpack.c.l.b16 %v54
  %v99 = vpack.c.b16 %v84, %v83
  %v100 = vpack.c.b16 %v86, %v85
  %v101 = vpack.c.b16 %v88, %v87
  %v102 = vpack.c.b16 %v90, %v89
  %v103 = vpack.c.b16 %v92, %v91
  %v104 = vpack.c.b16 %v94, %v93
  %v105 = vpack.c.b16 %v96, %v95
  %v106 = vpack.c.b16 %v98, %v97
  %115 = vmatprep.subr.bf16.mxu0 0
  %116 = vmatpush1.bf16.msra.mxu0 %v106
  %117 = vmatprep.subr.bf16.mxu0 0
  %118 = vmatpush1.bf16.msra.mxu0 %v105
  %119 = vmatprep.subr.bf16.mxu0 0
  %120 = vmatpush1.bf16.msra.mxu0 %v104
  %121 = vmatprep.subr.bf16.mxu0 0
  %122 = vmatpush1.bf16.msra.mxu0 %v103
  %123 = vmatprep.subr.bf16.mxu0 0
  %124 = vmatpush1.bf16.msra.mxu0 %v102
  %125 = vmatprep.subr.bf16.mxu0 0
  %126 = vmatpush1.bf16.msra.mxu0 %v101
  %127 = vmatprep.subr.bf16.mxu0 0
  %128 = vmatpush1.bf16.msra.mxu0 %v100
  %129 = vmatprep.subr.bf16.mxu0 0
  %130 = vmatpush1.bf16.msra.mxu0 %v99
  %131 = vmatprep.subr.bf16.mxu0 0
  %132 = vmatpush2.bf16.msra.mxu0 0
  %133 = vmatprep.subr.bf16.mxu0 0
  %134 = vmatpush2.bf16.msra.mxu0 0
  %135 = vmatprep.subr.bf16.mxu0 0
  %136 = vmatpush2.bf16.msra.mxu0 0
  %137 = vmatprep.subr.bf16.mxu0 0
  %138 = vmatpush2.bf16.msra.mxu0 0
  %139 = vmatprep.subr.bf16.mxu0 0
  %140 = vmatpush2.bf16.msra.mxu0 0
  %141 = vmatprep.subr.bf16.mxu0 0
  %142 = vmatpush2.bf16.msra.mxu0 0
  %143 = vmatprep.subr.bf16.mxu0 0
  %144 = vmatpush2.bf16.msra.mxu0 0
  %145 = vmatprep.subr.bf16.mxu0 0
  %146 = vmatpush2.bf16.msra.mxu0 0
  %147 = vmatprep.mubr.bf16.mxu0 0
  %148 = vmatmul.mubr.bf16.gmra.mxu0 %v63
  %v149 = vpop.f32.mrf.mxu0
  %v150 = vadd.f32 0.0, %v149
  %v151 = vpop.f32.mrf.mxu0
  %v152 = vpop.f32.mrf.mxu0
  %v153 = vadd.f32 0.0, %v152
  %v154 = vpop.f32.mrf.mxu0
  %155 = vmatprep.mubr.bf16.mxu0 0
  %156 = vmatmul.mubr.bf16.gmra.mxu0 %v64
  %v157 = vpop.f32.mrf.mxu0
  %v158 = vadd.f32 0.0, %v157
  %v159 = vpop.f32.mrf.mxu0
  %v160 = vpop.f32.mrf.mxu0
  %v161 = vadd.f32 0.0, %v160
  %v162 = vpop.f32.mrf.mxu0
  %163 = vdwg.mxu0
  %v164 = vadd.f32 %v31, %v150
  %v165 = vadd.f32 %v32, %v153
  %v166 = vadd.f32 %v33, %v158
  %v167 = vadd.f32 %v34, %v161
  %168 = vst [vmem:[%s5] sm:$0xff] %v164
  %169 = vst [vmem:[%s5 + $0x8] sm:$0xff] %v165
  %170 = vst [vmem:[%s5 + $0x10] sm:$0xff] %v166
  %171 = vst [vmem:[%s5 + $0x18] sm:$0xff] %v167
  // Predicated region
  $region26: #{forward.17} parent=0 // pred_check
    %p172 = pneg %p23
  $region27: #{forward.17} parent=0 // pred_check_branch
    %174 = sbr.rel (%p172) target = $region29
  $region28: #{forward.17} parent=0 // pred_region
    %v175 = vld [vmem:[%s5] sm:$0xff]
    %v176 = vld [vmem:[%s5 + $0x8] sm:$0xff]
    %v177 = vld [vmem:[%s5 + $0x10] sm:$0xff]
    %v178 = vld [vmem:[%s5 + $0x18] sm:$0xff]
    %v179 = vld [vmem:[%s2] sm:$0xff]
    %v180 = vld [vmem:[%s2 + $0x8] sm:$0xff]
    %v181 = vld [vmem:[%s2 + $0x10] sm:$0xff]
    %v182 = vld [vmem:[%s2 + $0x18] sm:$0xff]
    %v183 = vadd.f32 %v175, %v179
    %v184 = vadd.f32 %v176, %v180
    %v185 = vadd.f32 %v177, %v181
    %v186 = vadd.f32 %v178, %v182
    %187 = vst [vmem:[%s5] sm:$0xff] %v183
    %188 = vst [vmem:[%s5 + $0x8] sm:$0xff] %v184
    %189 = vst [vmem:[%s5 + $0x10] sm:$0xff] %v185
    %190 = vst [vmem:[%s5 + $0x18] sm:$0xff] %v186
    %191 = vadd.xlane.f32.xlu0 %v183
    %v192 = vpop.xlane.xlu0 %191
    %193 = vadd.xlane.f32.xlu0 %v184
    %v194 = vpop.xlane.xlu0 %193
    %195 = vadd.xlane.f32.xlu0 %v185
    %v196 = vpop.xlane.xlu0 %195
    %197 = vadd.xlane.f32.xlu0 %v186
    %v198 = vpop.xlane.xlu0 %197
    %v199 = vrcp.pop 128.0
    %v200 = vmul.f32 %v192, %v199
    %v201 = vmul.f32 %v194, %v199
    %v202 = vmul.f32 %v196, %v199
    %v203 = vmul.f32 %v198, %v199
    %v204 = vsub.f32 %v183, %v200
    %v205 = vsub.f32 %v184, %v201
    %v206 = vsub.f32 %v185, %v202
    %v207 = vsub.f32 %v186, %v203
    %v208 = vmul.f32 %v204, %v204
    %v209 = vmul.f32 %v205, %v205
    %v210 = vmul.f32 %v206, %v206
    %v211 = vmul.f32 %v207, %v207
    %212 = vadd.xlane.f32.xlu0 %v208
    %v213 = vpop.xlane.xlu0 %212
    %214 = vadd.xlane.f32.xlu0 %v209
    %v215 = vpop.xlane.xlu0 %214
    %216 = vadd.xlane.f32.xlu0 %v210
    %v217 = vpop.xlane.xlu0 %216
    %218 = vadd.xlane.f32.xlu0 %v211
    %v219 = vpop.xlane.xlu0 %218
    %v220 = vmul.f32 %v213, %v199
    %v221 = vmul.f32 %v215, %v199
    %v222 = vmul.f32 %v217, %v199
    %v223 = vmul.f32 %v219, %v199
    %v224 = vadd.f32 %v220, 1e-05
    %v225 = vadd.f32 %v221, 1e-05
    %v226 = vadd.f32 %v222, 1e-05
    %v227 = vadd.f32 %v223, 1e-05
    %v228 = vrsqrt.pop %v224
    %v229 = vrsqrt.pop %v225
    %v230 = vrsqrt.pop %v226
    %v231 = vrsqrt.pop %v227
    %v232 = vmul.f32 %v204, %v228
    %v233 = vmul.f32 %v205, %v229
    %v234 = vmul.f32 %v206, %v230
    %v235 = vmul.f32 %v207, %v231
    %v236 = vld [vmem:[%s3] sm:$0x1]
    %v238 = vlaneseq
    %v239 = vshrl.u32 %v238, 7
    %v240 = vsub.s32 0, %v239
    %v241 = vrot.slane %v236, %v240
    %v243 = vmul.f32 %v232, %v241
    %v244 = vmul.f32 %v233, %v241
    %v245 = vmul.f32 %v234, %v241
    %v246 = vmul.f32 %v235, %v241
    %v247 = vld [vmem:[%s4] sm:$0x1]
    %v249 = vlaneseq
    %v250 = vshrl.u32 %v249, 7
    %v251 = vsub.s32 0, %v250
    %v252 = vrot.slane %v247, %v251
    %v254 = vadd.f32 %v243, %v252
    %v255 = vadd.f32 %v244, %v252
    %v256 = vadd.f32 %v245, %v252
    %v257 = vadd.f32 %v246, %v252
    %v258 = vpack.c.bf16 %v255, %v254
    %v259 = vpack.c.bf16 %v257, %v256
    %v262 = vunpack.c.l.b16 %v258
    %v263 = vunpack.c.h.b16 %v258
    %v264 = vunpack.c.l.b16 %v259
    %v265 = vunpack.c.h.b16 %v259
    %v266 = vpack.c.b16 %v262, %v262
    %v267 = vpack.c.b16 %v263, %v263
    %v268 = vpack.c.b16 %v264, %v264
    %v269 = vpack.c.b16 %v265, %v265
    %274 = vst [vmem:[%s6] sm:$0xf] %v266
    %275 = vst [vmem:[%s6 + $0x4] sm:$0xf] %v267
    %276 = vst [vmem:[%s6 + $0x8] sm:$0xf] %v268
    %277 = vst [vmem:[%s6 + $0xc] sm:$0xf] %v269
  $region29: #{forward.17} parent=0 // pred_fallthru
    _
  // Predicated region
  $region30: #{forward.17} parent=0 // pred_check
    _
  $region31: #{forward.17} parent=0 // pred_check_branch
    %279 = sbr.rel (0) target = $region33
  $region32: #{forward.17} parent=0 // pred_region
    _
  $region33: #{forward.17} parent=0 // pred_fallthru
    _
  // Predicated region
  $region34: #{forward.17} parent=0 // pred_check
    _
  $region35: #{forward.17} parent=0 // pred_check_branch
    %281 = sbr.rel (0) target = $region37
  $region36: #{forward.17} parent=0 // pred_region
    _
  $region37: #{forward.17} parent=0 // pred_fallthru
    _
  // Predicated region
  $region38: #{forward.17} parent=0 // pred_check
    _
  $region39: #{forward.17} parent=0 // pred_check_branch
    %283 = sbr.rel (0) target = $region41
  $region40: #{forward.17} parent=0 // pred_region
    _
  $region41: #{forward.17} parent=0 // pred_fallthru
    _
  // Predicated region
  $region42: #{forward.17} parent=0 // pred_check
    _
  $region43: #{forward.17} parent=0 // pred_check_branch
    %285 = sbr.rel (0) target = $region45
  $region44: #{forward.17} parent=0 // pred_region
    _
  $region45: #{forward.17} parent=0 // pred_fallthru
    _

// kernel: forward.18
$region0: #{forward.18}
  #allocation0 [shape = 'u32[]', space=smem, size = 0x4, offset = 0x4, fixed_abs, tag = 'smem constant byte address 0x4 - core index']
  #allocation1 [shape = 'u32[144,128]{1,0:T(1,128)}', space=vmem, size = 0x12000, scoped, tag = 'internal scratch']
  #allocation2 [shape = 'f32[32,640]{1,0:T(8,128)}', space=vmem, size = 0x14000, scoped, tag = 'scratch operand']
  %s0 = inlined_call_operand.vmem [shape: bf16[32,128], index: 0, kind: input, shape index: {}]
  %s1 = inlined_call_operand.vmem [shape: bf16[32,128], index: 1, kind: input, shape index: {}]
  %s2 = inlined_call_operand.vmem [shape: bf16[128,640], index: 2, kind: input, shape index: {}]
  %s3 = inlined_call_operand.vmem [shape: bf16[128,640], index: 3, kind: input, shape index: {}]
  %s4 = inlined_call_operand.vmem [shape: bf16[32,512], index: 4, kind: output, shape index: {0}]
  %s5 = inlined_call_operand.vmem [shape: bf16[32,128], index: 5, kind: output, shape index: {1}]
  %6 = xla_tuple %s4, %s5
  %s7 = sld [smem:[#allocation0]]
  $region42: #{forward.18} parent=0
    _
  %s9 = ssub.s32 1, %s7
  %s10 = scalar_select 0, %s9, %s7
  // Predicated region
  $region2: #{forward.18} parent=0 // pred_check
    _
  $region3: #{forward.18} parent=0 // pred_check_branch
    %12 = sbr.rel (0) target = $region5
  $region4: #{forward.18} parent=0 // pred_region
    _
  $region5: #{forward.18} parent=0 // pred_fallthru
    _
  // Predicated region
  $region6: #{forward.18} parent=0 // pred_check
    _
  $region7: #{forward.18} parent=0 // pred_check_branch
    %14 = sbr.rel (0) target = $region9
  $region8: #{forward.18} parent=0 // pred_region
    _
  $region9: #{forward.18} parent=0 // pred_fallthru
    _
  // Predicated region
  $region10: #{forward.18} parent=0 // pred_check
    _
  $region11: #{forward.18} parent=0 // pred_check_branch
    %16 = sbr.rel (0) target = $region13
  $region12: #{forward.18} parent=0 // pred_region
    _
  $region13: #{forward.18} parent=0 // pred_fallthru
    _
  // Predicated region
  $region14: #{forward.18} parent=0 // pred_check
    _
  $region15: #{forward.18} parent=0 // pred_check_branch
    %18 = sbr.rel (0) target = $region17
  $region16: #{forward.18} parent=0 // pred_region
    _
  $region17: #{forward.18} parent=0 // pred_fallthru
    _
  %p20 = scmp.eq.s32.totalorder 0, 0
  // Predicated region
  $region18: #{forward.18} parent=0 // pred_check
    %p21 = pneg %p20
  $region19: #{forward.18} parent=0 // pred_check_branch
    %23 = sbr.rel (%p21) target = $region21
  $region20: #{forward.18} parent=0 // pred_region
    %24 = vst [vmem:[#allocation2] sm:$0xff] 0.0
    %25 = vst [vmem:[#allocation2 + $0x8] sm:$0xff] 0.0
    %26 = vst [vmem:[#allocation2 + $0x10] sm:$0xff] 0.0
    %27 = vst [vmem:[#allocation2 + $0x18] sm:$0xff] 0.0
    %28 = vst [vmem:[#allocation2 + $0x20] sm:$0xff] 0.0
    %29 = vst [vmem:[#allocation2 + $0x28] sm:$0xff] 0.0
    %30 = vst [vmem:[#allocation2 + $0x30] sm:$0xff] 0.0
    %31 = vst [vmem:[#allocation2 + $0x38] sm:$0xff] 0.0
    %32 = vst [vmem:[#allocation2 + $0x40] sm:$0xff] 0.0
    %33 = vst [vmem:[#allocation2 + $0x48] sm:$0xff] 0.0
    %34 = vst [vmem:[#allocation2 + $0x50] sm:$0xff] 0.0
    %35 = vst [vmem:[#allocation2 + $0x58] sm:$0xff] 0.0
    %36 = vst [vmem:[#allocation2 + $0x60] sm:$0xff] 0.0
    %37 = vst [vmem:[#allocation2 + $0x68] sm:$0xff] 0.0
    %38 = vst [vmem:[#allocation2 + $0x70] sm:$0xff] 0.0
    %39 = vst [vmem:[#allocation2 + $0x78] sm:$0xff] 0.0
    %40 = vst [vmem:[#allocation2 + $0x80] sm:$0xff] 0.0
    %41 = vst [vmem:[#allocation2 + $0x88] sm:$0xff] 0.0
    %42 = vst [vmem:[#allocation2 + $0x90] sm:$0xff] 0.0
    %43 = vst [vmem:[#allocation2 + $0x98] sm:$0xff] 0.0
  $region21: #{forward.18} parent=0 // pred_fallthru
    _
  %v44 = vld [vmem:[#allocation2] sm:$0xff]
  %v45 = vld [vmem:[#allocation2 + $0x8] sm:$0xff]
  %v46 = vld [vmem:[#allocation2 + $0x10] sm:$0xff]
  %v47 = vld [vmem:[#allocation2 + $0x18] sm:$0xff]
  %v48 = vld [vmem:[#allocation2 + $0x20] sm:$0xff]
  %v49 = vld [vmem:[#allocation2 + $0x28] sm:$0xff]
  %v50 = vld [vmem:[#allocation2 + $0x30] sm:$0xff]
  %v51 = vld [vmem:[#allocation2 + $0x38] sm:$0xff]
  %v52 = vld [vmem:[#allocation2 + $0x40] sm:$0xff]
  %v53 = vld [vmem:[#allocation2 + $0x48] sm:$0xff]
  %v54 = vld [vmem:[#allocation2 + $0x50] sm:$0xff]
  %v55 = vld [vmem:[#allocation2 + $0x58] sm:$0xff]
  %v56 = vld [vmem:[#allocation2 + $0x60] sm:$0xff]
  %v57 = vld [vmem:[#allocation2 + $0x68] sm:$0xff]
  %v58 = vld [vmem:[#allocation2 + $0x70] sm:$0xff]
  %v59 = vld [vmem:[#allocation2 + $0x78] sm:$0xff]
  %v60 = vld [vmem:[#allocation2 + $0x80] sm:$0xff]
  %v61 = vld [vmem:[#allocation2 + $0x88] sm:$0xff]
  %v62 = vld [vmem:[#allocation2 + $0x90] sm:$0xff]
  %v63 = vld [vmem:[#allocation2 + $0x98] sm:$0xff]
  %v64 = vld [vmem:[%s0] sm:$0xf]
  %v65 = vld [vmem:[%s0 + $0x4] sm:$0xf]
  %v66 = vld [vmem:[%s0 + $0x8] sm:$0xf]
  %v67 = vld [vmem:[%s0 + $0xc] sm:$0xf]
  %v68 = vld [vmem:[%s2] sm:$0xff]
  %v69 = vld [vmem:[%s2 + $0x8] sm:$0xff]
  %v70 = vld [vmem:[%s2 + $0x10] sm:$0xf]
  %v71 = vld [vmem:[%s2 + $0x14] sm:$0xff]
  %v72 = vld [vmem:[%s2 + $0x1c] sm:$0xff]
  %v73 = vld [vmem:[%s2 + $0x24] sm:$0xf]
  %v74 = vld [vmem:[%s2 + $0x28] sm:$0xff]
  %v75 = vld [vmem:[%s2 + $0x30] sm:$0xff]
  %v76 = vld [vmem:[%s2 + $0x38] sm:$0xf]
  %v77 = vld [vmem:[%s2 + $0x3c] sm:$0xff]
  %v78 = vld [vmem:[%s2 + $0x44] sm:$0xff]
  %v79 = vld [vmem:[%s2 + $0x4c] sm:$0xf]
  %v80 = vld [vmem:[%s2 + $0x50] sm:$0xff]
  %v81 = vld [vmem:[%s2 + $0x58] sm:$0xff]
  %v82 = vld [vmem:[%s2 + $0x60] sm:$0xf]
  %v83 = vld [vmem:[%s2 + $0x64] sm:$0xff]
  %v84 = vld [vmem:[%s2 + $0x6c] sm:$0xff]
  %v85 = vld [vmem:[%s2 + $0x74] sm:$0xf]
  %v86 = vld [vmem:[%s2 + $0x78] sm:$0xff]
  %v87 = vld [vmem:[%s2 + $0x80] sm:$0xff]
  %v88 = vld [vmem:[%s2 + $0x88] sm:$0xf]
  %v89 = vld [vmem:[%s2 + $0x8c] sm:$0xff]
  %v90 = vld [vmem:[%s2 + $0x94] sm:$0xff]
  %v91 = vld [vmem:[%s2 + $0x9c] sm:$0xf]
  %v92 = vld [vmem:[%s2 + $0xa0] sm:$0xff]
  %v93 = vld [vmem:[%s2 + $0xa8] sm:$0xff]
  %v94 = vld [vmem:[%s2 + $0xb0] sm:$0xf]
  %v95 = vld [vmem:[%s2 + $0xb4] sm:$0xff]
  %v96 = vld [vmem:[%s2 + $0xbc] sm:$0xff]
  %v97 = vld [vmem:[%s2 + $0xc4] sm:$0xf]
  %v98 = vld [vmem:[%s2 + $0xc8] sm:$0xff]
  %v99 = vld [vmem:[%s2 + $0xd0] sm:$0xff]
  %v100 = vld [vmem:[%s2 + $0xd8] sm:$0xf]
  %v101 = vld [vmem:[%s2 + $0xdc] sm:$0xff]
  %v102 = vld [vmem:[%s2 + $0xe4] sm:$0xff]
  %v103 = vld [vmem:[%s2 + $0xec] sm:$0xf]
  %v104 = vld [vmem:[%s2 + $0xf0] sm:$0xff]
  %v105 = vld [vmem:[%s2 + $0xf8] sm:$0xff]
  %v106 = vld [vmem:[%s2 + $0x100] sm:$0xf]
  %v107 = vld [vmem:[%s2 + $0x104] sm:$0xff]
  %v108 = vld [vmem:[%s2 + $0x10c] sm:$0xff]
  %v109 = vld [vmem:[%s2 + $0x114] sm:$0xf]
  %v110 = vld [vmem:[%s2 + $0x118] sm:$0xff]
  %v111 = vld [vmem:[%s2 + $0x120] sm:$0xff]
  %v112 = vld [vmem:[%s2 + $0x128] sm:$0xf]
  %v113 = vld [vmem:[%s2 + $0x12c] sm:$0xff]
  %v114 = vld [vmem:[%s2 + $0x134] sm:$0xff]
  %v115 = vld [vmem:[%s2 + $0x13c] sm:$0xf]
  %v116 = vld [vmem:[%s1] sm:$0xf]
  %v117 = vld [vmem:[%s1 + $0x4] sm:$0xf]
  %v118 = vld [vmem:[%s1 + $0x8] sm:$0xf]
  %v119 = vld [vmem:[%s1 + $0xc] sm:$0xf]
  %v120 = vld [vmem:[%s3] sm:$0xff]
  %v121 = vld [vmem:[%s3 + $0x8] sm:$0xff]
  %v122 = vld [vmem:[%s3 + $0x10] sm:$0xf]
  %v123 = vld [vmem:[%s3 + $0x14] sm:$0xff]
  %v124 = vld [vmem:[%s3 + $0x1c] sm:$0xff]
  %v125 = vld [vmem:[%s3 + $0x24] sm:$0xf]
  %v126 = vld [vmem:[%s3 + $0x28] sm:$0xff]
  %v127 = vld [vmem:[%s3 + $0x30] sm:$0xff]
  %v128 = vld [vmem:[%s3 + $0x38] sm:$0xf]
  %v129 = vld [vmem:[%s3 + $0x3c] sm:$0xff]
  %v130 = vld [vmem:[%s3 + $0x44] sm:$0xff]
  %v131 = vld [vmem:[%s3 + $0x4c] sm:$0xf]
  %v132 = vld [vmem:[%s3 + $0x50] sm:$0xff]
  %v133 = vld [vmem:[%s3 + $0x58] sm:$0xff]
  %v134 = vld [vmem:[%s3 + $0x60] sm:$0xf]
  %v135 = vld [vmem:[%s3 + $0x64] sm:$0xff]
  %v136 = vld [vmem:[%s3 + $0x6c] sm:$0xff]
  %v137 = vld [vmem:[%s3 + $0x74] sm:$0xf]
  %v138 = vld [vmem:[%s3 + $0x78] sm:$0xff]
  %v139 = vld [vmem:[%s3 + $0x80] sm:$0xff]
  %v140 = vld [vmem:[%s3 + $0x88] sm:$0xf]
  %v141 = vld [vmem:[%s3 + $0x8c] sm:$0xff]
  %v142 = vld [vmem:[%s3 + $0x94] sm:$0xff]
  %v143 = vld [vmem:[%s3 + $0x9c] sm:$0xf]
  %v144 = vld [vmem:[%s3 + $0xa0] sm:$0xff]
  %v145 = vld [vmem:[%s3 + $0xa8] sm:$0xff]
  %v146 = vld [vmem:[%s3 + $0xb0] sm:$0xf]
  %v147 = vld [vmem:[%s3 + $0xb4] sm:$0xff]
  %v148 = vld [vmem:[%s3 + $0xbc] sm:$0xff]
  %v149 = vld [vmem:[%s3 + $0xc4] sm:$0xf]
  %v150 = vld [vmem:[%s3 + $0xc8] sm:$0xff]
  %v151 = vld [vmem:[%s3 + $0xd0] sm:$0xff]
  %v152 = vld [vmem:[%s3 + $0xd8] sm:$0xf]
  %v153 = vld [vmem:[%s3 + $0xdc] sm:$0xff]
  %v154 = vld [vmem:[%s3 + $0xe4] sm:$0xff]
  %v155 = vld [vmem:[%s3 + $0xec] sm:$0xf]
  %v156 = vld [vmem:[%s3 + $0xf0] sm:$0xff]
  %v157 = vld [vmem:[%s3 + $0xf8] sm:$0xff]
  %v158 = vld [vmem:[%s3 + $0x100] sm:$0xf]
  %v159 = vld [vmem:[%s3 + $0x104] sm:$0xff]
  %v160 = vld [vmem:[%s3 + $0x10c] sm:$0xff]
  %v161 = vld [vmem:[%s3 + $0x114] sm:$0xf]
  %v162 = vld [vmem:[%s3 + $0x118] sm:$0xff]
  %v163 = vld [vmem:[%s3 + $0x120] sm:$0xff]
  %v164 = vld [vmem:[%s3 + $0x128] sm:$0xf]
  %v165 = vld [vmem:[%s3 + $0x12c] sm:$0xff]
  %v166 = vld [vmem:[%s3 + $0x134] sm:$0xff]
  %v167 = vld [vmem:[%s3 + $0x13c] sm:$0xf]
  %v172 = vunpack.c.l.b16 %v116
  %v173 = vunpack.c.l.b16 %v117
  %v174 = vunpack.c.l.b16 %v118
  %v175 = vunpack.c.l.b16 %v119
  %v176 = vpack.c.b16 %v173, %v172
  %v177 = vpack.c.b16 %v175, %v174
  %v228 = vunpack.c.l.b16 %v120
  %v229 = vunpack.c.h.b16 %v120
  %v230 = vunpack.c.l.b16 %v121
  %v231 = vunpack.c.h.b16 %v121
  %v232 = vunpack.c.l.b16 %v122
  %v233 = vunpack.c.l.b16 %v123
  %v234 = vunpack.c.h.b16 %v123
  %v235 = vunpack.c.l.b16 %v124
  %v236 = vunpack.c.h.b16 %v124
  %v237 = vunpack.c.l.b16 %v125
  %v238 = vunpack.c.l.b16 %v126
  %v239 = vunpack.c.h.b16 %v126
  %v240 = vunpack.c.l.b16 %v127
  %v241 = vunpack.c.h.b16 %v127
  %v242 = vunpack.c.l.b16 %v128
  %v243 = vunpack.c.l.b16 %v129
  %v244 = vunpack.c.h.b16 %v129
  %v245 = vunpack.c.l.b16 %v130
  %v246 = vunpack.c.h.b16 %v130
  %v247 = vunpack.c.l.b16 %v131
  %v248 = vunpack.c.l.b16 %v132
  %v249 = vunpack.c.h.b16 %v132
  %v250 = vunpack.c.l.b16 %v133
  %v251 = vunpack.c.h.b16 %v133
  %v252 = vunpack.c.l.b16 %v134
  %v253 = vunpack.c.l.b16 %v135
  %v254 = vunpack.c.h.b16 %v135
  %v255 = vunpack.c.l.b16 %v136
  %v256 = vunpack.c.h.b16 %v136
  %v257 = vunpack.c.l.b16 %v137
  %v258 = vunpack.c.l.b16 %v138
  %v259 = vunpack.c.h.b16 %v138
  %v260 = vunpack.c.l.b16 %v139
  %v261 = vunpack.c.h.b16 %v139
  %v262 = vunpack.c.l.b16 %v140
  %v263 = vunpack.c.l.b16 %v141
  %v264 = vunpack.c.h.b16 %v141
  %v265 = vunpack.c.l.b16 %v142
  %v266 = vunpack.c.h.b16 %v142
  %v267 = vunpack.c.l.b16 %v143
  %v268 = vunpack.c.l.b16 %v144
  %v269 = vunpack.c.h.b16 %v144
  %v270 = vunpack.c.l.b16 %v145
  %v271 = vunpack.c.h.b16 %v145
  %v272 = vunpack.c.l.b16 %v146
  %v273 = vunpack.c.l.b16 %v147
  %v274 = vunpack.c.h.b16 %v147
  %v275 = vunpack.c.l.b16 %v148
  %v276 = vunpack.c.h.b16 %v148
  %v277 = vunpack.c.l.b16 %v149
  %v278 = vunpack.c.l.b16 %v150
  %v279 = vunpack.c.h.b16 %v150
  %v280 = vunpack.c.l.b16 %v151
  %v281 = vunpack.c.h.b16 %v151
  %v282 = vunpack.c.l.b16 %v152
  %v283 = vunpack.c.l.b16 %v153
  %v284 = vunpack.c.h.b16 %v153
  %v285 = vunpack.c.l.b16 %v154
  %v286 = vunpack.c.h.b16 %v154
  %v287 = vunpack.c.l.b16 %v155
  %v288 = vunpack.c.l.b16 %v156
  %v289 = vunpack.c.h.b16 %v156
  %v290 = vunpack.c.l.b16 %v157
  %v291 = vunpack.c.h.b16 %v157
  %v292 = vunpack.c.l.b16 %v158
  %v293 = vunpack.c.l.b16 %v159
  %v294 = vunpack.c.h.b16 %v159
  %v295 = vunpack.c.l.b16 %v160
  %v296 = vunpack.c.h.b16 %v160
  %v297 = vunpack.c.l.b16 %v161
  %v298 = vunpack.c.l.b16 %v162
  %v299 = vunpack.c.h.b16 %v162
  %v300 = vunpack.c.l.b16 %v163
  %v301 = vunpack.c.h.b16 %v163
  %v302 = vunpack.c.l.b16 %v164
  %v303 = vunpack.c.l.b16 %v165
  %v304 = vunpack.c.h.b16 %v165
  %v305 = vunpack.c.l.b16 %v166
  %v306 = vunpack.c.h.b16 %v166
  %v307 = vunpack.c.l.b16 %v167
  %v308 = vpack.c.b16 %v233, %v228
  %v309 = vpack.c.b16 %v234, %v229
  %v310 = vpack.c.b16 %v235, %v230
  %v311 = vpack.c.b16 %v236, %v231
  %v312 = vpack.c.b16 %v237, %v232
  %v313 = vpack.c.b16 %v243, %v238
  %v314 = vpack.c.b16 %v244, %v239
  %v315 = vpack.c.b16 %v245, %v240
  %v316 = vpack.c.b16 %v246, %v241
  %v317 = vpack.c.b16 %v247, %v242
  %v318 = vpack.c.b16 %v253, %v248
  %v319 = vpack.c.b16 %v254, %v249
  %v320 = vpack.c.b16 %v255, %v250
  %v321 = vpack.c.b16 %v256, %v251
  %v322 = vpack.c.b16 %v257, %v252
  %v323 = vpack.c.b16 %v263, %v258
  %v324 = vpack.c.b16 %v264, %v259
  %v325 = vpack.c.b16 %v265, %v260
  %v326 = vpack.c.b16 %v266, %v261
  %v327 = vpack.c.b16 %v267, %v262
  %v328 = vpack.c.b16 %v273, %v268
  %v329 = vpack.c.b16 %v274, %v269
  %v330 = vpack.c.b16 %v275, %v270
  %v331 = vpack.c.b16 %v276, %v271
  %v332 = vpack.c.b16 %v277, %v272
  %v333 = vpack.c.b16 %v283, %v278
  %v334 = vpack.c.b16 %v284, %v279
  %v335 = vpack.c.b16 %v285, %v280
  %v336 = vpack.c.b16 %v286, %v281
  %v337 = vpack.c.b16 %v287, %v282
  %v338 = vpack.c.b16 %v293, %v288
  %v339 = vpack.c.b16 %v294, %v289
  %v340 = vpack.c.b16 %v295, %v290
  %v341 = vpack.c.b16 %v296, %v291
  %v342 = vpack.c.b16 %v297, %v292
  %v343 = vpack.c.b16 %v303, %v298
  %v344 = vpack.c.b16 %v304, %v299
  %v345 = vpack.c.b16 %v305, %v300
  %v346 = vpack.c.b16 %v306, %v301
  %v347 = vpack.c.b16 %v307, %v302
  %388 = vmatprep.subr.bf16.mxu0 %v344
  %389 = vmatpush1.bf16.msra.mxu0 %v343
  %390 = vmatprep.subr.bf16.mxu0 %v339
  %391 = vmatpush1.bf16.msra.mxu0 %v338
  %392 = vmatprep.subr.bf16.mxu0 %v334
  %393 = vmatpush1.bf16.msra.mxu0 %v333
  %394 = vmatprep.subr.bf16.mxu0 %v329
  %395 = vmatpush1.bf16.msra.mxu0 %v328
  %396 = vmatprep.subr.bf16.mxu0 %v324
  %397 = vmatpush1.bf16.msra.mxu0 %v323
  %398 = vmatprep.subr.bf16.mxu0 %v319
  %399 = vmatpush1.bf16.msra.mxu0 %v318
  %400 = vmatprep.subr.bf16.mxu0 %v314
  %401 = vmatpush1.bf16.msra.mxu0 %v313
  %402 = vmatprep.subr.bf16.mxu0 %v309
  %403 = vmatpush1.bf16.msra.mxu0 %v308
  %404 = vmatprep.subr.bf16.mxu0 0
  %405 = vmatpush2.bf16.msra.mxu0 0
  %406 = vmatprep.subr.bf16.mxu0 0
  %407 = vmatpush2.bf16.msra.mxu0 0
  %408 = vmatprep.subr.bf16.mxu0 0
  %409 = vmatpush2.bf16.msra.mxu0 0
  %410 = vmatprep.subr.bf16.mxu0 0
  %411 = vmatpush2.bf16.msra.mxu0 0
  %412 = vmatprep.subr.bf16.mxu0 0
  %413 = vmatpush2.bf16.msra.mxu0 0
  %414 = vmatprep.subr.bf16.mxu0 0
  %415 = vmatpush2.bf16.msra.mxu0 0
  %416 = vmatprep.subr.bf16.mxu0 0
  %417 = vmatpush2.bf16.msra.mxu0 0
  %418 = vmatprep.subr.bf16.mxu0 0
  %419 = vmatpush2.bf16.msra.mxu0 0
  %420 = vmatprep.mubr.bf16.mxu0 0
  %421 = vmatmul.mubr.bf16.gmra.mxu0 %v176
  %v422 = vpop.f32.mrf.mxu0
  %v423 = vadd.f32 0.0, %v422
  %v424 = vpop.f32.mrf.mxu0
  %v425 = vadd.f32 0.0, %v424
  %v426 = vpop.f32.mrf.mxu0
  %v427 = vadd.f32 0.0, %v426
  %v428 = vpop.f32.mrf.mxu0
  %v429 = vadd.f32 0.0, %v428
  %430 = vmatprep.mubr.bf16.mxu0 0
  %431 = vmatmul.mubr.bf16.gmra.mxu0 %v177
  %v432 = vpop.f32.mrf.mxu0
  %v433 = vadd.f32 0.0, %v432
  %v434 = vpop.f32.mrf.mxu0
  %v435 = vadd.f32 0.0, %v434
  %v436 = vpop.f32.mrf.mxu0
  %v437 = vadd.f32 0.0, %v436
  %v438 = vpop.f32.mrf.mxu0
  %v439 = vadd.f32 0.0, %v438
  %440 = vdwg.mxu0
  %441 = vmatprep.subr.bf16.mxu0 %v346
  %442 = vmatpush1.bf16.msra.mxu0 %v345
  %443 = vmatprep.subr.bf16.mxu0 %v341
  %444 = vmatpush1.bf16.msra.mxu0 %v340
  %445 = vmatprep.subr.bf16.mxu0 %v336
  %446 = vmatpush1.bf16.msra.mxu0 %v335
  %447 = vmatprep.subr.bf16.mxu0 %v331
  %448 = vmatpush1.bf16.msra.mxu0 %v330
  %449 = vmatprep.subr.bf16.mxu0 %v326
  %450 = vmatpush1.bf16.msra.mxu0 %v325
  %451 = vmatprep.subr.bf16.mxu0 %v321
  %452 = vmatpush1.bf16.msra.mxu0 %v320
  %453 = vmatprep.subr.bf16.mxu0 %v316
  %454 = vmatpush1.bf16.msra.mxu0 %v315
  %455 = vmatprep.subr.bf16.mxu0 %v311
  %456 = vmatpush1.bf16.msra.mxu0 %v310
  %457 = vmatprep.subr.bf16.mxu0 0
  %458 = vmatpush2.bf16.msra.mxu0 0
  %459 = vmatprep.subr.bf16.mxu0 0
  %460 = vmatpush2.bf16.msra.mxu0 0
  %461 = vmatprep.subr.bf16.mxu0 0
  %462 = vmatpush2.bf16.msra.mxu0 0
  %463 = vmatprep.subr.bf16.mxu0 0
  %464 = vmatpush2.bf16.msra.mxu0 0
  %465 = vmatprep.subr.bf16.mxu0 0
  %466 = vmatpush2.bf16.msra.mxu0 0
  %467 = vmatprep.subr.bf16.mxu0 0
  %468 = vmatpush2.bf16.msra.mxu0 0
  %469 = vmatprep.subr.bf16.mxu0 0
  %470 = vmatpush2.bf16.msra.mxu0 0
  %471 = vmatprep.subr.bf16.mxu0 0
  %472 = vmatpush2.bf16.msra.mxu0 0
  %473 = vmatprep.mubr.bf16.mxu0 0
  %474 = vmatmul.mubr.bf16.gmra.mxu0 %v176
  %v475 = vpop.f32.mrf.mxu0
  %v476 = vadd.f32 0.0, %v475
  %v477 = vpop.f32.mrf.mxu0
  %v478 = vadd.f32 0.0, %v477
  %v479 = vpop.f32.mrf.mxu0
  %v480 = vadd.f32 0.0, %v479
  %v481 = vpop.f32.mrf.mxu0
  %v482 = vadd.f32 0.0, %v481
  %483 = vmatprep.mubr.bf16.mxu0 0
  %484 = vmatmul.mubr.bf16.gmra.mxu0 %v177
  %v485 = vpop.f32.mrf.mxu0
  %v486 = vadd.f32 0.0, %v485
  %v487 = vpop.f32.mrf.mxu0
  %v488 = vadd.f32 0.0, %v487
  %v489 = vpop.f32.mrf.mxu0
  %v490 = vadd.f32 0.0, %v489
  %v491 = vpop.f32.mrf.mxu0
  %v492 = vadd.f32 0.0, %v491
  %493 = vdwg.mxu0
  %494 = vmatprep.subr.bf16.mxu0 0
  %495 = vmatpush1.bf16.msra.mxu0 %v347
  %496 = vmatprep.subr.bf16.mxu0 0
  %497 = vmatpush1.bf16.msra.mxu0 %v342
  %498 = vmatprep.subr.bf16.mxu0 0
  %499 = vmatpush1.bf16.msra.mxu0 %v337
  %500 = vmatprep.subr.bf16.mxu0 0
  %501 = vmatpush1.bf16.msra.mxu0 %v332
  %502 = vmatprep.subr.bf16.mxu0 0
  %503 = vmatpush1.bf16.msra.mxu0 %v327
  %504 = vmatprep.subr.bf16.mxu0 0
  %505 = vmatpush1.bf16.msra.mxu0 %v322
  %506 = vmatprep.subr.bf16.mxu0 0
  %507 = vmatpush1.bf16.msra.mxu0 %v317
  %508 = vmatprep.subr.bf16.mxu0 0
  %509 = vmatpush1.bf16.msra.mxu0 %v312
  %510 = vmatprep.subr.bf16.mxu0 0
  %511 = vmatpush2.bf16.msra.mxu0 0
  %512 = vmatprep.subr.bf16.mxu0 0
  %513 = vmatpush2.bf16.msra.mxu0 0
  %514 = vmatprep.subr.bf16.mxu0 0
  %515 = vmatpush2.bf16.msra.mxu0 0
  %516 = vmatprep.subr.bf16.mxu0 0
  %517 = vmatpush2.bf16.msra.mxu0 0
  %518 = vmatprep.subr.bf16.mxu0 0
  %519 = vmatpush2.bf16.msra.mxu0 0
  %520 = vmatprep.subr.bf16.mxu0 0
  %521 = vmatpush2.bf16.msra.mxu0 0
  %522 = vmatprep.subr.bf16.mxu0 0
  %523 = vmatpush2.bf16.msra.mxu0 0
  %524 = vmatprep.subr.bf16.mxu0 0
  %525 = vmatpush2.bf16.msra.mxu0 0
  %526 = vmatprep.mubr.bf16.mxu0 0
  %527 = vmatmul.mubr.bf16.gmra.mxu0 %v176
  %v528 = vpop.f32.mrf.mxu0
  %v529 = vadd.f32 0.0, %v528
  %v530 = vpop.f32.mrf.mxu0
  %v531 = vpop.f32.mrf.mxu0
  %v532 = vadd.f32 0.0, %v531
  %v533 = vpop.f32.mrf.mxu0
  %534 = vmatprep.mubr.bf16.mxu0 0
  %535 = vmatmul.mubr.bf16.gmra.mxu0 %v177
  %v536 = vpop.f32.mrf.mxu0
  %v537 = vadd.f32 0.0, %v536
  %v538 = vpop.f32.mrf.mxu0
  %v539 = vpop.f32.mrf.mxu0
  %v540 = vadd.f32 0.0, %v539
  %v541 = vpop.f32.mrf.mxu0
  %542 = vdwg.mxu0
  %v547 = vunpack.c.l.b16 %v64
  %v548 = vunpack.c.l.b16 %v65
  %v549 = vunpack.c.l.b16 %v66
  %v550 = vunpack.c.l.b16 %v67
  %v551 = vpack.c.b16 %v548, %v547
  %v552 = vpack.c.b16 %v550, %v549
  %v603 = vunpack.c.l.b16 %v68
  %v604 = vunpack.c.h.b16 %v68
  %v605 = vunpack.c.l.b16 %v69
  %v606 = vunpack.c.h.b16 %v69
  %v607 = vunpack.c.l.b16 %v70
  %v608 = vunpack.c.l.b16 %v71
  %v609 = vunpack.c.h.b16 %v71
  %v610 = vunpack.c.l.b16 %v72
  %v611 = vunpack.c.h.b16 %v72
  %v612 = vunpack.c.l.b16 %v73
  %v613 = vunpack.c.l.b16 %v74
  %v614 = vunpack.c.h.b16 %v74
  %v615 = vunpack.c.l.b16 %v75
  %v616 = vunpack.c.h.b16 %v75
  %v617 = vunpack.c.l.b16 %v76
  %v618 = vunpack.c.l.b16 %v77
  %v619 = vunpack.c.h.b16 %v77
  %v620 = vunpack.c.l.b16 %v78
  %v621 = vunpack.c.h.b16 %v78
  %v622 = vunpack.c.l.b16 %v79
  %v623 = vunpack.c.l.b16 %v80
  %v624 = vunpack.c.h.b16 %v80
  %v625 = vunpack.c.l.b16 %v81
  %v626 = vunpack.c.h.b16 %v81
  %v627 = vunpack.c.l.b16 %v82
  %v628 = vunpack.c.l.b16 %v83
  %v629 = vunpack.c.h.b16 %v83
  %v630 = vunpack.c.l.b16 %v84
  %v631 = vunpack.c.h.b16 %v84
  %v632 = vunpack.c.l.b16 %v85
  %v633 = vunpack.c.l.b16 %v86
  %v634 = vunpack.c.h.b16 %v86
  %v635 = vunpack.c.l.b16 %v87
  %v636 = vunpack.c.h.b16 %v87
  %v637 = vunpack.c.l.b16 %v88
  %v638 = vunpack.c.l.b16 %v89
  %v639 = vunpack.c.h.b16 %v89
  %v640 = vunpack.c.l.b16 %v90
  %v641 = vunpack.c.h.b16 %v90
  %v642 = vunpack.c.l.b16 %v91
  %v643 = vunpack.c.l.b16 %v92
  %v644 = vunpack.c.h.b16 %v92
  %v645 = vunpack.c.l.b16 %v93
  %v646 = vunpack.c.h.b16 %v93
  %v647 = vunpack.c.l.b16 %v94
  %v648 = vunpack.c.l.b16 %v95
  %v649 = vunpack.c.h.b16 %v95
  %v650 = vunpack.c.l.b16 %v96
  %v651 = vunpack.c.h.b16 %v96
  %v652 = vunpack.c.l.b16 %v97
  %v653 = vunpack.c.l.b16 %v98
  %v654 = vunpack.c.h.b16 %v98
  %v655 = vunpack.c.l.b16 %v99
  %v656 = vunpack.c.h.b16 %v99
  %v657 = vunpack.c.l.b16 %v100
  %v658 = vunpack.c.l.b16 %v101
  %v659 = vunpack.c.h.b16 %v101
  %v660 = vunpack.c.l.b16 %v102
  %v661 = vunpack.c.h.b16 %v102
  %v662 = vunpack.c.l.b16 %v103
  %v663 = vunpack.c.l.b16 %v104
  %v664 = vunpack.c.h.b16 %v104
  %v665 = vunpack.c.l.b16 %v105
  %v666 = vunpack.c.h.b16 %v105
  %v667 = vunpack.c.l.b16 %v106
  %v668 = vunpack.c.l.b16 %v107
  %v669 = vunpack.c.h.b16 %v107
  %v670 = vunpack.c.l.b16 %v108
  %v671 = vunpack.c.h.b16 %v108
  %v672 = vunpack.c.l.b16 %v109
  %v673 = vunpack.c.l.b16 %v110
  %v674 = vunpack.c.h.b16 %v110
  %v675 = vunpack.c.l.b16 %v111
  %v676 = vunpack.c.h.b16 %v111
  %v677 = vunpack.c.l.b16 %v112
  %v678 = vunpack.c.l.b16 %v113
  %v679 = vunpack.c.h.b16 %v113
  %v680 = vunpack.c.l.b16 %v114
  %v681 = vunpack.c.h.b16 %v114
  %v682 = vunpack.c.l.b16 %v115
  %v683 = vpack.c.b16 %v608, %v603
  %v684 = vpack.c.b16 %v609, %v604
  %v685 = vpack.c.b16 %v610, %v605
  %v686 = vpack.c.b16 %v611, %v606
  %v687 = vpack.c.b16 %v612, %v607
  %v688 = vpack.c.b16 %v618, %v613
  %v689 = vpack.c.b16 %v619, %v614
  %v690 = vpack.c.b16 %v620, %v615
  %v691 = vpack.c.b16 %v621, %v616
  %v692 = vpack.c.b16 %v622, %v617
  %v693 = vpack.c.b16 %v628, %v623
  %v694 = vpack.c.b16 %v629, %v624
  %v695 = vpack.c.b16 %v630, %v625
  %v696 = vpack.c.b16 %v631, %v626
  %v697 = vpack.c.b16 %v632, %v627
  %v698 = vpack.c.b16 %v638, %v633
  %v699 = vpack.c.b16 %v639, %v634
  %v700 = vpack.c.b16 %v640, %v635
  %v701 = vpack.c.b16 %v641, %v636
  %v702 = vpack.c.b16 %v642, %v637
  %v703 = vpack.c.b16 %v648, %v643
  %v704 = vpack.c.b16 %v649, %v644
  %v705 = vpack.c.b16 %v650, %v645
  %v706 = vpack.c.b16 %v651, %v646
  %v707 = vpack.c.b16 %v652, %v647
  %v708 = vpack.c.b16 %v658, %v653
  %v709 = vpack.c.b16 %v659, %v654
  %v710 = vpack.c.b16 %v660, %v655
  %v711 = vpack.c.b16 %v661, %v656
  %v712 = vpack.c.b16 %v662, %v657
  %v713 = vpack.c.b16 %v668, %v663
  %v714 = vpack.c.b16 %v669, %v664
  %v715 = vpack.c.b16 %v670, %v665
  %v716 = vpack.c.b16 %v671, %v666
  %v717 = vpack.c.b16 %v672, %v667
  %v718 = vpack.c.b16 %v678, %v673
  %v719 = vpack.c.b16 %v679, %v674
  %v720 = vpack.c.b16 %v680, %v675
  %v721 = vpack.c.b16 %v681, %v676
  %v722 = vpack.c.b16 %v682, %v677
  %763 = vmatprep.subr.bf16.mxu0 %v719
  %764 = vmatpush1.bf16.msra.mxu0 %v718
  %765 = vmatprep.subr.bf16.mxu0 %v714
  %766 = vmatpush1.bf16.msra.mxu0 %v713
  %767 = vmatprep.subr.bf16.mxu0 %v709
  %768 = vmatpush1.bf16.msra.mxu0 %v708
  %769 = vmatprep.subr.bf16.mxu0 %v704
  %770 = vmatpush1.bf16.msra.mxu0 %v703
  %771 = vmatprep.subr.bf16.mxu0 %v699
  %772 = vmatpush1.bf16.msra.mxu0 %v698
  %773 = vmatprep.subr.bf16.mxu0 %v694
  %774 = vmatpush1.bf16.msra.mxu0 %v693
  %775 = vmatprep.subr.bf16.mxu0 %v689
  %776 = vmatpush1.bf16.msra.mxu0 %v688
  %777 = vmatprep.subr.bf16.mxu0 %v684
  %778 = vmatpush1.bf16.msra.mxu0 %v683
  %779 = vmatprep.subr.bf16.mxu0 0
  %780 = vmatpush2.bf16.msra.mxu0 0
  %781 = vmatprep.subr.bf16.mxu0 0
  %782 = vmatpush2.bf16.msra.mxu0 0
  %783 = vmatprep.subr.bf16.mxu0 0
  %784 = vmatpush2.bf16.msra.mxu0 0
  %785 = vmatprep.subr.bf16.mxu0 0
  %786 = vmatpush2.bf16.msra.mxu0 0
  %787 = vmatprep.subr.bf16.mxu0 0
  %788 = vmatpush2.bf16.msra.mxu0 0
  %789 = vmatprep.subr.bf16.mxu0 0
  %790 = vmatpush2.bf16.msra.mxu0 0
  %791 = vmatprep.subr.bf16.mxu0 0
  %792 = vmatpush2.bf16.msra.mxu0 0
  %793 = vmatprep.subr.bf16.mxu0 0
  %794 = vmatpush2.bf16.msra.mxu0 0
  %795 = vmatprep.mubr.bf16.mxu0 0
  %796 = vmatmul.mubr.bf16.gmra.mxu0 %v551
  %v797 = vpop.f32.mrf.mxu0
  %v798 = vadd.f32 %v423, %v797
  %v799 = vpop.f32.mrf.mxu0
  %v800 = vadd.f32 %v425, %v799
  %v801 = vpop.f32.mrf.mxu0
  %v802 = vadd.f32 %v427, %v801
  %v803 = vpop.f32.mrf.mxu0
  %v804 = vadd.f32 %v429, %v803
  %805 = vmatprep.mubr.bf16.mxu0 0
  %806 = vmatmul.mubr.bf16.gmra.mxu0 %v552
  %v807 = vpop.f32.mrf.mxu0
  %v808 = vadd.f32 %v433, %v807
  %v809 = vpop.f32.mrf.mxu0
  %v810 = vadd.f32 %v435, %v809
  %v811 = vpop.f32.mrf.mxu0
  %v812 = vadd.f32 %v437, %v811
  %v813 = vpop.f32.mrf.mxu0
  %v814 = vadd.f32 %v439, %v813
  %815 = vdwg.mxu0
  %816 = vmatprep.subr.bf16.mxu0 %v721
  %817 = vmatpush1.bf16.msra.mxu0 %v720
  %818 = vmatprep.subr.bf16.mxu0 %v716
  %819 = vmatpush1.bf16.msra.mxu0 %v715
  %820 = vmatprep.subr.bf16.mxu0 %v711
  %821 = vmatpush1.bf16.msra.mxu0 %v710
  %822 = vmatprep.subr.bf16.mxu0 %v706
  %823 = vmatpush1.bf16.msra.mxu0 %v705
  %824 = vmatprep.subr.bf16.mxu0 %v701
  %825 = vmatpush1.bf16.msra.mxu0 %v700
  %826 = vmatprep.subr.bf16.mxu0 %v696
  %827 = vmatpush1.bf16.msra.mxu0 %v695
  %828 = vmatprep.subr.bf16.mxu0 %v691
  %829 = vmatpush1.bf16.msra.mxu0 %v690
  %830 = vmatprep.subr.bf16.mxu0 %v686
  %831 = vmatpush1.bf16.msra.mxu0 %v685
  %832 = vmatprep.subr.bf16.mxu0 0
  %833 = vmatpush2.bf16.msra.mxu0 0
  %834 = vmatprep.subr.bf16.mxu0 0
  %835 = vmatpush2.bf16.msra.mxu0 0
  %836 = vmatprep.subr.bf16.mxu0 0
  %837 = vmatpush2.bf16.msra.mxu0 0
  %838 = vmatprep.subr.bf16.mxu0 0
  %839 = vmatpush2.bf16.msra.mxu0 0
  %840 = vmatprep.subr.bf16.mxu0 0
  %841 = vmatpush2.bf16.msra.mxu0 0
  %842 = vmatprep.subr.bf16.mxu0 0
  %843 = vmatpush2.bf16.msra.mxu0 0
  %844 = vmatprep.subr.bf16.mxu0 0
  %845 = vmatpush2.bf16.msra.mxu0 0
  %846 = vmatprep.subr.bf16.mxu0 0
  %847 = vmatpush2.bf16.msra.mxu0 0
  %848 = vmatprep.mubr.bf16.mxu0 0
  %849 = vmatmul.mubr.bf16.gmra.mxu0 %v551
  %v850 = vpop.f32.mrf.mxu0
  %v851 = vadd.f32 %v476, %v850
  %v852 = vpop.f32.mrf.mxu0
  %v853 = vadd.f32 %v478, %v852
  %v854 = vpop.f32.mrf.mxu0
  %v855 = vadd.f32 %v480, %v854
  %v856 = vpop.f32.mrf.mxu0
  %v857 = vadd.f32 %v482, %v856
  %858 = vmatprep.mubr.bf16.mxu0 0
  %859 = vmatmul.mubr.bf16.gmra.mxu0 %v552
  %v860 = vpop.f32.mrf.mxu0
  %v861 = vadd.f32 %v486, %v860
  %v862 = vpop.f32.mrf.mxu0
  %v863 = vadd.f32 %v488, %v862
  %v864 = vpop.f32.mrf.mxu0
  %v865 = vadd.f32 %v490, %v864
  %v866 = vpop.f32.mrf.mxu0
  %v867 = vadd.f32 %v492, %v866
  %868 = vdwg.mxu0
  %869 = vmatprep.subr.bf16.mxu0 0
  %870 = vmatpush1.bf16.msra.mxu0 %v722
  %871 = vmatprep.subr.bf16.mxu0 0
  %872 = vmatpush1.bf16.msra.mxu0 %v717
  %873 = vmatprep.subr.bf16.mxu0 0
  %874 = vmatpush1.bf16.msra.mxu0 %v712
  %875 = vmatprep.subr.bf16.mxu0 0
  %876 = vmatpush1.bf16.msra.mxu0 %v707
  %877 = vmatprep.subr.bf16.mxu0 0
  %878 = vmatpush1.bf16.msra.mxu0 %v702
  %879 = vmatprep.subr.bf16.mxu0 0
  %880 = vmatpush1.bf16.msra.mxu0 %v697
  %881 = vmatprep.subr.bf16.mxu0 0
  %882 = vmatpush1.bf16.msra.mxu0 %v692
  %883 = vmatprep.subr.bf16.mxu0 0
  %884 = vmatpush1.bf16.msra.mxu0 %v687
  %885 = vmatprep.subr.bf16.mxu0 0
  %886 = vmatpush2.bf16.msra.mxu0 0
  %887 = vmatprep.subr.bf16.mxu0 0
  %888 = vmatpush2.bf16.msra.mxu0 0
  %889 = vmatprep.subr.bf16.mxu0 0
  %890 = vmatpush2.bf16.msra.mxu0 0
  %891 = vmatprep.subr.bf16.mxu0 0
  %892 = vmatpush2.bf16.msra.mxu0 0
  %893 = vmatprep.subr.bf16.mxu0 0
  %894 = vmatpush2.bf16.msra.mxu0 0
  %895 = vmatprep.subr.bf16.mxu0 0
  %896 = vmatpush2.bf16.msra.mxu0 0
  %897 = vmatprep.subr.bf16.mxu0 0
  %898 = vmatpush2.bf16.msra.mxu0 0
  %899 = vmatprep.subr.bf16.mxu0 0
  %900 = vmatpush2.bf16.msra.mxu0 0
  %901 = vmatprep.mubr.bf16.mxu0 0
  %902 = vmatmul.mubr.bf16.gmra.mxu0 %v551
  %v903 = vpop.f32.mrf.mxu0
  %v904 = vadd.f32 %v529, %v903
  %v905 = vpop.f32.mrf.mxu0
  %v906 = vpop.f32.mrf.mxu0
  %v907 = vadd.f32 %v532, %v906
  %v908 = vpop.f32.mrf.mxu0
  %909 = vmatprep.mubr.bf16.mxu0 0
  %910 = vmatmul.mubr.bf16.gmra.mxu0 %v552
  %v911 = vpop.f32.mrf.mxu0
  %v912 = vadd.f32 %v537, %v911
  %v913 = vpop.f32.mrf.mxu0
  %v914 = vpop.f32.mrf.mxu0
  %v915 = vadd.f32 %v540, %v914
  %v916 = vpop.f32.mrf.mxu0
  %917 = vdwg.mxu0
  %v918 = vadd.f32 %v44, %v798
  %v919 = vadd.f32 %v45, %v800
  %v920 = vadd.f32 %v46, %v851
  %v921 = vadd.f32 %v47, %v853
  %v922 = vadd.f32 %v48, %v904
  %v923 = vadd.f32 %v49, %v802
  %v924 = vadd.f32 %v50, %v804
  %v925 = vadd.f32 %v51, %v855
  %v926 = vadd.f32 %v52, %v857
  %v927 = vadd.f32 %v53, %v907
  %v928 = vadd.f32 %v54, %v808
  %v929 = vadd.f32 %v55, %v810
  %v930 = vadd.f32 %v56, %v861
  %v931 = vadd.f32 %v57, %v863
  %v932 = vadd.f32 %v58, %v912
  %v933 = vadd.f32 %v59, %v812
  %v934 = vadd.f32 %v60, %v814
  %v935 = vadd.f32 %v61, %v865
  %v936 = vadd.f32 %v62, %v867
  %v937 = vadd.f32 %v63, %v915
  %938 = vst [vmem:[#allocation2] sm:$0xff] %v918
  %939 = vst [vmem:[#allocation2 + $0x8] sm:$0xff] %v919
  %940 = vst [vmem:[#allocation2 + $0x10] sm:$0xff] %v920
  %941 = vst [vmem:[#allocation2 + $0x18] sm:$0xff] %v921
  %942 = vst [vmem:[#allocation2 + $0x20] sm:$0xff] %v922
  %943 = vst [vmem:[#allocation2 + $0x28] sm:$0xff] %v923
  %944 = vst [vmem:[#allocation2 + $0x30] sm:$0xff] %v924
  %945 = vst [vmem:[#allocation2 + $0x38] sm:$0xff] %v925
  %946 = vst [vmem:[#allocation2 + $0x40] sm:$0xff] %v926
  %947 = vst [vmem:[#allocation2 + $0x48] sm:$0xff] %v927
  %948 = vst [vmem:[#allocation2 + $0x50] sm:$0xff] %v928
  %949 = vst [vmem:[#allocation2 + $0x58] sm:$0xff] %v929
  %950 = vst [vmem:[#allocation2 + $0x60] sm:$0xff] %v930
  %951 = vst [vmem:[#allocation2 + $0x68] sm:$0xff] %v931
  %952 = vst [vmem:[#allocation2 + $0x70] sm:$0xff] %v932
  %953 = vst [vmem:[#allocation2 + $0x78] sm:$0xff] %v933
  %954 = vst [vmem:[#allocation2 + $0x80] sm:$0xff] %v934
  %955 = vst [vmem:[#allocation2 + $0x88] sm:$0xff] %v935
  %956 = vst [vmem:[#allocation2 + $0x90] sm:$0xff] %v936
  %957 = vst [vmem:[#allocation2 + $0x98] sm:$0xff] %v937
  // Predicated region
  $region22: #{forward.18} parent=0 // pred_check
    %p958 = pneg %p20
  $region23: #{forward.18} parent=0 // pred_check_branch
    %960 = sbr.rel (%p958) target = $region25
  $region24: #{forward.18} parent=0 // pred_region
    %v961 = vld [vmem:[#allocation2] sm:$0xff]
    %v962 = vld [vmem:[#allocation2 + $0x8] sm:$0xff]
    %v963 = vld [vmem:[#allocation2 + $0x10] sm:$0xff]
    %v964 = vld [vmem:[#allocation2 + $0x18] sm:$0xff]
    %v965 = vld [vmem:[#allocation2 + $0x28] sm:$0xff]
    %v966 = vld [vmem:[#allocation2 + $0x30] sm:$0xff]
    %v967 = vld [vmem:[#allocation2 + $0x38] sm:$0xff]
    %v968 = vld [vmem:[#allocation2 + $0x40] sm:$0xff]
    %v969 = vld [vmem:[#allocation2 + $0x50] sm:$0xff]
    %v970 = vld [vmem:[#allocation2 + $0x58] sm:$0xff]
    %v971 = vld [vmem:[#allocation2 + $0x60] sm:$0xff]
    %v972 = vld [vmem:[#allocation2 + $0x68] sm:$0xff]
    %v973 = vld [vmem:[#allocation2 + $0x78] sm:$0xff]
    %v974 = vld [vmem:[#allocation2 + $0x80] sm:$0xff]
    %v975 = vld [vmem:[#allocation2 + $0x88] sm:$0xff]
    %v976 = vld [vmem:[#allocation2 + $0x90] sm:$0xff]
    %v977 = vxor.u32 %v961, 2147483648
    %v978 = vxor.u32 %v962, 2147483648
    %v979 = vxor.u32 %v963, 2147483648
    %v980 = vxor.u32 %v964, 2147483648
    %v981 = vxor.u32 %v965, 2147483648
    %v982 = vxor.u32 %v966, 2147483648
    %v983 = vxor.u32 %v967, 2147483648
    %v984 = vxor.u32 %v968, 2147483648
    %v985 = vxor.u32 %v969, 2147483648
    %v986 = vxor.u32 %v970, 2147483648
    %v987 = vxor.u32 %v971, 2147483648
    %v988 = vxor.u32 %v972, 2147483648
    %v989 = vxor.u32 %v973, 2147483648
    %v990 = vxor.u32 %v974, 2147483648
    %v991 = vxor.u32 %v975, 2147483648
    %v992 = vxor.u32 %v976, 2147483648
    %v993 = vmul.f32 %v977, 1.442695
    %v994 = vpow.pop %v993
    %v995 = vmul.f32 %v978, 1.442695
    %v996 = vpow.pop %v995
    %v997 = vmul.f32 %v979, 1.442695
    %v998 = vpow.pop %v997
    %v999 = vmul.f32 %v980, 1.442695
    %v1000 = vpow.pop %v999
    %v1001 = vmul.f32 %v981, 1.442695
    %v1002 = vpow.pop %v1001
    %v1003 = vmul.f32 %v982, 1.442695
    %v1004 = vpow.pop %v1003
    %v1005 = vmul.f32 %v983, 1.442695
    %v1006 = vpow.pop %v1005
    %v1007 = vmul.f32 %v984, 1.442695
    %v1008 = vpow.pop %v1007
    %v1009 = vmul.f32 %v985, 1.442695
    %v1010 = vpow.pop %v1009
    %v1011 = vmul.f32 %v986, 1.442695
    %v1012 = vpow.pop %v1011
    %v1013 = vmul.f32 %v987, 1.442695
    %v1014 = vpow.pop %v1013
    %v1015 = vmul.f32 %v988, 1.442695
    %v1016 = vpow.pop %v1015
    %v1017 = vmul.f32 %v989, 1.442695
    %v1018 = vpow.pop %v1017
    %v1019 = vmul.f32 %v990, 1.442695
    %v1020 = vpow.pop %v1019
    %v1021 = vmul.f32 %v991, 1.442695
    %v1022 = vpow.pop %v1021
    %v1023 = vmul.f32 %v992, 1.442695
    %v1024 = vpow.pop %v1023
    %v1025 = vadd.f32 %v994, 1.0
    %v1026 = vadd.f32 %v996, 1.0
    %v1027 = vadd.f32 %v998, 1.0
    %v1028 = vadd.f32 %v1000, 1.0
    %v1029 = vadd.f32 %v1002, 1.0
    %v1030 = vadd.f32 %v1004, 1.0
    %v1031 = vadd.f32 %v1006, 1.0
    %v1032 = vadd.f32 %v1008, 1.0
    %v1033 = vadd.f32 %v1010, 1.0
    %v1034 = vadd.f32 %v1012, 1.0
    %v1035 = vadd.f32 %v1014, 1.0
    %v1036 = vadd.f32 %v1016, 1.0
    %v1037 = vadd.f32 %v1018, 1.0
    %v1038 = vadd.f32 %v1020, 1.0
    %v1039 = vadd.f32 %v1022, 1.0
    %v1040 = vadd.f32 %v1024, 1.0
    %v1041 = vrcp.pop %v1025
    %v1042 = vmul.f32 1.0, %v1041
    %v1043 = vrcp.pop %v1026
    %v1044 = vmul.f32 1.0, %v1043
    %v1045 = vrcp.pop %v1027
    %v1046 = vmul.f32 1.0, %v1045
    %v1047 = vrcp.pop %v1028
    %v1048 = vmul.f32 1.0, %v1047
    %v1049 = vrcp.pop %v1029
    %v1050 = vmul.f32 1.0, %v1049
    %v1051 = vrcp.pop %v1030
    %v1052 = vmul.f32 1.0, %v1051
    %v1053 = vrcp.pop %v1031
    %v1054 = vmul.f32 1.0, %v1053
    %v1055 = vrcp.pop %v1032
    %v1056 = vmul.f32 1.0, %v1055
    %v1057 = vrcp.pop %v1033
    %v1058 = vmul.f32 1.0, %v1057
    %v1059 = vrcp.pop %v1034
    %v1060 = vmul.f32 1.0, %v1059
    %v1061 = vrcp.pop %v1035
    %v1062 = vmul.f32 1.0, %v1061
    %v1063 = vrcp.pop %v1036
    %v1064 = vmul.f32 1.0, %v1063
    %v1065 = vrcp.pop %v1037
    %v1066 = vmul.f32 1.0, %v1065
    %v1067 = vrcp.pop %v1038
    %v1068 = vmul.f32 1.0, %v1067
    %v1069 = vrcp.pop %v1039
    %v1070 = vmul.f32 1.0, %v1069
    %v1071 = vrcp.pop %v1040
    %v1072 = vmul.f32 1.0, %v1071
    %v1073 = vmul.f32 %v961, %v1042
    %v1074 = vmul.f32 %v962, %v1044
    %v1075 = vmul.f32 %v963, %v1046
    %v1076 = vmul.f32 %v964, %v1048
    %v1077 = vmul.f32 %v965, %v1050
    %v1078 = vmul.f32 %v966, %v1052
    %v1079 = vmul.f32 %v967, %v1054
    %v1080 = vmul.f32 %v968, %v1056
    %v1081 = vmul.f32 %v969, %v1058
    %v1082 = vmul.f32 %v970, %v1060
    %v1083 = vmul.f32 %v971, %v1062
    %v1084 = vmul.f32 %v972, %v1064
    %v1085 = vmul.f32 %v973, %v1066
    %v1086 = vmul.f32 %v974, %v1068
    %v1087 = vmul.f32 %v975, %v1070
    %v1088 = vmul.f32 %v976, %v1072
    %v1089 = vpack.c.bf16 %v1077, %v1073
    %v1090 = vpack.c.bf16 %v1078, %v1074
    %v1091 = vpack.c.bf16 %v1079, %v1075
    %v1092 = vpack.c.bf16 %v1080, %v1076
    %v1093 = vpack.c.bf16 %v1085, %v1081
    %v1094 = vpack.c.bf16 %v1086, %v1082
    %v1095 = vpack.c.bf16 %v1087, %v1083
    %v1096 = vpack.c.bf16 %v1088, %v1084
    %v1105 = vunpack.c.l.b16 %v1089
    %v1106 = vunpack.c.l.b16 %v1090
    %v1107 = vunpack.c.l.b16 %v1091
    %v1108 = vunpack.c.l.b16 %v1092
    %v1109 = vunpack.c.h.b16 %v1089
    %v1110 = vunpack.c.h.b16 %v1090
    %v1111 = vunpack.c.h.b16 %v1091
    %v1112 = vunpack.c.h.b16 %v1092
    %v1113 = vunpack.c.l.b16 %v1093
    %v1114 = vunpack.c.l.b16 %v1094
    %v1115 = vunpack.c.l.b16 %v1095
    %v1116 = vunpack.c.l.b16 %v1096
    %v1117 = vunpack.c.h.b16 %v1093
    %v1118 = vunpack.c.h.b16 %v1094
    %v1119 = vunpack.c.h.b16 %v1095
    %v1120 = vunpack.c.h.b16 %v1096
    %v1121 = vpack.c.b16 %v1106, %v1105
    %v1122 = vpack.c.b16 %v1108, %v1107
    %v1123 = vpack.c.b16 %v1110, %v1109
    %v1124 = vpack.c.b16 %v1112, %v1111
    %v1125 = vpack.c.b16 %v1114, %v1113
    %v1126 = vpack.c.b16 %v1116, %v1115
    %v1127 = vpack.c.b16 %v1118, %v1117
    %v1128 = vpack.c.b16 %v1120, %v1119
    %1137 = vst [vmem:[%s4] sm:$0xff] %v1121
    %1138 = vst [vmem:[%s4 + $0x8] sm:$0xff] %v1122
    %1139 = vst [vmem:[%s4 + $0x10] sm:$0xff] %v1123
    %1140 = vst [vmem:[%s4 + $0x18] sm:$0xff] %v1124
    %1141 = vst [vmem:[%s4 + $0x20] sm:$0xff] %v1125
    %1142 = vst [vmem:[%s4 + $0x28] sm:$0xff] %v1126
    %1143 = vst [vmem:[%s4 + $0x30] sm:$0xff] %v1127
    %1144 = vst [vmem:[%s4 + $0x38] sm:$0xff] %v1128
    %v1145 = vld [vmem:[#allocation2 + $0x20] sm:$0xff]
    %v1146 = vld [vmem:[#allocation2 + $0x48] sm:$0xff]
    %v1147 = vld [vmem:[#allocation2 + $0x70] sm:$0xff]
    %v1148 = vld [vmem:[#allocation2 + $0x98] sm:$0xff]
    %v1149 = vxor.u32 %v1145, 2147483648
    %v1150 = vxor.u32 %v1146, 2147483648
    %v1151 = vxor.u32 %v1147, 2147483648
    %v1152 = vxor.u32 %v1148, 2147483648
    %v1153 = vmul.f32 %v1149, 1.442695
    %v1154 = vpow.pop %v1153
    %v1155 = vmul.f32 %v1150, 1.442695
    %v1156 = vpow.pop %v1155
    %v1157 = vmul.f32 %v1151, 1.442695
    %v1158 = vpow.pop %v1157
    %v1159 = vmul.f32 %v1152, 1.442695
    %v1160 = vpow.pop %v1159
    %v1161 = vadd.f32 %v1154, 1.0
    %v1162 = vadd.f32 %v1156, 1.0
    %v1163 = vadd.f32 %v1158, 1.0
    %v1164 = vadd.f32 %v1160, 1.0
    %v1165 = vrcp.pop %v1161
    %v1166 = vmul.f32 1.0, %v1165
    %v1167 = vrcp.pop %v1162
    %v1168 = vmul.f32 1.0, %v1167
    %v1169 = vrcp.pop %v1163
    %v1170 = vmul.f32 1.0, %v1169
    %v1171 = vrcp.pop %v1164
    %v1172 = vmul.f32 1.0, %v1171
    %v1173 = vpack.c.bf16 %v1168, %v1166
    %v1174 = vpack.c.bf16 %v1172, %v1170
    %v1177 = vunpack.c.l.b16 %v1173
    %v1178 = vunpack.c.h.b16 %v1173
    %v1179 = vunpack.c.l.b16 %v1174
    %v1180 = vunpack.c.h.b16 %v1174
    %v1181 = vpack.c.b16 %v1177, %v1177
    %v1182 = vpack.c.b16 %v1178, %v1178
    %v1183 = vpack.c.b16 %v1179, %v1179
    %v1184 = vpack.c.b16 %v1180, %v1180
    %1189 = vst [vmem:[%s5] sm:$0xf] %v1181
    %1190 = vst [vmem:[%s5 + $0x4] sm:$0xf] %v1182
    %1191 = vst [vmem:[%s5 + $0x8] sm:$0xf] %v1183
    %1192 = vst [vmem:[%s5 + $0xc] sm:$0xf] %v1184
  $region25: #{forward.18} parent=0 // pred_fallthru
    _
  // Predicated region
  $region26: #{forward.18} parent=0 // pred_check
    _
  $region27: #{forward.18} parent=0 // pred_check_branch
    %1194 = sbr.rel (0) target = $region29
  $region28: #{forward.18} parent=0 // pred_region
    _
  $region29: #{forward.18} parent=0 // pred_fallthru
    _
  // Predicated region
  $region30: #{forward.18} parent=0 // pred_check
    _
  $region31: #{forward.18} parent=0 // pred_check_branch
    %1196 = sbr.rel (0) target = $region33
  $region32: #{forward.18} parent=0 // pred_region
    _
  $region33: #{forward.18} parent=0 // pred_fallthru
    _
  // Predicated region
  $region34: #{forward.18} parent=0 // pred_check
    _
  $region35: #{forward.18} parent=0 // pred_check_branch
    %1198 = sbr.rel (0) target = $region37
  $region36: #{forward.18} parent=0 // pred_region
    _
  $region37: #{forward.18} parent=0 // pred_fallthru
    _
  // Predicated region
  $region38: #{forward.18} parent=0 // pred_check
    _
  $region39: #{forward.18} parent=0 // pred_check_branch
    %1200 = sbr.rel (0) target = $region41
  $region40: #{forward.18} parent=0 // pred_region
    _
  $region41: #{forward.18} parent=0 // pred_fallthru
    _

// kernel: forward.25
$region0: #{forward.25}
  #allocation0 [shape = 'u32[]', space=smem, size = 0x4, offset = 0x4, fixed_abs, tag = 'smem constant byte address 0x4 - core index']
  #allocation1 [shape = 'u32[144,128]{1,0:T(1,128)}', space=vmem, size = 0x12000, scoped, tag = 'internal scratch']
  #allocation2 [shape = 'f32[32,512]{1,0:T(8,128)}', space=vmem, size = 0x10000, scoped, tag = 'scratch operand']
  %s0 = inlined_call_operand.vmem [shape: bf16[32,128], index: 0, kind: input, shape index: {}]
  %s1 = inlined_call_operand.vmem [shape: bf16[128,512], index: 1, kind: input, shape index: {}]
  %s2 = inlined_call_operand.hbm [shape: f32[32,512], index: 2, kind: output, shape index: {}]
  %s3 = sld [smem:[#allocation0]]
  $region26: #{forward.25} parent=0
    _
  %s5 = ssub.s32 1, %s3
  %s6 = scalar_select 0, %s5, %s3
  $region1: #{forward.25} parent=0
    #allocation3 [shape = 'u8[65536]{0}', space=vmem, size = 0x10000, scoped, tag = 'output window, operand 0, single buffered']
    #allocation4 [shape = 's32[1]{0}', space=sflag, size = 0x4, scoped, tag = 'scoped memory for forward.25']
    %7 = vsyncpa [#allocation4], 0
    // Predicated region
    $region2: #{forward.25} parent=1 // pred_check
      _
    $region3: #{forward.25} parent=1 // pred_check_branch
      %9 = sbr.rel (0) target = $region5
    $region4: #{forward.25} parent=1 // pred_region
      _
    $region5: #{forward.25} parent=1 // pred_fallthru
      _
    // Predicated region
    $region6: #{forward.25} parent=1 // pred_check
      _
    $region7: #{forward.25} parent=1 // pred_check_branch
      %11 = sbr.rel (0) target = $region9
    $region8: #{forward.25} parent=1 // pred_region
      _
    $region9: #{forward.25} parent=1 // pred_fallthru
      _
    %p13 = scmp.eq.s32.totalorder 0, 0
    // Predicated region
    $region10: #{forward.25} parent=1 // pred_check
      %p14 = pneg %p13
    $region11: #{forward.25} parent=1 // pred_check_branch
      %16 = sbr.rel (%p14) target = $region13
    $region12: #{forward.25} parent=1 // pred_region
      %17 = vst [vmem:[#allocation2] sm:$0xff] 0.0
      %18 = vst [vmem:[#allocation2 + $0x8] sm:$0xff] 0.0
      %19 = vst [vmem:[#allocation2 + $0x10] sm:$0xff] 0.0
      %20 = vst [vmem:[#allocation2 + $0x18] sm:$0xff] 0.0
      %21 = vst [vmem:[#allocation2 + $0x20] sm:$0xff] 0.0
      %22 = vst [vmem:[#allocation2 + $0x28] sm:$0xff] 0.0
      %23 = vst [vmem:[#allocation2 + $0x30] sm:$0xff] 0.0
      %24 = vst [vmem:[#allocation2 + $0x38] sm:$0xff] 0.0
      %25 = vst [vmem:[#allocation2 + $0x40] sm:$0xff] 0.0
      %26 = vst [vmem:[#allocation2 + $0x48] sm:$0xff] 0.0
      %27 = vst [vmem:[#allocation2 + $0x50] sm:$0xff] 0.0
      %28 = vst [vmem:[#allocation2 + $0x58] sm:$0xff] 0.0
      %29 = vst [vmem:[#allocation2 + $0x60] sm:$0xff] 0.0
      %30 = vst [vmem:[#allocation2 + $0x68] sm:$0xff] 0.0
      %31 = vst [vmem:[#allocation2 + $0x70] sm:$0xff] 0.0
      %32 = vst [vmem:[#allocation2 + $0x78] sm:$0xff] 0.0
    $region13: #{forward.25} parent=1 // pred_fallthru
      _
    %v33 = vld [vmem:[#allocation2] sm:$0xff]
    %v34 = vld [vmem:[#allocation2 + $0x8] sm:$0xff]
    %v35 = vld [vmem:[#allocation2 + $0x10] sm:$0xff]
    %v36 = vld [vmem:[#allocation2 + $0x18] sm:$0xff]
    %v37 = vld [vmem:[#allocation2 + $0x20] sm:$0xff]
    %v38 = vld [vmem:[#allocation2 + $0x28] sm:$0xff]
    %v39 = vld [vmem:[#allocation2 + $0x30] sm:$0xff]
    %v40 = vld [vmem:[#allocation2 + $0x38] sm:$0xff]
    %v41 = vld [vmem:[#allocation2 + $0x40] sm:$0xff]
    %v42 = vld [vmem:[#allocation2 + $0x48] sm:$0xff]
    %v43 = vld [vmem:[#allocation2 + $0x50] sm:$0xff]
    %v44 = vld [vmem:[#allocation2 + $0x58] sm:$0xff]
    %v45 = vld [vmem:[#allocation2 + $0x60] sm:$0xff]
    %v46 = vld [vmem:[#allocation2 + $0x68] sm:$0xff]
    %v47 = vld [vmem:[#allocation2 + $0x70] sm:$0xff]
    %v48 = vld [vmem:[#allocation2 + $0x78] sm:$0xff]
    %v49 = vld [vmem:[%s0] sm:$0xf]
    %v50 = vld [vmem:[%s0 + $0x4] sm:$0xf]
    %v51 = vld [vmem:[%s0 + $0x8] sm:$0xf]
    %v52 = vld [vmem:[%s0 + $0xc] sm:$0xf]
    %v53 = vld [vmem:[%s1] sm:$0xff]
    %v54 = vld [vmem:[%s1 + $0x8] sm:$0xff]
    %v55 = vld [vmem:[%s1 + $0x10] sm:$0xff]
    %v56 = vld [vmem:[%s1 + $0x18] sm:$0xff]
    %v57 = vld [vmem:[%s1 + $0x20] sm:$0xff]
    %v58 = vld [vmem:[%s1 + $0x28] sm:$0xff]
    %v59 = vld [vmem:[%s1 + $0x30] sm:$0xff]
    %v60 = vld [vmem:[%s1 + $0x38] sm:$0xff]
    %v61 = vld [vmem:[%s1 + $0x40] sm:$0xff]
    %v62 = vld [vmem:[%s1 + $0x48] sm:$0xff]
    %v63 = vld [vmem:[%s1 + $0x50] sm:$0xff]
    %v64 = vld [vmem:[%s1 + $0x58] sm:$0xff]
    %v65 = vld [vmem:[%s1 + $0x60] sm:$0xff]
    %v66 = vld [vmem:[%s1 + $0x68] sm:$0xff]
    %v67 = vld [vmem:[%s1 + $0x70] sm:$0xff]
    %v68 = vld [vmem:[%s1 + $0x78] sm:$0xff]
    %v69 = vld [vmem:[%s1 + $0x80] sm:$0xff]
    %v70 = vld [vmem:[%s1 + $0x88] sm:$0xff]
    %v71 = vld [vmem:[%s1 + $0x90] sm:$0xff]
    %v72 = vld [vmem:[%s1 + $0x98] sm:$0xff]
    %v73 = vld [vmem:[%s1 + $0xa0] sm:$0xff]
    %v74 = vld [vmem:[%s1 + $0xa8] sm:$0xff]
    %v75 = vld [vmem:[%s1 + $0xb0] sm:$0xff]
    %v76 = vld [vmem:[%s1 + $0xb8] sm:$0xff]
    %v77 = vld [vmem:[%s1 + $0xc0] sm:$0xff]
    %v78 = vld [vmem:[%s1 + $0xc8] sm:$0xff]
    %v79 = vld [vmem:[%s1 + $0xd0] sm:$0xff]
    %v80 = vld [vmem:[%s1 + $0xd8] sm:$0xff]
    %v81 = vld [vmem:[%s1 + $0xe0] sm:$0xff]
    %v82 = vld [vmem:[%s1 + $0xe8] sm:$0xff]
    %v83 = vld [vmem:[%s1 + $0xf0] sm:$0xff]
    %v84 = vld [vmem:[%s1 + $0xf8] sm:$0xff]
    %v89 = vunpack.c.l.b16 %v49
    %v90 = vunpack.c.l.b16 %v50
    %v91 = vunpack.c.l.b16 %v51
    %v92 = vunpack.c.l.b16 %v52
    %v93 = vpack.c.b16 %v90, %v89
    %v94 = vpack.c.b16 %v92, %v91
    %v129 = vunpack.c.l.b16 %v53
    %v130 = vunpack.c.h.b16 %v53
    %v131 = vunpack.c.l.b16 %v54
    %v132 = vunpack.c.h.b16 %v54
    %v133 = vunpack.c.l.b16 %v55
    %v134 = vunpack.c.h.b16 %v55
    %v135 = vunpack.c.l.b16 %v56
    %v136 = vunpack.c.h.b16 %v56
    %v137 = vunpack.c.l.b16 %v57
    %v138 = vunpack.c.h.b16 %v57
    %v139 = vunpack.c.l.b16 %v58
    %v140 = vunpack.c.h.b16 %v58
    %v141 = vunpack.c.l.b16 %v59
    %v142 = vunpack.c.h.b16 %v59
    %v143 = vunpack.c.l.b16 %v60
    %v144 = vunpack.c.h.b16 %v60
    %v145 = vunpack.c.l.b16 %v61
    %v146 = vunpack.c.h.b16 %v61
    %v147 = vunpack.c.l.b16 %v62
    %v148 = vunpack.c.h.b16 %v62
    %v149 = vunpack.c.l.b16 %v63
    %v150 = vunpack.c.h.b16 %v63
    %v151 = vunpack.c.l.b16 %v64
    %v152 = vunpack.c.h.b16 %v64
    %v153 = vunpack.c.l.b16 %v65
    %v154 = vunpack.c.h.b16 %v65
    %v155 = vunpack.c.l.b16 %v66
    %v156 = vunpack.c.h.b16 %v66
    %v157 = vunpack.c.l.b16 %v67
    %v158 = vunpack.c.h.b16 %v67
    %v159 = vunpack.c.l.b16 %v68
    %v160 = vunpack.c.h.b16 %v68
    %v161 = vunpack.c.l.b16 %v69
    %v162 = vunpack.c.h.b16 %v69
    %v163 = vunpack.c.l.b16 %v70
    %v164 = vunpack.c.h.b16 %v70
    %v165 = vunpack.c.l.b16 %v71
    %v166 = vunpack.c.h.b16 %v71
    %v167 = vunpack.c.l.b16 %v72
    %v168 = vunpack.c.h.b16 %v72
    %v169 = vunpack.c.l.b16 %v73
    %v170 = vunpack.c.h.b16 %v73
    %v171 = vunpack.c.l.b16 %v74
    %v172 = vunpack.c.h.b16 %v74
    %v173 = vunpack.c.l.b16 %v75
    %v174 = vunpack.c.h.b16 %v75
    %v175 = vunpack.c.l.b16 %v76
    %v176 = vunpack.c.h.b16 %v76
    %v177 = vunpack.c.l.b16 %v77
    %v178 = vunpack.c.h.b16 %v77
    %v179 = vunpack.c.l.b16 %v78
    %v180 = vunpack.c.h.b16 %v78
    %v181 = vunpack.c.l.b16 %v79
    %v182 = vunpack.c.h.b16 %v79
    %v183 = vunpack.c.l.b16 %v80
    %v184 = vunpack.c.h.b16 %v80
    %v185 = vunpack.c.l.b16 %v81
    %v186 = vunpack.c.h.b16 %v81
    %v187 = vunpack.c.l.b16 %v82
    %v188 = vunpack.c.h.b16 %v82
    %v189 = vunpack.c.l.b16 %v83
    %v190 = vunpack.c.h.b16 %v83
    %v191 = vunpack.c.l.b16 %v84
    %v192 = vunpack.c.h.b16 %v84
    %v193 = vpack.c.b16 %v133, %v129
    %v194 = vpack.c.b16 %v134, %v130
    %v195 = vpack.c.b16 %v135, %v131
    %v196 = vpack.c.b16 %v136, %v132
    %v197 = vpack.c.b16 %v141, %v137
    %v198 = vpack.c.b16 %v142, %v138
    %v199 = vpack.c.b16 %v143, %v139
    %v200 = vpack.c.b16 %v144, %v140
    %v201 = vpack.c.b16 %v149, %v145
    %v202 = vpack.c.b16 %v150, %v146
    %v203 = vpack.c.b16 %v151, %v147
    %v204 = vpack.c.b16 %v152, %v148
    %v205 = vpack.c.b16 %v157, %v153
    %v206 = vpack.c.b16 %v158, %v154
    %v207 = vpack.c.b16 %v159, %v155
    %v208 = vpack.c.b16 %v160, %v156
    %v209 = vpack.c.b16 %v165, %v161
    %v210 = vpack.c.b16 %v166, %v162
    %v211 = vpack.c.b16 %v167, %v163
    %v212 = vpack.c.b16 %v168, %v164
    %v213 = vpack.c.b16 %v173, %v169
    %v214 = vpack.c.b16 %v174, %v170
    %v215 = vpack.c.b16 %v175, %v171
    %v216 = vpack.c.b16 %v176, %v172
    %v217 = vpack.c.b16 %v181, %v177
    %v218 = vpack.c.b16 %v182, %v178
    %v219 = vpack.c.b16 %v183, %v179
    %v220 = vpack.c.b16 %v184, %v180
    %v221 = vpack.c.b16 %v189, %v185
    %v222 = vpack.c.b16 %v190, %v186
    %v223 = vpack.c.b16 %v191, %v187
    %v224 = vpack.c.b16 %v192, %v188
    %257 = vmatprep.subr.bf16.mxu0 %v222
    %258 = vmatpush1.bf16.msra.mxu0 %v221
    %259 = vmatprep.subr.bf16.mxu0 %v218
    %260 = vmatpush1.bf16.msra.mxu0 %v217
    %261 = vmatprep.subr.bf16.mxu0 %v214
    %262 = vmatpush1.bf16.msra.mxu0 %v213
    %263 = vmatprep.subr.bf16.mxu0 %v210
    %264 = vmatpush1.bf16.msra.mxu0 %v209
    %265 = vmatprep.subr.bf16.mxu0 %v206
    %266 = vmatpush1.bf16.msra.mxu0 %v205
    %267 = vmatprep.subr.bf16.mxu0 %v202
    %268 = vmatpush1.bf16.msra.mxu0 %v201
    %269 = vmatprep.subr.bf16.mxu0 %v198
    %270 = vmatpush1.bf16.msra.mxu0 %v197
    %271 = vmatprep.subr.bf16.mxu0 %v194
    %272 = vmatpush1.bf16.msra.mxu0 %v193
    %273 = vmatprep.subr.bf16.mxu0 0
    %274 = vmatpush2.bf16.msra.mxu0 0
    %275 = vmatprep.subr.bf16.mxu0 0
    %276 = vmatpush2.bf16.msra.mxu0 0
    %277 = vmatprep.subr.bf16.mxu0 0
    %278 = vmatpush2.bf16.msra.mxu0 0
    %279 = vmatprep.subr.bf16.mxu0 0
    %280 = vmatpush2.bf16.msra.mxu0 0
    %281 = vmatprep.subr.bf16.mxu0 0
    %282 = vmatpush2.bf16.msra.mxu0 0
    %283 = vmatprep.subr.bf16.mxu0 0
    %284 = vmatpush2.bf16.msra.mxu0 0
    %285 = vmatprep.subr.bf16.mxu0 0
    %286 = vmatpush2.bf16.msra.mxu0 0
    %287 = vmatprep.subr.bf16.mxu0 0
    %288 = vmatpush2.bf16.msra.mxu0 0
    %289 = vmatprep.mubr.bf16.mxu0 0
    %290 = vmatmul.mubr.bf16.gmra.mxu0 %v93
    %v291 = vpop.f32.mrf.mxu0
    %v292 = vadd.f32 0.0, %v291
    %v293 = vpop.f32.mrf.mxu0
    %v294 = vadd.f32 0.0, %v293
    %v295 = vpop.f32.mrf.mxu0
    %v296 = vadd.f32 0.0, %v295
    %v297 = vpop.f32.mrf.mxu0
    %v298 = vadd.f32 0.0, %v297
    %299 = vmatprep.mubr.bf16.mxu0 0
    %300 = vmatmul.mubr.bf16.gmra.mxu0 %v94
    %v301 = vpop.f32.mrf.mxu0
    %v302 = vadd.f32 0.0, %v301
    %v303 = vpop.f32.mrf.mxu0
    %v304 = vadd.f32 0.0, %v303
    %v305 = vpop.f32.mrf.mxu0
    %v306 = vadd.f32 0.0, %v305
    %v307 = vpop.f32.mrf.mxu0
    %v308 = vadd.f32 0.0, %v307
    %309 = vdwg.mxu0
    %310 = vmatprep.subr.bf16.mxu0 %v224
    %311 = vmatpush1.bf16.msra.mxu0 %v223
    %312 = vmatprep.subr.bf16.mxu0 %v220
    %313 = vmatpush1.bf16.msra.mxu0 %v219
    %314 = vmatprep.subr.bf16.mxu0 %v216
    %315 = vmatpush1.bf16.msra.mxu0 %v215
    %316 = vmatprep.subr.bf16.mxu0 %v212
    %317 = vmatpush1.bf16.msra.mxu0 %v211
    %318 = vmatprep.subr.bf16.mxu0 %v208
    %319 = vmatpush1.bf16.msra.mxu0 %v207
    %320 = vmatprep.subr.bf16.mxu0 %v204
    %321 = vmatpush1.bf16.msra.mxu0 %v203
    %322 = vmatprep.subr.bf16.mxu0 %v200
    %323 = vmatpush1.bf16.msra.mxu0 %v199
    %324 = vmatprep.subr.bf16.mxu0 %v196
    %325 = vmatpush1.bf16.msra.mxu0 %v195
    %326 = vmatprep.subr.bf16.mxu0 0
    %327 = vmatpush2.bf16.msra.mxu0 0
    %328 = vmatprep.subr.bf16.mxu0 0
    %329 = vmatpush2.bf16.msra.mxu0 0
    %330 = vmatprep.subr.bf16.mxu0 0
    %331 = vmatpush2.bf16.msra.mxu0 0
    %332 = vmatprep.subr.bf16.mxu0 0
    %333 = vmatpush2.bf16.msra.mxu0 0
    %334 = vmatprep.subr.bf16.mxu0 0
    %335 = vmatpush2.bf16.msra.mxu0 0
    %336 = vmatprep.subr.bf16.mxu0 0
    %337 = vmatpush2.bf16.msra.mxu0 0
    %338 = vmatprep.subr.bf16.mxu0 0
    %339 = vmatpush2.bf16.msra.mxu0 0
    %340 = vmatprep.subr.bf16.mxu0 0
    %341 = vmatpush2.bf16.msra.mxu0 0
    %342 = vmatprep.mubr.bf16.mxu0 0
    %343 = vmatmul.mubr.bf16.gmra.mxu0 %v93
    %v344 = vpop.f32.mrf.mxu0
    %v345 = vadd.f32 0.0, %v344
    %v346 = vpop.f32.mrf.mxu0
    %v347 = vadd.f32 0.0, %v346
    %v348 = vpop.f32.mrf.mxu0
    %v349 = vadd.f32 0.0, %v348
    %v350 = vpop.f32.mrf.mxu0
    %v351 = vadd.f32 0.0, %v350
    %352 = vmatprep.mubr.bf16.mxu0 0
    %353 = vmatmul.mubr.bf16.gmra.mxu0 %v94
    %v354 = vpop.f32.mrf.mxu0
    %v355 = vadd.f32 0.0, %v354
    %v356 = vpop.f32.mrf.mxu0
    %v357 = vadd.f32 0.0, %v356
    %v358 = vpop.f32.mrf.mxu0
    %v359 = vadd.f32 0.0, %v358
    %v360 = vpop.f32.mrf.mxu0
    %v361 = vadd.f32 0.0, %v360
    %362 = vdwg.mxu0
    %v363 = vadd.f32 %v33, %v292
    %v364 = vadd.f32 %v34, %v294
    %v365 = vadd.f32 %v35, %v345
    %v366 = vadd.f32 %v36, %v347
    %v367 = vadd.f32 %v37, %v296
    %v368 = vadd.f32 %v38, %v298
    %v369 = vadd.f32 %v39, %v349
    %v370 = vadd.f32 %v40, %v351
    %v371 = vadd.f32 %v41, %v302
    %v372 = vadd.f32 %v42, %v304
    %v373 = vadd.f32 %v43, %v355
    %v374 = vadd.f32 %v44, %v357
    %v375 = vadd.f32 %v45, %v306
    %v376 = vadd.f32 %v46, %v308
    %v377 = vadd.f32 %v47, %v359
    %v378 = vadd.f32 %v48, %v361
    %379 = vst [vmem:[#allocation2] sm:$0xff] %v363
    %380 = vst [vmem:[#allocation2 + $0x8] sm:$0xff] %v364
    %381 = vst [vmem:[#allocation2 + $0x10] sm:$0xff] %v365
    %382 = vst [vmem:[#allocation2 + $0x18] sm:$0xff] %v366
    %383 = vst [vmem:[#allocation2 + $0x20] sm:$0xff] %v367
    %384 = vst [vmem:[#allocation2 + $0x28] sm:$0xff] %v368
    %385 = vst [vmem:[#allocation2 + $0x30] sm:$0xff] %v369
    %386 = vst [vmem:[#allocation2 + $0x38] sm:$0xff] %v370
    %387 = vst [vmem:[#allocation2 + $0x40] sm:$0xff] %v371
    %388 = vst [vmem:[#allocation2 + $0x48] sm:$0xff] %v372
    %389 = vst [vmem:[#allocation2 + $0x50] sm:$0xff] %v373
    %390 = vst [vmem:[#allocation2 + $0x58] sm:$0xff] %v374
    %391 = vst [vmem:[#allocation2 + $0x60] sm:$0xff] %v375
    %392 = vst [vmem:[#allocation2 + $0x68] sm:$0xff] %v376
    %393 = vst [vmem:[#allocation2 + $0x70] sm:$0xff] %v377
    %394 = vst [vmem:[#allocation2 + $0x78] sm:$0xff] %v378
    // Predicated region
    $region14: #{forward.25} parent=1 // pred_check
      %p395 = pneg %p13
    $region15: #{forward.25} parent=1 // pred_check_branch
      %397 = sbr.rel (%p395) target = $region17
    $region16: #{forward.25} parent=1 // pred_region
      %v398 = vld [vmem:[#allocation2] sm:$0xff]
      %v399 = vld [vmem:[#allocation2 + $0x8] sm:$0xff]
      %v400 = vld [vmem:[#allocation2 + $0x10] sm:$0xff]
      %v401 = vld [vmem:[#allocation2 + $0x18] sm:$0xff]
      %v402 = vld [vmem:[#allocation2 + $0x20] sm:$0xff]
      %v403 = vld [vmem:[#allocation2 + $0x28] sm:$0xff]
      %v404 = vld [vmem:[#allocation2 + $0x30] sm:$0xff]
      %v405 = vld [vmem:[#allocation2 + $0x38] sm:$0xff]
      %v406 = vld [vmem:[#allocation2 + $0x40] sm:$0xff]
      %v407 = vld [vmem:[#allocation2 + $0x48] sm:$0xff]
      %v408 = vld [vmem:[#allocation2 + $0x50] sm:$0xff]
      %v409 = vld [vmem:[#allocation2 + $0x58] sm:$0xff]
      %v410 = vld [vmem:[#allocation2 + $0x60] sm:$0xff]
      %v411 = vld [vmem:[#allocation2 + $0x68] sm:$0xff]
      %v412 = vld [vmem:[#allocation2 + $0x70] sm:$0xff]
      %v413 = vld [vmem:[#allocation2 + $0x78] sm:$0xff]
      %414 = vst [vmem:[#allocation3] sm:$0xff] %v398
      %415 = vst [vmem:[#allocation3 + $0x8] sm:$0xff] %v399
      %416 = vst [vmem:[#allocation3 + $0x10] sm:$0xff] %v400
      %417 = vst [vmem:[#allocation3 + $0x18] sm:$0xff] %v401
      %418 = vst [vmem:[#allocation3 + $0x20] sm:$0xff] %v402
      %419 = vst [vmem:[#allocation3 + $0x28] sm:$0xff] %v403
      %420 = vst [vmem:[#allocation3 + $0x30] sm:$0xff] %v404
      %421 = vst [vmem:[#allocation3 + $0x38] sm:$0xff] %v405
      %422 = vst [vmem:[#allocation3 + $0x40] sm:$0xff] %v406
      %423 = vst [vmem:[#allocation3 + $0x48] sm:$0xff] %v407
      %424 = vst [vmem:[#allocation3 + $0x50] sm:$0xff] %v408
      %425 = vst [vmem:[#allocation3 + $0x58] sm:$0xff] %v409
      %426 = vst [vmem:[#allocation3 + $0x60] sm:$0xff] %v410
      %427 = vst [vmem:[#allocation3 + $0x68] sm:$0xff] %v411
      %428 = vst [vmem:[#allocation3 + $0x70] sm:$0xff] %v412
      %429 = vst [vmem:[#allocation3 + $0x78] sm:$0xff] %v413
    $region17: #{forward.25} parent=1 // pred_fallthru
      _
    // Predicated region
    $region18: #{forward.25} parent=1 // pred_check
      _
    $region19: #{forward.25} parent=1 // pred_check_branch
      %431 = sbr.rel (0) target = $region21
    $region20: #{forward.25} parent=1 // pred_region
      %s433 = ssub.s32 2048, 2048
      %434 = vsyncadd [#allocation4], %s433
      %s435 = sshll.u32 [#allocation3], 4
      %s436 = int_to_ptr.vmem [resolvable:$true] %s435
      %441 = dma.vmem_to_hbm [thread:$0]  %s436, 2048, %s2, [#allocation4], 512, 512, 32
    $region21: #{forward.25} parent=1 // pred_fallthru
      _
    // Predicated region
    $region22: #{forward.25} parent=1 // pred_check
      _
    $region23: #{forward.25} parent=1 // pred_check_branch
      %443 = sbr.rel (0) target = $region25
    $region24: #{forward.25} parent=1 // pred_region
      %444 = dma.done [#allocation4], 2048
    $region25: #{forward.25} parent=1 // pred_fallthru
      _
    %445 = vsyncpa [#allocation4], 1

</llo_original>
